<compile_context>
chip_gen: v7x
topology: tpu7x:2x2x1
jax: 0.10.0
libtpu: 0.0.40
codegen_flags: <defaults>
</compile_context>

<pallas_src>
import functools
from math import sqrt

import jax
import jax.numpy as jnp
import numpy as np
from jax.experimental import pallas as pl
from jax.experimental.pallas import tpu as pltpu

LN_EPS = 1e-5


# ----------------------------- small helpers --------------------------------
def _mosaic_params(**kw):
    cls = getattr(pltpu, "CompilerParams", None)
    if cls is None:                       # older JAX spelling
        cls = getattr(pltpu, "TPUCompilerParams")
    return cls(**kw)


def _default_vmem_limit():
    """~75% of physical VMEM (v7x: ~48 MiB; v5e/v6e capped at 96 MiB)."""
    try:
        cap = int(pltpu.get_tpu_info().vmem_capacity_bytes)
    except Exception:
        cap = 64 * 1024 * 1024
    return min(int(cap * 3 // 4), 96 * 1024 * 1024)


VMEM_LIMIT = _default_vmem_limit()


def _const_spec(shape, use_buffered):
    """BlockSpec for a grid-invariant (weight) operand.

    With use_buffered, request single-buffering (the block index never changes,
    so double-buffering only wastes VMEM — matters on v7x's 64 MiB).
    """
    idx = lambda *_: (0,) * len(shape)
    if use_buffered:
        return pl.BlockSpec(shape, idx, pipeline_mode=pl.Buffered(buffer_count=1))
    return pl.BlockSpec(shape, idx)


def _approx_recip(x):
    if hasattr(pl, "reciprocal"):
        return pl.reciprocal(x, approx=True)   # EUP vrcp, off the VALU slot
    return 1.0 / x


def _layernorm(x, g, b):
    mu = jnp.mean(x, axis=-1, keepdims=True)
    xc = x - mu
    var = jnp.mean(xc * xc, axis=-1, keepdims=True)
    return xc * jax.lax.rsqrt(var + LN_EPS) * g + b


def _gelu_exact(x):
    # matches torch.nn.GELU() (erf formulation)
    return 0.5 * x * (1.0 + jax.lax.erf(x * (1.0 / np.sqrt(2.0))))


# ------------------------------ Pallas kernels ------------------------------
def patch_embed_kernel(n_patches, n_pad,
                       p_ref, w_ref, b_ref, g_ref, beta_ref,
                       clspos_ref, posp_ref, o_ref):
    """(patches @ W + b) -> LayerNorm (+pos), fused with the cls row.

    Output regions are written directly (no concat -> no extra VMEM copy or
    sublane retile before the store).  Rows [n_patches+1, n_pad) are padding.
    """
    p = p_ref[0].astype(jnp.bfloat16)                               # (Np, CPP)
    y = jnp.dot(p, w_ref[...], preferred_element_type=jnp.float32) + b_ref[...]
    y = _layernorm(y, g_ref[...], beta_ref[...]) + posp_ref[...]    # (Np, D)
    o_ref[0:1, :] = clspos_ref[...]                                 # cls + pos0
    o_ref[1:n_patches + 1, :] = y
    if n_pad > n_patches + 1:                                       # static
        o_ref[n_patches + 1:, :] = jnp.zeros(
            (n_pad - n_patches - 1, o_ref.shape[1]), jnp.float32)


def encoder_layer_kernel(heads, head_dim, n_imgs, n_pad, n_real,
                         x_ref, ln1g, ln1b, wqkv, bv, wo, bo,
                         ln2g, ln2b, w1, b1, w2, b2, o_ref):
    """One pre-LN transformer block on a (n_imgs * n_pad, D) row slab.

    QKV / output-projection / MLP matmuls run on the flattened rows (fills the
    MXU rows); attention runs per image.  q-scale is folded into wqkv.
    """
    Dh = head_dim
    H = heads
    x = x_ref[...]                                                   # (T, D) f32
    T, D = x.shape

    # ---- MSA: LN -> head-batched QKV -> attention -> head-batched out-proj --
    xn = _layernorm(x, ln1g[...], ln1b[...]).astype(jnp.bfloat16)
    xh = jnp.broadcast_to(xn[None], (H, T, D))
    qkv = jnp.einsum("hnk,hkd->hnd", xh, wqkv[...],
                     preferred_element_type=jnp.float32)             # (H, T, 3Dh)
    q = qkv[:, :, :Dh].astype(jnp.bfloat16)                          # scale folded in
    k = qkv[:, :, Dh:2 * Dh].astype(jnp.bfloat16)
    v = (qkv[:, :, 2 * Dh:] + bv[...]).astype(jnp.bfloat16)          # only v has bias

    if n_pad > n_real:                                               # static
        kmask = jnp.where(
            jax.lax.broadcasted_iota(jnp.int32, (1, 1, n_pad), 2) < n_real,
            jnp.float32(0.0), jnp.float32(-1e30))
    else:
        kmask = None

    ctx_parts = []
    for img in range(n_imgs):                                        # static, small
        sl = slice(img * n_pad, (img + 1) * n_pad)
        s = jnp.einsum("hnd,hmd->hnm", q[:, sl, :], k[:, sl, :],
                       preferred_element_type=jnp.float32)           # (H, Np, Np)
        if kmask is not None:
            s = s + kmask                                            # mask pad keys
        s = s - jnp.max(s, axis=-1, keepdims=True)
        e = jnp.exp(s)
        a = (e * _approx_recip(jnp.sum(e, axis=-1, keepdims=True))
             ).astype(jnp.bfloat16)
        ctx_parts.append(jnp.einsum("hnm,hmd->hnd", a, v[:, sl, :],
                                    preferred_element_type=jnp.float32))
    ctx = ctx_parts[0] if n_imgs == 1 else jnp.concatenate(ctx_parts, axis=1)

    proj = jnp.einsum("hnd,hdo->hno", ctx.astype(jnp.bfloat16), wo[...],
                      preferred_element_type=jnp.float32)            # (H, T, D)
    x = x + jnp.sum(proj, axis=0) + bo[...]                          # residual

    # ---- MLP ----
    # TODO(synk): at ViT-B scale on v7x, K-tile these two matmuls
    # (pltpu.emit_pipeline over the hidden dim) so only a weight slab is
    # resident at a time; unnecessary at this configuration.
    xn2 = _layernorm(x, ln2g[...], ln2b[...]).astype(jnp.bfloat16)
    h1 = _gelu_exact(jnp.dot(xn2, w1[...],
                             preferred_element_type=jnp.float32) + b1[...])
    x = x + jnp.dot(h1.astype(jnp.bfloat16), w2[...],
                    preferred_element_type=jnp.float32) + b2[...]    # residual

    o_ref[...] = x


def head_kernel(x_ref, g_ref, b_ref, w_ref, bias_ref, o_ref):
    xn = _layernorm(x_ref[...], g_ref[...], b_ref[...])
    o_ref[...] = jnp.dot(xn.astype(jnp.bfloat16), w_ref[...],
                         preferred_element_type=jnp.float32) + bias_ref[...]


# ------------------------------ wrappers ------------------------------------
def patch_embed(patches, fp, n_pad, use_buffered):
    B, Np, Cpp = patches.shape
    D = fp["patch_w"].shape[1]
    kern = functools.partial(patch_embed_kernel, Np, n_pad)
    w_args = (fp["patch_w"], fp["patch_b"], fp["patch_ln_g"], fp["patch_ln_b"],
              fp["cls_pos"], fp["pos_patches"])
    return pl.pallas_call(
        kern,
        out_shape=jax.ShapeDtypeStruct((B * n_pad, D), jnp.float32),
        grid=(B,),
        in_specs=[pl.BlockSpec((1, Np, Cpp), lambda i: (i, 0, 0))]
                 + [_const_spec(a.shape, use_buffered) for a in w_args],
        out_specs=pl.BlockSpec((n_pad, D), lambda i: (i, 0)),
        compiler_params=_mosaic_params(dimension_semantics=("parallel",),
                                       vmem_limit_bytes=VMEM_LIMIT),
    )(patches, *w_args)


def encoder_layer(x2d, lp, cfg, n_pad, n_real, use_buffered):
    T_total, D = x2d.shape
    B = T_total // n_pad
    # Multi-image blocking: Bt*Npad rows per grid step feed the big matmuls
    # (better MXU row occupancy on v6e/v7x 256-row arrays).
    Bt = 2 if B % 2 == 0 else 1
    Tb = Bt * n_pad
    kern = functools.partial(encoder_layer_kernel, cfg["heads"], cfg["head_dim"],
                             Bt, n_pad, n_real)
    w_args = (lp["ln1_g"], lp["ln1_b"], lp["wqkv"], lp["bv"], lp["wo"], lp["bo"],
              lp["ln2_g"], lp["ln2_b"], lp["w1"], lp["b1"], lp["w2"], lp["b2"])
    in_specs = [pl.BlockSpec((Tb, D), lambda i: (i, 0))]
    in_specs += [_const_spec(a.shape, use_buffered) for a in w_args]
    return pl.pallas_call(
        kern,
        out_shape=jax.ShapeDtypeStruct((T_total, D), jnp.float32),
        grid=(B // Bt,),
        in_specs=in_specs,
        out_specs=pl.BlockSpec((Tb, D), lambda i: (i, 0)),
        compiler_params=_mosaic_params(dimension_semantics=("parallel",),
                                       vmem_limit_bytes=VMEM_LIMIT),
    )(x2d, *w_args)


def classifier_head(cls_x, fp, use_buffered):
    B, D = cls_x.shape
    Cp = fp["head_w"].shape[1]                     # already lane-padded at prep
    TB = next(t for t in (8, 4, 2, 1) if B % t == 0)
    w_args = (fp["head_ln_g"], fp["head_ln_b"], fp["head_w"], fp["head_b"])
    return pl.pallas_call(
        head_kernel,
        out_shape=jax.ShapeDtypeStruct((B, Cp), jnp.float32),
        grid=(B // TB,),
        in_specs=[pl.BlockSpec((TB, D), lambda i: (i, 0))]
                 + [_const_spec(a.shape, use_buffered) for a in w_args],
        out_specs=pl.BlockSpec((TB, Cp), lambda i: (i, 0)),
        compiler_params=_mosaic_params(dimension_semantics=("parallel",),
                                       vmem_limit_bytes=VMEM_LIMIT),
    )(cls_x, *w_args)


# ------------------------- one-time parameter prep ---------------------------
def prepare_params(params, cfg):
    """Fuse / reshape / bf16-cast all weights once (not per forward call)."""
    H, Dh, D = cfg["heads"], cfg["head_dim"], cfg["dim"]
    inv_scale = 1.0 / sqrt(Dh)
    fp = dict(
        patch_w=params["patch_w"].astype(jnp.bfloat16),
        patch_b=params["patch_b"],
        patch_ln_g=params["patch_ln_g"], patch_ln_b=params["patch_ln_b"],
        cls_pos=params["cls_token"].reshape(1, D) + params["pos_embedding"][0, :1, :],
        pos_patches=params["pos_embedding"][0, 1:, :],
        head_ln_g=params["head_ln_g"], head_ln_b=params["head_ln_b"],
    )
    C = params["head_w"].shape[1]
    Cp = max(128, ((C + 127) // 128) * 128)        # lane-dense classifier stores
    fp["head_w"] = (jnp.zeros((D, Cp), jnp.float32)
                    .at[:, :C].set(params["head_w"]).astype(jnp.bfloat16))
    fp["head_b"] = jnp.zeros((1, Cp), jnp.float32).at[:, :C].set(params["head_b"])

    layers = []
    for lp in params["layers"]:
        wq_scaled = lp["wq"] * inv_scale           # fold attention scale into q
        wqkv = jnp.concatenate(
            [wq_scaled.reshape(D, H, Dh),
             lp["wk"].reshape(D, H, Dh),
             lp["wv"].reshape(D, H, Dh)], axis=-1)                  # (D, H, 3Dh)
        layers.append(dict(
            ln1_g=lp["ln1_g"], ln1_b=lp["ln1_b"],
            wqkv=jnp.transpose(wqkv, (1, 0, 2)).astype(jnp.bfloat16),  # (H,D,3Dh)
            bv=lp["bv"].reshape(H, 1, Dh),
            wo=lp["wo"].reshape(H, Dh, D).astype(jnp.bfloat16),
            bo=lp["bo"],
            ln2_g=lp["ln2_g"], ln2_b=lp["ln2_b"],
            w1=lp["w1"].astype(jnp.bfloat16), b1=lp["b1"],
            w2=lp["w2"].astype(jnp.bfloat16), b2=lp["b2"],
        ))
    fp["layers"] = layers
    return fp


# ------------------------------ model glue ----------------------------------
def extract_patches(img, P):
    """im2col for a stride=P, kernel=P conv.  img: (B, C, H, W) NCHW."""
    B, C, H, W = img.shape
    Hp, Wp = H // P, W // P
    x = img.reshape(B, C, Hp, P, Wp, P)
    x = x.transpose(0, 2, 4, 1, 3, 5)            # (B, Hp, Wp, C, P, P)
    return x.reshape(B, Hp * Wp, C * P * P)      # flat kernel order = (C, P, P)


def vit_forward(img, fp, cfg, use_buffered=True):
    P, D = cfg["patch_size"], cfg["dim"]
    patches = extract_patches(img, P)            # (B, Np, C*P*P)
    B, Np, _ = patches.shape
    n_real = Np + 1
    n_pad = ((n_real + 7) // 8) * 8              # sublane-align the token count
    x2d = patch_embed(patches, fp, n_pad, use_buffered)      # (B*n_pad, D)
    for lp in fp["layers"]:
        x2d = encoder_layer(x2d, lp, cfg, n_pad, n_real, use_buffered)
    cls = x2d.reshape(B, n_pad, D)[:, 0]                     # (B, D)
    logits = classifier_head(cls, fp, use_buffered)
    return logits[:, :cfg["num_classes"]]


# --------------------------- pure-JAX reference ------------------------------
def _ln_ref(x, g, b):
    mu = x.mean(-1, keepdims=True)
    var = ((x - mu) ** 2).mean(-1, keepdims=True)
    return (x - mu) / jnp.sqrt(var + LN_EPS) * g + b


def vit_reference(img, params, cfg):
    P, H, Dh = cfg["patch_size"], cfg["heads"], cfg["head_dim"]
    patches = extract_patches(img, P)
    tok = _ln_ref(patches @ params["patch_w"] + params["patch_b"],
                  params["patch_ln_g"], params["patch_ln_b"])
    B, _, D = tok.shape
    x = jnp.concatenate(
        [jnp.broadcast_to(params["cls_token"], (B, 1, D)), tok], axis=1)
    x = x + params["pos_embedding"]
    for lp in params["layers"]:
        xn = _ln_ref(x, lp["ln1_g"], lp["ln1_b"])
        q, k = xn @ lp["wq"], xn @ lp["wk"]
        v = xn @ lp["wv"] + lp["bv"]
        N = q.shape[1]
        qh = q.reshape(B, N, H, Dh).transpose(0, 2, 1, 3)
        kh = k.reshape(B, N, H, Dh).transpose(0, 2, 1, 3)
        vh = v.reshape(B, N, H, Dh).transpose(0, 2, 1, 3)
        s = jnp.einsum("bhnd,bhmd->bhnm", qh, kh) / sqrt(Dh)
        a = jax.nn.softmax(s, axis=-1)
        o = jnp.einsum("bhnm,bhmd->bhnd", a, vh)
        o = o.transpose(0, 2, 1, 3).reshape(B, N, H * Dh)
        x = x + o @ lp["wo"] + lp["bo"]
        xn2 = _ln_ref(x, lp["ln2_g"], lp["ln2_b"])
        h1 = _gelu_exact(xn2 @ lp["w1"] + lp["b1"])
        x = x + h1 @ lp["w2"] + lp["b2"]
    c = _ln_ref(x[:, 0], params["head_ln_g"], params["head_ln_b"])
    return c @ params["head_w"] + params["head_b"]


# ------------------------------ param init ----------------------------------
def init_params(key, cfg):
    C, P, D = cfg["channels"], cfg["patch_size"], cfg["dim"]
    HD = cfg["heads"] * cfg["head_dim"]
    M, NC = cfg["mlp_dim"], cfg["num_classes"]
    Hgt, Wd = cfg["image_size"]
    Np = (Hgt // P) * (Wd // P)
    ks = iter(jax.random.split(key, 64))

    def nrm(shape, s=0.02):
        return (s * jax.random.normal(next(ks), shape)).astype(jnp.float32)

    params = dict(
        # Conv2d(patchify) weight, pre-flattened to (C*P*P, D); bias (1, D)
        patch_w=nrm((C * P * P, D)), patch_b=nrm((1, D)),
        patch_ln_g=jnp.ones((1, D), jnp.float32) + nrm((1, D), 0.1),
        patch_ln_b=nrm((1, D), 0.1),
        cls_token=jax.random.normal(next(ks), (1, 1, D), jnp.float32),
        pos_embedding=jax.random.normal(next(ks), (1, Np + 1, D), jnp.float32),
        head_ln_g=jnp.ones((1, D), jnp.float32) + nrm((1, D), 0.1),
        head_ln_b=nrm((1, D), 0.1),
        head_w=nrm((D, NC)), head_b=nrm((1, NC)),
        layers=[],
    )
    for _ in range(cfg["depth"]):
        params["layers"].append(dict(
            ln1_g=jnp.ones((1, D), jnp.float32) + nrm((1, D), 0.1),
            ln1_b=nrm((1, D), 0.1),
            wq=nrm((D, HD)), wk=nrm((D, HD)), wv=nrm((D, HD)), bv=nrm((1, HD)),
            wo=nrm((HD, D)), bo=nrm((1, D)),
            ln2_g=jnp.ones((1, D), jnp.float32) + nrm((1, D), 0.1),
            ln2_b=nrm((1, D), 0.1),
            w1=nrm((D, M)), b1=nrm((1, M)),
            w2=nrm((M, D)), b2=nrm((1, D)),
        ))
    return params


# --------------------------------- main --------------------------------------
if __name__ == "__main__":
    cfg = dict(image_size=(16, 16), patch_size=8, num_classes=10, dim=32,
               depth=2, heads=2, head_dim=16, mlp_dim=64, channels=4)
    key = jax.random.PRNGKey(0)
    kp, kx = jax.random.split(key)
    params = init_params(kp, cfg)
    fparams = prepare_params(params, cfg)        # one-time weight fusion / cast
    img = jax.random.normal(kx, (2, cfg["channels"], *cfg["image_size"]),
                            jnp.float32)

    def _run(use_buffered):
        fwd = jax.jit(functools.partial(vit_forward, cfg=cfg,
                                        use_buffered=use_buffered))
        return jax.block_until_ready(fwd(img, fparams))

    try:
        out = _run(True)                         # Buffered(1) weight residency
    except Exception:
        # Graceful fallback for JAX versions where pipeline_mode=pl.Buffered(1)
        # is not supported in top-level pallas_call specs.
        out = _run(False)

    assert out.shape == (2, cfg["num_classes"])

    ref = vit_reference(img, params, cfg)        # f32 reference; kernels use bf16 MXU
    np.testing.assert_allclose(np.asarray(out), np.asarray(ref),
                               rtol=5e-2, atol=2e-2)
    print("KERNEL_OK")
</pallas_src>

<mosaic_0001>
module attributes {stable_mosaic.version = 11 : i64} {
  func.func @patch_embed_kernel(%arg0: i32, %arg1: memref<1x4x256xf32, #tpu.memory_space<vmem>>, %arg2: memref<256x32xbf16, #tpu.memory_space<vmem>>, %arg3: memref<1x32xf32, #tpu.memory_space<vmem>>, %arg4: memref<1x32xf32, #tpu.memory_space<vmem>>, %arg5: memref<1x32xf32, #tpu.memory_space<vmem>>, %arg6: memref<1x32xf32, #tpu.memory_space<vmem>>, %arg7: memref<4x32xf32, #tpu.memory_space<vmem>>, %arg8: memref<8x32xf32, #tpu.memory_space<vmem>>) attributes {dimension_semantics = [#tpu.dimension_semantics<parallel>], iteration_bounds = array<i64: 2>, scalar_prefetch = 0 : i64, scratch_operands = 0 : i64, tpu.core_type = #tpu.core_type<tc>, window_params = [{transform_indices = @transform_0, window_bounds = array<i64: 1, 4, 256>}, {pipeline_mode = #tpu.pipeline_mode<synchronous>, transform_indices = @transform_1, window_bounds = array<i64: 256, 32>}, {pipeline_mode = #tpu.pipeline_mode<synchronous>, transform_indices = @transform_2, window_bounds = array<i64: 1, 32>}, {pipeline_mode = #tpu.pipeline_mode<synchronous>, transform_indices = @transform_3, window_bounds = array<i64: 1, 32>}, {pipeline_mode = #tpu.pipeline_mode<synchronous>, transform_indices = @transform_4, window_bounds = array<i64: 1, 32>}, {pipeline_mode = #tpu.pipeline_mode<synchronous>, transform_indices = @transform_5, window_bounds = array<i64: 1, 32>}, {pipeline_mode = #tpu.pipeline_mode<synchronous>, transform_indices = @transform_6, window_bounds = array<i64: 4, 32>}, {transform_indices = @transform_7, window_bounds = array<i64: 8, 32>}]} {
    %c0 = arith.constant 0 : index
    %c0_0 = arith.constant 0 : index
    %c0_1 = arith.constant 0 : index
    %0 = vector.load %arg1[%c0, %c0_0, %c0_1] : memref<1x4x256xf32, #tpu.memory_space<vmem>>, vector<1x4x256xf32>
    %1 = vector.shape_cast %0 : vector<1x4x256xf32> to vector<4x256xf32>
    %2 = arith.truncf %1 : vector<4x256xf32> to vector<4x256xbf16>
    %c0_2 = arith.constant 0 : index
    %c0_3 = arith.constant 0 : index
    %3 = vector.load %arg2[%c0_2, %c0_3] : memref<256x32xbf16, #tpu.memory_space<vmem>>, vector<256x32xbf16>
    %cst = arith.constant dense<0.000000e+00> : vector<4x32xf32>
    %4 = tpu.matmul %2, %3, %cst {dimension_numbers = #tpu.dot_dimension_numbers<[1], [0], [0], [1], [0, 0, 1, 1], [], []>} : vector<4x256xbf16>, vector<256x32xbf16>, vector<4x32xf32> -> vector<4x32xf32>
    %c0_4 = arith.constant 0 : index
    %c0_5 = arith.constant 0 : index
    %5 = vector.load %arg3[%c0_4, %c0_5] : memref<1x32xf32, #tpu.memory_space<vmem>>, vector<1x32xf32>
    %6 = vector.broadcast %5 : vector<1x32xf32> to vector<4x32xf32>
    %7 = arith.addf %4, %6 : vector<4x32xf32>
    %c0_6 = arith.constant 0 : index
    %c0_7 = arith.constant 0 : index
    %8 = vector.load %arg4[%c0_6, %c0_7] : memref<1x32xf32, #tpu.memory_space<vmem>>, vector<1x32xf32>
    %c0_8 = arith.constant 0 : index
    %c0_9 = arith.constant 0 : index
    %9 = vector.load %arg5[%c0_8, %c0_9] : memref<1x32xf32, #tpu.memory_space<vmem>>, vector<1x32xf32>
    %cst_10 = arith.constant dense<0.000000e+00> : vector<4xf32>
    %10 = vector.multi_reduction <add>, %7, %cst_10 [1] : vector<4x32xf32> to vector<4xf32>
    %11 = vector.shape_cast %10 : vector<4xf32> to vector<4x1xf32>
    %cst_11 = arith.constant 3.200000e+01 : f32
    %12 = vector.broadcast %cst_11 : f32 to vector<4x1xf32>
    %13 = arith.divf %11, %12 : vector<4x1xf32>
    %14 = vector.broadcast %13 : vector<4x1xf32> to vector<4x32xf32>
    %15 = arith.subf %7, %14 : vector<4x32xf32>
    %16 = arith.mulf %15, %15 : vector<4x32xf32>
    %cst_12 = arith.constant dense<0.000000e+00> : vector<4xf32>
    %17 = vector.multi_reduction <add>, %16, %cst_12 [1] : vector<4x32xf32> to vector<4xf32>
    %18 = vector.shape_cast %17 : vector<4xf32> to vector<4x1xf32>
    %cst_13 = arith.constant 3.200000e+01 : f32
    %19 = vector.broadcast %cst_13 : f32 to vector<4x1xf32>
    %20 = arith.divf %18, %19 : vector<4x1xf32>
    %cst_14 = arith.constant 9.99999974E-6 : f32
    %21 = vector.broadcast %cst_14 : f32 to vector<4x1xf32>
    %22 = arith.addf %20, %21 : vector<4x1xf32>
    %23 = math.rsqrt %22 : vector<4x1xf32>
    %24 = vector.broadcast %23 : vector<4x1xf32> to vector<4x32xf32>
    %25 = arith.mulf %15, %24 : vector<4x32xf32>
    %26 = vector.broadcast %8 : vector<1x32xf32> to vector<4x32xf32>
    %27 = arith.mulf %25, %26 : vector<4x32xf32>
    %28 = vector.broadcast %9 : vector<1x32xf32> to vector<4x32xf32>
    %29 = arith.addf %27, %28 : vector<4x32xf32>
    %c0_15 = arith.constant 0 : index
    %c0_16 = arith.constant 0 : index
    %30 = vector.load %arg7[%c0_15, %c0_16] : memref<4x32xf32, #tpu.memory_space<vmem>>, vector<4x32xf32>
    %31 = arith.addf %29, %30 : vector<4x32xf32>
    %c0_17 = arith.constant 0 : index
    %c0_18 = arith.constant 0 : index
    %32 = vector.load %arg6[%c0_17, %c0_18] : memref<1x32xf32, #tpu.memory_space<vmem>>, vector<1x32xf32>
    %c0_19 = arith.constant 0 : index
    %c0_20 = arith.constant 0 : index
    %33 = vector.load %arg8[%c0_19, %c0_20] : memref<8x32xf32, #tpu.memory_space<vmem>>, vector<1x32xf32>
    tpu.vector_store %arg8[%c0_19, %c0_20], %32 {strides = array<i32>} : memref<8x32xf32, #tpu.memory_space<vmem>>, vector<1x32xf32>,
    %c1 = arith.constant 1 : index
    %c0_21 = arith.constant 0 : index
    %34 = vector.load %arg8[%c1, %c0_21] : memref<8x32xf32, #tpu.memory_space<vmem>>, vector<4x32xf32>
    tpu.vector_store %arg8[%c1, %c0_21], %31 {strides = array<i32>} : memref<8x32xf32, #tpu.memory_space<vmem>>, vector<4x32xf32>,
    %cst_22 = arith.constant 0.000000e+00 : f32
    %35 = vector.broadcast %cst_22 : f32 to vector<3x32xf32>
    %c5 = arith.constant 5 : index
    %c0_23 = arith.constant 0 : index
    %36 = vector.load %arg8[%c5, %c0_23] : memref<8x32xf32, #tpu.memory_space<vmem>>, vector<3x32xf32>
    tpu.vector_store %arg8[%c5, %c0_23], %35 {strides = array<i32>} : memref<8x32xf32, #tpu.memory_space<vmem>>, vector<3x32xf32>,
    return
  }
  func.func @transform_0(%arg0: i32) -> (i32, i32, i32) {
    %c0_i32 = arith.constant 0 : i32
    %c0_i32_0 = arith.constant 0 : i32
    %c0_i32_1 = arith.constant 0 : i32
    return %arg0, %c0_i32, %c0_i32_0 : i32, i32, i32
  }
  func.func @transform_1(%arg0: i32) -> (i32, i32) {
    %c0_i32 = arith.constant 0 : i32
    %c0_i32_0 = arith.constant 0 : i32
    %c0_i32_1 = arith.constant 0 : i32
    return %c0_i32, %c0_i32_0 : i32, i32
  }
  func.func @transform_2(%arg0: i32) -> (i32, i32) {
    %c0_i32 = arith.constant 0 : i32
    %c0_i32_0 = arith.constant 0 : i32
    %c0_i32_1 = arith.constant 0 : i32
    return %c0_i32, %c0_i32_0 : i32, i32
  }
  func.func @transform_3(%arg0: i32) -> (i32, i32) {
    %c0_i32 = arith.constant 0 : i32
    %c0_i32_0 = arith.constant 0 : i32
    %c0_i32_1 = arith.constant 0 : i32
    return %c0_i32, %c0_i32_0 : i32, i32
  }
  func.func @transform_4(%arg0: i32) -> (i32, i32) {
    %c0_i32 = arith.constant 0 : i32
    %c0_i32_0 = arith.constant 0 : i32
    %c0_i32_1 = arith.constant 0 : i32
    return %c0_i32, %c0_i32_0 : i32, i32
  }
  func.func @transform_5(%arg0: i32) -> (i32, i32) {
    %c0_i32 = arith.constant 0 : i32
    %c0_i32_0 = arith.constant 0 : i32
    %c0_i32_1 = arith.constant 0 : i32
    return %c0_i32, %c0_i32_0 : i32, i32
  }
  func.func @transform_6(%arg0: i32) -> (i32, i32) {
    %c0_i32 = arith.constant 0 : i32
    %c0_i32_0 = arith.constant 0 : i32
    %c0_i32_1 = arith.constant 0 : i32
    return %c0_i32, %c0_i32_0 : i32, i32
  }
  func.func @transform_7(%arg0: i32) -> (i32, i32) {
    %c0_i32 = arith.constant 0 : i32
    %c0_i32_0 = arith.constant 0 : i32
    return %arg0, %c0_i32 : i32, i32
  }
}

module attributes {stable_mosaic.version = 11 : i64} {
  func.func @head_kernel(%arg0: i32, %arg1: memref<2x32xf32, #tpu.memory_space<vmem>>, %arg2: memref<1x32xf32, #tpu.memory_space<vmem>>, %arg3: memref<1x32xf32, #tpu.memory_space<vmem>>, %arg4: memref<32x128xbf16, #tpu.memory_space<vmem>>, %arg5: memref<1x128xf32, #tpu.memory_space<vmem>>, %arg6: memref<2x128xf32, #tpu.memory_space<vmem>>) attributes {dimension_semantics = [#tpu.dimension_semantics<parallel>], iteration_bounds = array<i64: 1>, scalar_prefetch = 0 : i64, scratch_operands = 0 : i64, tpu.core_type = #tpu.core_type<tc>, window_params = [{transform_indices = @transform_0, window_bounds = array<i64: 2, 32>}, {pipeline_mode = #tpu.pipeline_mode<synchronous>, transform_indices = @transform_1, window_bounds = array<i64: 1, 32>}, {pipeline_mode = #tpu.pipeline_mode<synchronous>, transform_indices = @transform_2, window_bounds = array<i64: 1, 32>}, {pipeline_mode = #tpu.pipeline_mode<synchronous>, transform_indices = @transform_3, window_bounds = array<i64: 32, 128>}, {pipeline_mode = #tpu.pipeline_mode<synchronous>, transform_indices = @transform_4, window_bounds = array<i64: 1, 128>}, {transform_indices = @transform_5, window_bounds = array<i64: 2, 128>}]} {
    %c0 = arith.constant 0 : index
    %c0_0 = arith.constant 0 : index
    %0 = vector.load %arg1[%c0, %c0_0] : memref<2x32xf32, #tpu.memory_space<vmem>>, vector<2x32xf32>
    %c0_1 = arith.constant 0 : index
    %c0_2 = arith.constant 0 : index
    %1 = vector.load %arg2[%c0_1, %c0_2] : memref<1x32xf32, #tpu.memory_space<vmem>>, vector<1x32xf32>
    %c0_3 = arith.constant 0 : index
    %c0_4 = arith.constant 0 : index
    %2 = vector.load %arg3[%c0_3, %c0_4] : memref<1x32xf32, #tpu.memory_space<vmem>>, vector<1x32xf32>
    %cst = arith.constant dense<0.000000e+00> : vector<2xf32>
    %3 = vector.multi_reduction <add>, %0, %cst [1] : vector<2x32xf32> to vector<2xf32>
    %4 = vector.shape_cast %3 : vector<2xf32> to vector<2x1xf32>
    %cst_5 = arith.constant 3.200000e+01 : f32
    %5 = vector.broadcast %cst_5 : f32 to vector<2x1xf32>
    %6 = arith.divf %4, %5 : vector<2x1xf32>
    %7 = vector.broadcast %6 : vector<2x1xf32> to vector<2x32xf32>
    %8 = arith.subf %0, %7 : vector<2x32xf32>
    %9 = arith.mulf %8, %8 : vector<2x32xf32>
    %cst_6 = arith.constant dense<0.000000e+00> : vector<2xf32>
    %10 = vector.multi_reduction <add>, %9, %cst_6 [1] : vector<2x32xf32> to vector<2xf32>
    %11 = vector.shape_cast %10 : vector<2xf32> to vector<2x1xf32>
    %cst_7 = arith.constant 3.200000e+01 : f32
    %12 = vector.broadcast %cst_7 : f32 to vector<2x1xf32>
    %13 = arith.divf %11, %12 : vector<2x1xf32>
    %cst_8 = arith.constant 9.99999974E-6 : f32
    %14 = vector.broadcast %cst_8 : f32 to vector<2x1xf32>
    %15 = arith.addf %13, %14 : vector<2x1xf32>
    %16 = math.rsqrt %15 : vector<2x1xf32>
    %17 = vector.broadcast %16 : vector<2x1xf32> to vector<2x32xf32>
    %18 = arith.mulf %8, %17 : vector<2x32xf32>
    %19 = vector.broadcast %1 : vector<1x32xf32> to vector<2x32xf32>
    %20 = arith.mulf %18, %19 : vector<2x32xf32>
    %21 = vector.broadcast %2 : vector<1x32xf32> to vector<2x32xf32>
    %22 = arith.addf %20, %21 : vector<2x32xf32>
    %23 = arith.truncf %22 : vector<2x32xf32> to vector<2x32xbf16>
    %c0_9 = arith.constant 0 : index
    %c0_10 = arith.constant 0 : index
    %24 = vector.load %arg4[%c0_9, %c0_10] : memref<32x128xbf16, #tpu.memory_space<vmem>>, vector<32x128xbf16>
    %cst_11 = arith.constant dense<0.000000e+00> : vector<2x128xf32>
    %25 = tpu.matmul %23, %24, %cst_11 {dimension_numbers = #tpu.dot_dimension_numbers<[1], [0], [0], [1], [0, 0, 1, 1], [], []>} : vector<2x32xbf16>, vector<32x128xbf16>, vector<2x128xf32> -> vector<2x128xf32>
    %c0_12 = arith.constant 0 : index
    %c0_13 = arith.constant 0 : index
    %26 = vector.load %arg5[%c0_12, %c0_13] : memref<1x128xf32, #tpu.memory_space<vmem>>, vector<1x128xf32>
    %27 = vector.broadcast %26 : vector<1x128xf32> to vector<2x128xf32>
    %28 = arith.addf %25, %27 : vector<2x128xf32>
    %c0_14 = arith.constant 0 : index
    %c0_15 = arith.constant 0 : index
    %29 = vector.load %arg6[%c0_14, %c0_15] : memref<2x128xf32, #tpu.memory_space<vmem>>, vector<2x128xf32>
    tpu.vector_store %arg6[%c0_14, %c0_15], %28 {strides = array<i32>} : memref<2x128xf32, #tpu.memory_space<vmem>>, vector<2x128xf32>,
    return
  }
  func.func @transform_0(%arg0: i32) -> (i32, i32) {
    %c0_i32 = arith.constant 0 : i32
    %c0_i32_0 = arith.constant 0 : i32
    return %arg0, %c0_i32 : i32, i32
  }
  func.func @transform_1(%arg0: i32) -> (i32, i32) {
    %c0_i32 = arith.constant 0 : i32
    %c0_i32_0 = arith.constant 0 : i32
    %c0_i32_1 = arith.constant 0 : i32
    return %c0_i32, %c0_i32_0 : i32, i32
  }
  func.func @transform_2(%arg0: i32) -> (i32, i32) {
    %c0_i32 = arith.constant 0 : i32
    %c0_i32_0 = arith.constant 0 : i32
    %c0_i32_1 = arith.constant 0 : i32
    return %c0_i32, %c0_i32_0 : i32, i32
  }
  func.func @transform_3(%arg0: i32) -> (i32, i32) {
    %c0_i32 = arith.constant 0 : i32
    %c0_i32_0 = arith.constant 0 : i32
    %c0_i32_1 = arith.constant 0 : i32
    return %c0_i32, %c0_i32_0 : i32, i32
  }
  func.func @transform_4(%arg0: i32) -> (i32, i32) {
    %c0_i32 = arith.constant 0 : i32
    %c0_i32_0 = arith.constant 0 : i32
    %c0_i32_1 = arith.constant 0 : i32
    return %c0_i32, %c0_i32_0 : i32, i32
  }
  func.func @transform_5(%arg0: i32) -> (i32, i32) {
    %c0_i32 = arith.constant 0 : i32
    %c0_i32_0 = arith.constant 0 : i32
    return %arg0, %c0_i32 : i32, i32
  }
}

module attributes {stable_mosaic.version = 11 : i64} {
  func.func @encoder_layer_kernel(%arg0: i32, %arg1: memref<16x32xf32, #tpu.memory_space<vmem>>, %arg2: memref<1x32xf32, #tpu.memory_space<vmem>>, %arg3: memref<1x32xf32, #tpu.memory_space<vmem>>, %arg4: memref<2x32x48xbf16, #tpu.memory_space<vmem>>, %arg5: memref<2x1x16xf32, #tpu.memory_space<vmem>>, %arg6: memref<2x16x32xbf16, #tpu.memory_space<vmem>>, %arg7: memref<1x32xf32, #tpu.memory_space<vmem>>, %arg8: memref<1x32xf32, #tpu.memory_space<vmem>>, %arg9: memref<1x32xf32, #tpu.memory_space<vmem>>, %arg10: memref<32x64xbf16, #tpu.memory_space<vmem>>, %arg11: memref<1x64xf32, #tpu.memory_space<vmem>>, %arg12: memref<64x32xbf16, #tpu.memory_space<vmem>>, %arg13: memref<1x32xf32, #tpu.memory_space<vmem>>, %arg14: memref<16x32xf32, #tpu.memory_space<vmem>>) attributes {dimension_semantics = [#tpu.dimension_semantics<parallel>], iteration_bounds = array<i64: 1>, scalar_prefetch = 0 : i64, scratch_operands = 0 : i64, tpu.core_type = #tpu.core_type<tc>, window_params = [{transform_indices = @transform_0, window_bounds = array<i64: 16, 32>}, {pipeline_mode = #tpu.pipeline_mode<synchronous>, transform_indices = @transform_1, window_bounds = array<i64: 1, 32>}, {pipeline_mode = #tpu.pipeline_mode<synchronous>, transform_indices = @transform_2, window_bounds = array<i64: 1, 32>}, {pipeline_mode = #tpu.pipeline_mode<synchronous>, transform_indices = @transform_3, window_bounds = array<i64: 2, 32, 48>}, {pipeline_mode = #tpu.pipeline_mode<synchronous>, transform_indices = @transform_4, window_bounds = array<i64: 2, 1, 16>}, {pipeline_mode = #tpu.pipeline_mode<synchronous>, transform_indices = @transform_5, window_bounds = array<i64: 2, 16, 32>}, {pipeline_mode = #tpu.pipeline_mode<synchronous>, transform_indices = @transform_6, window_bounds = array<i64: 1, 32>}, {pipeline_mode = #tpu.pipeline_mode<synchronous>, transform_indices = @transform_7, window_bounds = array<i64: 1, 32>}, {pipeline_mode = #tpu.pipeline_mode<synchronous>, transform_indices = @transform_8, window_bounds = array<i64: 1, 32>}, {pipeline_mode = #tpu.pipeline_mode<synchronous>, transform_indices = @transform_9, window_bounds = array<i64: 32, 64>}, {pipeline_mode = #tpu.pipeline_mode<synchronous>, transform_indices = @transform_10, window_bounds = array<i64: 1, 64>}, {pipeline_mode = #tpu.pipeline_mode<synchronous>, transform_indices = @transform_11, window_bounds = array<i64: 64, 32>}, {pipeline_mode = #tpu.pipeline_mode<synchronous>, transform_indices = @transform_12, window_bounds = array<i64: 1, 32>}, {transform_indices = @transform_13, window_bounds = array<i64: 16, 32>}]} {
    %c0 = arith.constant 0 : index
    %c0_0 = arith.constant 0 : index
    %0 = vector.load %arg1[%c0, %c0_0] : memref<16x32xf32, #tpu.memory_space<vmem>>, vector<16x32xf32>
    %c0_1 = arith.constant 0 : index
    %c0_2 = arith.constant 0 : index
    %1 = vector.load %arg2[%c0_1, %c0_2] : memref<1x32xf32, #tpu.memory_space<vmem>>, vector<1x32xf32>
    %c0_3 = arith.constant 0 : index
    %c0_4 = arith.constant 0 : index
    %2 = vector.load %arg3[%c0_3, %c0_4] : memref<1x32xf32, #tpu.memory_space<vmem>>, vector<1x32xf32>
    %cst = arith.constant dense<0.000000e+00> : vector<16xf32>
    %3 = vector.multi_reduction <add>, %0, %cst [1] : vector<16x32xf32> to vector<16xf32>
    %4 = vector.shape_cast %3 : vector<16xf32> to vector<16x1xf32>
    %cst_5 = arith.constant 3.200000e+01 : f32
    %5 = vector.broadcast %cst_5 : f32 to vector<16x1xf32>
    %6 = arith.divf %4, %5 : vector<16x1xf32>
    %7 = vector.broadcast %6 : vector<16x1xf32> to vector<16x32xf32>
    %8 = arith.subf %0, %7 : vector<16x32xf32>
    %9 = arith.mulf %8, %8 : vector<16x32xf32>
    %cst_6 = arith.constant dense<0.000000e+00> : vector<16xf32>
    %10 = vector.multi_reduction <add>, %9, %cst_6 [1] : vector<16x32xf32> to vector<16xf32>
    %11 = vector.shape_cast %10 : vector<16xf32> to vector<16x1xf32>
    %cst_7 = arith.constant 3.200000e+01 : f32
    %12 = vector.broadcast %cst_7 : f32 to vector<16x1xf32>
    %13 = arith.divf %11, %12 : vector<16x1xf32>
    %cst_8 = arith.constant 9.99999974E-6 : f32
    %14 = vector.broadcast %cst_8 : f32 to vector<16x1xf32>
    %15 = arith.addf %13, %14 : vector<16x1xf32>
    %16 = math.rsqrt %15 : vector<16x1xf32>
    %17 = vector.broadcast %16 : vector<16x1xf32> to vector<16x32xf32>
    %18 = arith.mulf %8, %17 : vector<16x32xf32>
    %19 = vector.broadcast %1 : vector<1x32xf32> to vector<16x32xf32>
    %20 = arith.mulf %18, %19 : vector<16x32xf32>
    %21 = vector.broadcast %2 : vector<1x32xf32> to vector<16x32xf32>
    %22 = arith.addf %20, %21 : vector<16x32xf32>
    %23 = arith.truncf %22 : vector<16x32xf32> to vector<16x32xbf16>
    %24 = vector.shape_cast %23 : vector<16x32xbf16> to vector<1x16x32xbf16>
    %25 = vector.shape_cast %24 : vector<1x16x32xbf16> to vector<1x16x32xbf16>
    %26 = vector.broadcast %25 : vector<1x16x32xbf16> to vector<2x16x32xbf16>
    %c0_9 = arith.constant 0 : index
    %c0_10 = arith.constant 0 : index
    %c0_11 = arith.constant 0 : index
    %27 = vector.load %arg4[%c0_9, %c0_10, %c0_11] : memref<2x32x48xbf16, #tpu.memory_space<vmem>>, vector<2x32x48xbf16>
    "tpu.trace_start"() <{level = 10 : i32, message = "hnk,hkd->hnd"}> : () -> ()
    %cst_12 = arith.constant dense<0.000000e+00> : vector<2x16x48xf32>
    %28 = tpu.matmul %26, %27, %cst_12 {dimension_numbers = #tpu.dot_dimension_numbers<[2], [1], [1], [2], [0, 0, 0, 1, 1, 2], [0], [0]>} : vector<2x16x32xbf16>, vector<2x32x48xbf16>, vector<2x16x48xf32> -> vector<2x16x48xf32>
    "tpu.trace_stop"() : () -> ()
    %29 = vector.extract_strided_slice %28 {offsets = [0, 0, 0], sizes = [2, 16, 16], strides = [1, 1, 1]} : vector<2x16x48xf32> to vector<2x16x16xf32>
    %30 = arith.truncf %29 : vector<2x16x16xf32> to vector<2x16x16xbf16>
    %31 = vector.extract_strided_slice %28 {offsets = [0, 0, 16], sizes = [2, 16, 16], strides = [1, 1, 1]} : vector<2x16x48xf32> to vector<2x16x16xf32>
    %32 = arith.truncf %31 : vector<2x16x16xf32> to vector<2x16x16xbf16>
    %33 = vector.extract_strided_slice %28 {offsets = [0, 0, 32], sizes = [2, 16, 16], strides = [1, 1, 1]} : vector<2x16x48xf32> to vector<2x16x16xf32>
    %c0_13 = arith.constant 0 : index
    %c0_14 = arith.constant 0 : index
    %c0_15 = arith.constant 0 : index
    %34 = vector.load %arg5[%c0_13, %c0_14, %c0_15] : memref<2x1x16xf32, #tpu.memory_space<vmem>>, vector<2x1x16xf32>
    %35 = vector.broadcast %34 : vector<2x1x16xf32> to vector<2x16x16xf32>
    %36 = arith.addf %33, %35 : vector<2x16x16xf32>
    %37 = arith.truncf %36 : vector<2x16x16xf32> to vector<2x16x16xbf16>
    %38 = tpu.iota {dimensions = array<i32: 2>} : vector<1x1x8xi32>
    %c5_i32 = arith.constant 5 : i32
    %39 = vector.broadcast %c5_i32 : i32 to vector<1x1x8xi32>
    %40 = arith.cmpi slt, %38, %39 : vector<1x1x8xi32>
    %cst_16 = arith.constant 0.000000e+00 : f32
    %cst_17 = arith.constant -1.000000e+30 : f32
    %41 = vector.broadcast %cst_16 : f32 to vector<1x1x8xf32>
    %42 = vector.broadcast %cst_17 : f32 to vector<1x1x8xf32>
    %43 = arith.select %40, %41, %42 : vector<1x1x8xi1>, vector<1x1x8xf32>
    %44 = vector.extract_strided_slice %30 {offsets = [0, 0, 0], sizes = [2, 8, 16], strides = [1, 1, 1]} : vector<2x16x16xbf16> to vector<2x8x16xbf16>
    %45 = vector.extract_strided_slice %32 {offsets = [0, 0, 0], sizes = [2, 8, 16], strides = [1, 1, 1]} : vector<2x16x16xbf16> to vector<2x8x16xbf16>
    "tpu.trace_start"() <{level = 10 : i32, message = "hnd,hmd->hnm"}> : () -> ()
    %cst_18 = arith.constant dense<0.000000e+00> : vector<2x8x8xf32>
    %46 = tpu.matmul %44, %45, %cst_18 {dimension_numbers = #tpu.dot_dimension_numbers<[2], [2], [1], [1], [0, 0, 0, 1, 1, 1], [0], [0]>} : vector<2x8x16xbf16>, vector<2x8x16xbf16>, vector<2x8x8xf32> -> vector<2x8x8xf32>
    "tpu.trace_stop"() : () -> ()
    %47 = vector.broadcast %43 : vector<1x1x8xf32> to vector<2x8x8xf32>
    %48 = arith.addf %46, %47 : vector<2x8x8xf32>
    %cst_19 = arith.constant dense<0xFF800000> : vector<2x8xf32>
    %49 = vector.multi_reduction <maximumf>, %48, %cst_19 [2] : vector<2x8x8xf32> to vector<2x8xf32>
    %50 = vector.shape_cast %49 : vector<2x8xf32> to vector<2x8x1xf32>
    %51 = vector.broadcast %50 : vector<2x8x1xf32> to vector<2x8x8xf32>
    %52 = arith.subf %48, %51 : vector<2x8x8xf32>
    %53 = math.exp %52 : vector<2x8x8xf32>
    %cst_20 = arith.constant dense<0.000000e+00> : vector<2x8xf32>
    %54 = vector.multi_reduction <add>, %53, %cst_20 [2] : vector<2x8x8xf32> to vector<2x8xf32>
    %55 = vector.shape_cast %54 : vector<2x8xf32> to vector<2x8x1xf32>
    %56 = tpu.reciprocal %55 {approx = true} : vector<2x8x1xf32> -> vector<2x8x1xf32>
    %57 = vector.broadcast %56 : vector<2x8x1xf32> to vector<2x8x8xf32>
    %58 = arith.mulf %53, %57 : vector<2x8x8xf32>
    %59 = arith.truncf %58 : vector<2x8x8xf32> to vector<2x8x8xbf16>
    %60 = vector.extract_strided_slice %37 {offsets = [0, 0, 0], sizes = [2, 8, 16], strides = [1, 1, 1]} : vector<2x16x16xbf16> to vector<2x8x16xbf16>
    "tpu.trace_start"() <{level = 10 : i32, message = "hnm,hmd->hnd"}> : () -> ()
    %cst_21 = arith.constant dense<0.000000e+00> : vector<2x8x16xf32>
    %61 = tpu.matmul %59, %60, %cst_21 {dimension_numbers = #tpu.dot_dimension_numbers<[2], [1], [1], [2], [0, 0, 0, 1, 1, 2], [0], [0]>} : vector<2x8x8xbf16>, vector<2x8x16xbf16>, vector<2x8x16xf32> -> vector<2x8x16xf32>
    "tpu.trace_stop"() : () -> ()
    %62 = vector.extract_strided_slice %30 {offsets = [0, 8, 0], sizes = [2, 8, 16], strides = [1, 1, 1]} : vector<2x16x16xbf16> to vector<2x8x16xbf16>
    %63 = vector.extract_strided_slice %32 {offsets = [0, 8, 0], sizes = [2, 8, 16], strides = [1, 1, 1]} : vector<2x16x16xbf16> to vector<2x8x16xbf16>
    "tpu.trace_start"() <{level = 10 : i32, message = "hnd,hmd->hnm"}> : () -> ()
    %cst_22 = arith.constant dense<0.000000e+00> : vector<2x8x8xf32>
    %64 = tpu.matmul %62, %63, %cst_22 {dimension_numbers = #tpu.dot_dimension_numbers<[2], [2], [1], [1], [0, 0, 0, 1, 1, 1], [0], [0]>} : vector<2x8x16xbf16>, vector<2x8x16xbf16>, vector<2x8x8xf32> -> vector<2x8x8xf32>
    "tpu.trace_stop"() : () -> ()
    %65 = vector.broadcast %43 : vector<1x1x8xf32> to vector<2x8x8xf32>
    %66 = arith.addf %64, %65 : vector<2x8x8xf32>
    %cst_23 = arith.constant dense<0xFF800000> : vector<2x8xf32>
    %67 = vector.multi_reduction <maximumf>, %66, %cst_23 [2] : vector<2x8x8xf32> to vector<2x8xf32>
    %68 = vector.shape_cast %67 : vector<2x8xf32> to vector<2x8x1xf32>
    %69 = vector.broadcast %68 : vector<2x8x1xf32> to vector<2x8x8xf32>
    %70 = arith.subf %66, %69 : vector<2x8x8xf32>
    %71 = math.exp %70 : vector<2x8x8xf32>
    %cst_24 = arith.constant dense<0.000000e+00> : vector<2x8xf32>
    %72 = vector.multi_reduction <add>, %71, %cst_24 [2] : vector<2x8x8xf32> to vector<2x8xf32>
    %73 = vector.shape_cast %72 : vector<2x8xf32> to vector<2x8x1xf32>
    %74 = tpu.reciprocal %73 {approx = true} : vector<2x8x1xf32> -> vector<2x8x1xf32>
    %75 = vector.broadcast %74 : vector<2x8x1xf32> to vector<2x8x8xf32>
    %76 = arith.mulf %71, %75 : vector<2x8x8xf32>
    %77 = arith.truncf %76 : vector<2x8x8xf32> to vector<2x8x8xbf16>
    %78 = vector.extract_strided_slice %37 {offsets = [0, 8, 0], sizes = [2, 8, 16], strides = [1, 1, 1]} : vector<2x16x16xbf16> to vector<2x8x16xbf16>
    "tpu.trace_start"() <{level = 10 : i32, message = "hnm,hmd->hnd"}> : () -> ()
    %cst_25 = arith.constant dense<0.000000e+00> : vector<2x8x16xf32>
    %79 = tpu.matmul %77, %78, %cst_25 {dimension_numbers = #tpu.dot_dimension_numbers<[2], [1], [1], [2], [0, 0, 0, 1, 1, 2], [0], [0]>} : vector<2x8x8xbf16>, vector<2x8x16xbf16>, vector<2x8x16xf32> -> vector<2x8x16xf32>
    "tpu.trace_stop"() : () -> ()
    %80 = tpu.concatenate %61, %79 in 1 : vector<2x8x16xf32>, vector<2x8x16xf32> -> vector<2x16x16xf32>
    %81 = arith.truncf %80 : vector<2x16x16xf32> to vector<2x16x16xbf16>
    %c0_26 = arith.constant 0 : index
    %c0_27 = arith.constant 0 : index
    %c0_28 = arith.constant 0 : index
    %82 = vector.load %arg6[%c0_26, %c0_27, %c0_28] : memref<2x16x32xbf16, #tpu.memory_space<vmem>>, vector<2x16x32xbf16>
    "tpu.trace_start"() <{level = 10 : i32, message = "hnd,hdo->hno"}> : () -> ()
    %cst_29 = arith.constant dense<0.000000e+00> : vector<2x16x32xf32>
    %83 = tpu.matmul %81, %82, %cst_29 {dimension_numbers = #tpu.dot_dimension_numbers<[2], [1], [1], [2], [0, 0, 0, 1, 1, 2], [0], [0]>} : vector<2x16x16xbf16>, vector<2x16x32xbf16>, vector<2x16x32xf32> -> vector<2x16x32xf32>
    "tpu.trace_stop"() : () -> ()
    %cst_30 = arith.constant dense<0.000000e+00> : vector<16x32xf32>
    %84 = vector.multi_reduction <add>, %83, %cst_30 [0] : vector<2x16x32xf32> to vector<16x32xf32>
    %85 = arith.addf %0, %84 : vector<16x32xf32>
    %c0_31 = arith.constant 0 : index
    %c0_32 = arith.constant 0 : index
    %86 = vector.load %arg7[%c0_31, %c0_32] : memref<1x32xf32, #tpu.memory_space<vmem>>, vector<1x32xf32>
    %87 = vector.broadcast %86 : vector<1x32xf32> to vector<16x32xf32>
    %88 = arith.addf %85, %87 : vector<16x32xf32>
    %c0_33 = arith.constant 0 : index
    %c0_34 = arith.constant 0 : index
    %89 = vector.load %arg8[%c0_33, %c0_34] : memref<1x32xf32, #tpu.memory_space<vmem>>, vector<1x32xf32>
    %c0_35 = arith.constant 0 : index
    %c0_36 = arith.constant 0 : index
    %90 = vector.load %arg9[%c0_35, %c0_36] : memref<1x32xf32, #tpu.memory_space<vmem>>, vector<1x32xf32>
    %cst_37 = arith.constant dense<0.000000e+00> : vector<16xf32>
    %91 = vector.multi_reduction <add>, %88, %cst_37 [1] : vector<16x32xf32> to vector<16xf32>
    %92 = vector.shape_cast %91 : vector<16xf32> to vector<16x1xf32>
    %cst_38 = arith.constant 3.200000e+01 : f32
    %93 = vector.broadcast %cst_38 : f32 to vector<16x1xf32>
    %94 = arith.divf %92, %93 : vector<16x1xf32>
    %95 = vector.broadcast %94 : vector<16x1xf32> to vector<16x32xf32>
    %96 = arith.subf %88, %95 : vector<16x32xf32>
    %97 = arith.mulf %96, %96 : vector<16x32xf32>
    %cst_39 = arith.constant dense<0.000000e+00> : vector<16xf32>
    %98 = vector.multi_reduction <add>, %97, %cst_39 [1] : vector<16x32xf32> to vector<16xf32>
    %99 = vector.shape_cast %98 : vector<16xf32> to vector<16x1xf32>
    %cst_40 = arith.constant 3.200000e+01 : f32
    %100 = vector.broadcast %cst_40 : f32 to vector<16x1xf32>
    %101 = arith.divf %99, %100 : vector<16x1xf32>
    %cst_41 = arith.constant 9.99999974E-6 : f32
    %102 = vector.broadcast %cst_41 : f32 to vector<16x1xf32>
    %103 = arith.addf %101, %102 : vector<16x1xf32>
    %104 = math.rsqrt %103 : vector<16x1xf32>
    %105 = vector.broadcast %104 : vector<16x1xf32> to vector<16x32xf32>
    %106 = arith.mulf %96, %105 : vector<16x32xf32>
    %107 = vector.broadcast %89 : vector<1x32xf32> to vector<16x32xf32>
    %108 = arith.mulf %106, %107 : vector<16x32xf32>
    %109 = vector.broadcast %90 : vector<1x32xf32> to vector<16x32xf32>
    %110 = arith.addf %108, %109 : vector<16x32xf32>
    %111 = arith.truncf %110 : vector<16x32xf32> to vector<16x32xbf16>
    %c0_42 = arith.constant 0 : index
    %c0_43 = arith.constant 0 : index
    %112 = vector.load %arg10[%c0_42, %c0_43] : memref<32x64xbf16, #tpu.memory_space<vmem>>, vector<32x64xbf16>
    %cst_44 = arith.constant dense<0.000000e+00> : vector<16x64xf32>
    %113 = tpu.matmul %111, %112, %cst_44 {dimension_numbers = #tpu.dot_dimension_numbers<[1], [0], [0], [1], [0, 0, 1, 1], [], []>} : vector<16x32xbf16>, vector<32x64xbf16>, vector<16x64xf32> -> vector<16x64xf32>
    %c0_45 = arith.constant 0 : index
    %c0_46 = arith.constant 0 : index
    %114 = vector.load %arg11[%c0_45, %c0_46] : memref<1x64xf32, #tpu.memory_space<vmem>>, vector<1x64xf32>
    %115 = vector.broadcast %114 : vector<1x64xf32> to vector<16x64xf32>
    %116 = arith.addf %113, %115 : vector<16x64xf32>
    %cst_47 = arith.constant 5.000000e-01 : f32
    %117 = vector.broadcast %cst_47 : f32 to vector<16x64xf32>
    %118 = arith.mulf %117, %116 : vector<16x64xf32>
    %cst_48 = arith.constant 0.707106769 : f32
    %119 = vector.broadcast %cst_48 : f32 to vector<16x64xf32>
    %120 = arith.mulf %116, %119 : vector<16x64xf32>
    %121 = math.erf %120 : vector<16x64xf32>
    %cst_49 = arith.constant 1.000000e+00 : f32
    %122 = vector.broadcast %cst_49 : f32 to vector<16x64xf32>
    %123 = arith.addf %122, %121 : vector<16x64xf32>
    %124 = arith.mulf %118, %123 : vector<16x64xf32>
    %125 = arith.truncf %124 : vector<16x64xf32> to vector<16x64xbf16>
    %c0_50 = arith.constant 0 : index
    %c0_51 = arith.constant 0 : index
    %126 = vector.load %arg12[%c0_50, %c0_51] : memref<64x32xbf16, #tpu.memory_space<vmem>>, vector<64x32xbf16>
    %cst_52 = arith.constant dense<0.000000e+00> : vector<16x32xf32>
    %127 = tpu.matmul %125, %126, %cst_52 {dimension_numbers = #tpu.dot_dimension_numbers<[1], [0], [0], [1], [0, 0, 1, 1], [], []>} : vector<16x64xbf16>, vector<64x32xbf16>, vector<16x32xf32> -> vector<16x32xf32>
    %128 = arith.addf %88, %127 : vector<16x32xf32>
    %c0_53 = arith.constant 0 : index
    %c0_54 = arith.constant 0 : index
    %129 = vector.load %arg13[%c0_53, %c0_54] : memref<1x32xf32, #tpu.memory_space<vmem>>, vector<1x32xf32>
    %130 = vector.broadcast %129 : vector<1x32xf32> to vector<16x32xf32>
    %131 = arith.addf %128, %130 : vector<16x32xf32>
    %c0_55 = arith.constant 0 : index
    %c0_56 = arith.constant 0 : index
    %132 = vector.load %arg14[%c0_55, %c0_56] : memref<16x32xf32, #tpu.memory_space<vmem>>, vector<16x32xf32>
    tpu.vector_store %arg14[%c0_55, %c0_56], %131 {strides = array<i32>} : memref<16x32xf32, #tpu.memory_space<vmem>>, vector<16x32xf32>,
    return
  }
  func.func @transform_0(%arg0: i32) -> (i32, i32) {
    %c0_i32 = arith.constant 0 : i32
    %c0_i32_0 = arith.constant 0 : i32
    return %arg0, %c0_i32 : i32, i32
  }
  func.func @transform_1(%arg0: i32) -> (i32, i32) {
    %c0_i32 = arith.constant 0 : i32
    %c0_i32_0 = arith.constant 0 : i32
    %c0_i32_1 = arith.constant 0 : i32
    return %c0_i32, %c0_i32_0 : i32, i32
  }
  func.func @transform_2(%arg0: i32) -> (i32, i32) {
    %c0_i32 = arith.constant 0 : i32
    %c0_i32_0 = arith.constant 0 : i32
    %c0_i32_1 = arith.constant 0 : i32
    return %c0_i32, %c0_i32_0 : i32, i32
  }
  func.func @transform_3(%arg0: i32) -> (i32, i32, i32) {
    %c0_i32 = arith.constant 0 : i32
    %c0_i32_0 = arith.constant 0 : i32
    %c0_i32_1 = arith.constant 0 : i32
    %c0_i32_2 = arith.constant 0 : i32
    return %c0_i32, %c0_i32_0, %c0_i32_1 : i32, i32, i32
  }
  func.func @transform_4(%arg0: i32) -> (i32, i32, i32) {
    %c0_i32 = arith.constant 0 : i32
    %c0_i32_0 = arith.constant 0 : i32
    %c0_i32_1 = arith.constant 0 : i32
    %c0_i32_2 = arith.constant 0 : i32
    return %c0_i32, %c0_i32_0, %c0_i32_1 : i32, i32, i32
  }
  func.func @transform_5(%arg0: i32) -> (i32, i32, i32) {
    %c0_i32 = arith.constant 0 : i32
    %c0_i32_0 = arith.constant 0 : i32
    %c0_i32_1 = arith.constant 0 : i32
    %c0_i32_2 = arith.constant 0 : i32
    return %c0_i32, %c0_i32_0, %c0_i32_1 : i32, i32, i32
  }
  func.func @transform_6(%arg0: i32) -> (i32, i32) {
    %c0_i32 = arith.constant 0 : i32
    %c0_i32_0 = arith.constant 0 : i32
    %c0_i32_1 = arith.constant 0 : i32
    return %c0_i32, %c0_i32_0 : i32, i32
  }
  func.func @transform_7(%arg0: i32) -> (i32, i32) {
    %c0_i32 = arith.constant 0 : i32
    %c0_i32_0 = arith.constant 0 : i32
    %c0_i32_1 = arith.constant 0 : i32
    return %c0_i32, %c0_i32_0 : i32, i32
  }
  func.func @transform_8(%arg0: i32) -> (i32, i32) {
    %c0_i32 = arith.constant 0 : i32
    %c0_i32_0 = arith.constant 0 : i32
    %c0_i32_1 = arith.constant 0 : i32
    return %c0_i32, %c0_i32_0 : i32, i32
  }
  func.func @transform_9(%arg0: i32) -> (i32, i32) {
    %c0_i32 = arith.constant 0 : i32
    %c0_i32_0 = arith.constant 0 : i32
    %c0_i32_1 = arith.constant 0 : i32
    return %c0_i32, %c0_i32_0 : i32, i32
  }
  func.func @transform_10(%arg0: i32) -> (i32, i32) {
    %c0_i32 = arith.constant 0 : i32
    %c0_i32_0 = arith.constant 0 : i32
    %c0_i32_1 = arith.constant 0 : i32
    return %c0_i32, %c0_i32_0 : i32, i32
  }
  func.func @transform_11(%arg0: i32) -> (i32, i32) {
    %c0_i32 = arith.constant 0 : i32
    %c0_i32_0 = arith.constant 0 : i32
    %c0_i32_1 = arith.constant 0 : i32
    return %c0_i32, %c0_i32_0 : i32, i32
  }
  func.func @transform_12(%arg0: i32) -> (i32, i32) {
    %c0_i32 = arith.constant 0 : i32
    %c0_i32_0 = arith.constant 0 : i32
    %c0_i32_1 = arith.constant 0 : i32
    return %c0_i32, %c0_i32_0 : i32, i32
  }
  func.func @transform_13(%arg0: i32) -> (i32, i32) {
    %c0_i32 = arith.constant 0 : i32
    %c0_i32_0 = arith.constant 0 : i32
    return %arg0, %c0_i32 : i32, i32
  }
}

module attributes {stable_mosaic.version = 11 : i64} {
  func.func @encoder_layer_kernel(%arg0: i32, %arg1: memref<16x32xf32, #tpu.memory_space<vmem>>, %arg2: memref<1x32xf32, #tpu.memory_space<vmem>>, %arg3: memref<1x32xf32, #tpu.memory_space<vmem>>, %arg4: memref<2x32x48xbf16, #tpu.memory_space<vmem>>, %arg5: memref<2x1x16xf32, #tpu.memory_space<vmem>>, %arg6: memref<2x16x32xbf16, #tpu.memory_space<vmem>>, %arg7: memref<1x32xf32, #tpu.memory_space<vmem>>, %arg8: memref<1x32xf32, #tpu.memory_space<vmem>>, %arg9: memref<1x32xf32, #tpu.memory_space<vmem>>, %arg10: memref<32x64xbf16, #tpu.memory_space<vmem>>, %arg11: memref<1x64xf32, #tpu.memory_space<vmem>>, %arg12: memref<64x32xbf16, #tpu.memory_space<vmem>>, %arg13: memref<1x32xf32, #tpu.memory_space<vmem>>, %arg14: memref<16x32xf32, #tpu.memory_space<vmem>>) attributes {dimension_semantics = [#tpu.dimension_semantics<parallel>], iteration_bounds = array<i64: 1>, scalar_prefetch = 0 : i64, scratch_operands = 0 : i64, tpu.core_type = #tpu.core_type<tc>, window_params = [{transform_indices = @transform_0, window_bounds = array<i64: 16, 32>}, {pipeline_mode = #tpu.pipeline_mode<synchronous>, transform_indices = @transform_1, window_bounds = array<i64: 1, 32>}, {pipeline_mode = #tpu.pipeline_mode<synchronous>, transform_indices = @transform_2, window_bounds = array<i64: 1, 32>}, {pipeline_mode = #tpu.pipeline_mode<synchronous>, transform_indices = @transform_3, window_bounds = array<i64: 2, 32, 48>}, {pipeline_mode = #tpu.pipeline_mode<synchronous>, transform_indices = @transform_4, window_bounds = array<i64: 2, 1, 16>}, {pipeline_mode = #tpu.pipeline_mode<synchronous>, transform_indices = @transform_5, window_bounds = array<i64: 2, 16, 32>}, {pipeline_mode = #tpu.pipeline_mode<synchronous>, transform_indices = @transform_6, window_bounds = array<i64: 1, 32>}, {pipeline_mode = #tpu.pipeline_mode<synchronous>, transform_indices = @transform_7, window_bounds = array<i64: 1, 32>}, {pipeline_mode = #tpu.pipeline_mode<synchronous>, transform_indices = @transform_8, window_bounds = array<i64: 1, 32>}, {pipeline_mode = #tpu.pipeline_mode<synchronous>, transform_indices = @transform_9, window_bounds = array<i64: 32, 64>}, {pipeline_mode = #tpu.pipeline_mode<synchronous>, transform_indices = @transform_10, window_bounds = array<i64: 1, 64>}, {pipeline_mode = #tpu.pipeline_mode<synchronous>, transform_indices = @transform_11, window_bounds = array<i64: 64, 32>}, {pipeline_mode = #tpu.pipeline_mode<synchronous>, transform_indices = @transform_12, window_bounds = array<i64: 1, 32>}, {transform_indices = @transform_13, window_bounds = array<i64: 16, 32>}]} {
    %c0 = arith.constant 0 : index
    %c0_0 = arith.constant 0 : index
    %0 = vector.load %arg1[%c0, %c0_0] : memref<16x32xf32, #tpu.memory_space<vmem>>, vector<16x32xf32>
    %c0_1 = arith.constant 0 : index
    %c0_2 = arith.constant 0 : index
    %1 = vector.load %arg2[%c0_1, %c0_2] : memref<1x32xf32, #tpu.memory_space<vmem>>, vector<1x32xf32>
    %c0_3 = arith.constant 0 : index
    %c0_4 = arith.constant 0 : index
    %2 = vector.load %arg3[%c0_3, %c0_4] : memref<1x32xf32, #tpu.memory_space<vmem>>, vector<1x32xf32>
    %cst = arith.constant dense<0.000000e+00> : vector<16xf32>
    %3 = vector.multi_reduction <add>, %0, %cst [1] : vector<16x32xf32> to vector<16xf32>
    %4 = vector.shape_cast %3 : vector<16xf32> to vector<16x1xf32>
    %cst_5 = arith.constant 3.200000e+01 : f32
    %5 = vector.broadcast %cst_5 : f32 to vector<16x1xf32>
    %6 = arith.divf %4, %5 : vector<16x1xf32>
    %7 = vector.broadcast %6 : vector<16x1xf32> to vector<16x32xf32>
    %8 = arith.subf %0, %7 : vector<16x32xf32>
    %9 = arith.mulf %8, %8 : vector<16x32xf32>
    %cst_6 = arith.constant dense<0.000000e+00> : vector<16xf32>
    %10 = vector.multi_reduction <add>, %9, %cst_6 [1] : vector<16x32xf32> to vector<16xf32>
    %11 = vector.shape_cast %10 : vector<16xf32> to vector<16x1xf32>
    %cst_7 = arith.constant 3.200000e+01 : f32
    %12 = vector.broadcast %cst_7 : f32 to vector<16x1xf32>
    %13 = arith.divf %11, %12 : vector<16x1xf32>
    %cst_8 = arith.constant 9.99999974E-6 : f32
    %14 = vector.broadcast %cst_8 : f32 to vector<16x1xf32>
    %15 = arith.addf %13, %14 : vector<16x1xf32>
    %16 = math.rsqrt %15 : vector<16x1xf32>
    %17 = vector.broadcast %16 : vector<16x1xf32> to vector<16x32xf32>
    %18 = arith.mulf %8, %17 : vector<16x32xf32>
    %19 = vector.broadcast %1 : vector<1x32xf32> to vector<16x32xf32>
    %20 = arith.mulf %18, %19 : vector<16x32xf32>
    %21 = vector.broadcast %2 : vector<1x32xf32> to vector<16x32xf32>
    %22 = arith.addf %20, %21 : vector<16x32xf32>
    %23 = arith.truncf %22 : vector<16x32xf32> to vector<16x32xbf16>
    %24 = vector.shape_cast %23 : vector<16x32xbf16> to vector<1x16x32xbf16>
    %25 = vector.shape_cast %24 : vector<1x16x32xbf16> to vector<1x16x32xbf16>
    %26 = vector.broadcast %25 : vector<1x16x32xbf16> to vector<2x16x32xbf16>
    %c0_9 = arith.constant 0 : index
    %c0_10 = arith.constant 0 : index
    %c0_11 = arith.constant 0 : index
    %27 = vector.load %arg4[%c0_9, %c0_10, %c0_11] : memref<2x32x48xbf16, #tpu.memory_space<vmem>>, vector<2x32x48xbf16>
    "tpu.trace_start"() <{level = 10 : i32, message = "hnk,hkd->hnd"}> : () -> ()
    %cst_12 = arith.constant dense<0.000000e+00> : vector<2x16x48xf32>
    %28 = tpu.matmul %26, %27, %cst_12 {dimension_numbers = #tpu.dot_dimension_numbers<[2], [1], [1], [2], [0, 0, 0, 1, 1, 2], [0], [0]>} : vector<2x16x32xbf16>, vector<2x32x48xbf16>, vector<2x16x48xf32> -> vector<2x16x48xf32>
    "tpu.trace_stop"() : () -> ()
    %29 = vector.extract_strided_slice %28 {offsets = [0, 0, 0], sizes = [2, 16, 16], strides = [1, 1, 1]} : vector<2x16x48xf32> to vector<2x16x16xf32>
    %30 = arith.truncf %29 : vector<2x16x16xf32> to vector<2x16x16xbf16>
    %31 = vector.extract_strided_slice %28 {offsets = [0, 0, 16], sizes = [2, 16, 16], strides = [1, 1, 1]} : vector<2x16x48xf32> to vector<2x16x16xf32>
    %32 = arith.truncf %31 : vector<2x16x16xf32> to vector<2x16x16xbf16>
    %33 = vector.extract_strided_slice %28 {offsets = [0, 0, 32], sizes = [2, 16, 16], strides = [1, 1, 1]} : vector<2x16x48xf32> to vector<2x16x16xf32>
    %c0_13 = arith.constant 0 : index
    %c0_14 = arith.constant 0 : index
    %c0_15 = arith.constant 0 : index
    %34 = vector.load %arg5[%c0_13, %c0_14, %c0_15] : memref<2x1x16xf32, #tpu.memory_space<vmem>>, vector<2x1x16xf32>
    %35 = vector.broadcast %34 : vector<2x1x16xf32> to vector<2x16x16xf32>
    %36 = arith.addf %33, %35 : vector<2x16x16xf32>
    %37 = arith.truncf %36 : vector<2x16x16xf32> to vector<2x16x16xbf16>
    %38 = tpu.iota {dimensions = array<i32: 2>} : vector<1x1x8xi32>
    %c5_i32 = arith.constant 5 : i32
    %39 = vector.broadcast %c5_i32 : i32 to vector<1x1x8xi32>
    %40 = arith.cmpi slt, %38, %39 : vector<1x1x8xi32>
    %cst_16 = arith.constant 0.000000e+00 : f32
    %cst_17 = arith.constant -1.000000e+30 : f32
    %41 = vector.broadcast %cst_16 : f32 to vector<1x1x8xf32>
    %42 = vector.broadcast %cst_17 : f32 to vector<1x1x8xf32>
    %43 = arith.select %40, %41, %42 : vector<1x1x8xi1>, vector<1x1x8xf32>
    %44 = vector.extract_strided_slice %30 {offsets = [0, 0, 0], sizes = [2, 8, 16], strides = [1, 1, 1]} : vector<2x16x16xbf16> to vector<2x8x16xbf16>
    %45 = vector.extract_strided_slice %32 {offsets = [0, 0, 0], sizes = [2, 8, 16], strides = [1, 1, 1]} : vector<2x16x16xbf16> to vector<2x8x16xbf16>
    "tpu.trace_start"() <{level = 10 : i32, message = "hnd,hmd->hnm"}> : () -> ()
    %cst_18 = arith.constant dense<0.000000e+00> : vector<2x8x8xf32>
    %46 = tpu.matmul %44, %45, %cst_18 {dimension_numbers = #tpu.dot_dimension_numbers<[2], [2], [1], [1], [0, 0, 0, 1, 1, 1], [0], [0]>} : vector<2x8x16xbf16>, vector<2x8x16xbf16>, vector<2x8x8xf32> -> vector<2x8x8xf32>
    "tpu.trace_stop"() : () -> ()
    %47 = vector.broadcast %43 : vector<1x1x8xf32> to vector<2x8x8xf32>
    %48 = arith.addf %46, %47 : vector<2x8x8xf32>
    %cst_19 = arith.constant dense<0xFF800000> : vector<2x8xf32>
    %49 = vector.multi_reduction <maximumf>, %48, %cst_19 [2] : vector<2x8x8xf32> to vector<2x8xf32>
    %50 = vector.shape_cast %49 : vector<2x8xf32> to vector<2x8x1xf32>
    %51 = vector.broadcast %50 : vector<2x8x1xf32> to vector<2x8x8xf32>
    %52 = arith.subf %48, %51 : vector<2x8x8xf32>
    %53 = math.exp %52 : vector<2x8x8xf32>
    %cst_20 = arith.constant dense<0.000000e+00> : vector<2x8xf32>
    %54 = vector.multi_reduction <add>, %53, %cst_20 [2] : vector<2x8x8xf32> to vector<2x8xf32>
    %55 = vector.shape_cast %54 : vector<2x8xf32> to vector<2x8x1xf32>
    %56 = tpu.reciprocal %55 {approx = true} : vector<2x8x1xf32> -> vector<2x8x1xf32>
    %57 = vector.broadcast %56 : vector<2x8x1xf32> to vector<2x8x8xf32>
    %58 = arith.mulf %53, %57 : vector<2x8x8xf32>
    %59 = arith.truncf %58 : vector<2x8x8xf32> to vector<2x8x8xbf16>
    %60 = vector.extract_strided_slice %37 {offsets = [0, 0, 0], sizes = [2, 8, 16], strides = [1, 1, 1]} : vector<2x16x16xbf16> to vector<2x8x16xbf16>
    "tpu.trace_start"() <{level = 10 : i32, message = "hnm,hmd->hnd"}> : () -> ()
    %cst_21 = arith.constant dense<0.000000e+00> : vector<2x8x16xf32>
    %61 = tpu.matmul %59, %60, %cst_21 {dimension_numbers = #tpu.dot_dimension_numbers<[2], [1], [1], [2], [0, 0, 0, 1, 1, 2], [0], [0]>} : vector<2x8x8xbf16>, vector<2x8x16xbf16>, vector<2x8x16xf32> -> vector<2x8x16xf32>
    "tpu.trace_stop"() : () -> ()
    %62 = vector.extract_strided_slice %30 {offsets = [0, 8, 0], sizes = [2, 8, 16], strides = [1, 1, 1]} : vector<2x16x16xbf16> to vector<2x8x16xbf16>
    %63 = vector.extract_strided_slice %32 {offsets = [0, 8, 0], sizes = [2, 8, 16], strides = [1, 1, 1]} : vector<2x16x16xbf16> to vector<2x8x16xbf16>
    "tpu.trace_start"() <{level = 10 : i32, message = "hnd,hmd->hnm"}> : () -> ()
    %cst_22 = arith.constant dense<0.000000e+00> : vector<2x8x8xf32>
    %64 = tpu.matmul %62, %63, %cst_22 {dimension_numbers = #tpu.dot_dimension_numbers<[2], [2], [1], [1], [0, 0, 0, 1, 1, 1], [0], [0]>} : vector<2x8x16xbf16>, vector<2x8x16xbf16>, vector<2x8x8xf32> -> vector<2x8x8xf32>
    "tpu.trace_stop"() : () -> ()
    %65 = vector.broadcast %43 : vector<1x1x8xf32> to vector<2x8x8xf32>
    %66 = arith.addf %64, %65 : vector<2x8x8xf32>
    %cst_23 = arith.constant dense<0xFF800000> : vector<2x8xf32>
    %67 = vector.multi_reduction <maximumf>, %66, %cst_23 [2] : vector<2x8x8xf32> to vector<2x8xf32>
    %68 = vector.shape_cast %67 : vector<2x8xf32> to vector<2x8x1xf32>
    %69 = vector.broadcast %68 : vector<2x8x1xf32> to vector<2x8x8xf32>
    %70 = arith.subf %66, %69 : vector<2x8x8xf32>
    %71 = math.exp %70 : vector<2x8x8xf32>
    %cst_24 = arith.constant dense<0.000000e+00> : vector<2x8xf32>
    %72 = vector.multi_reduction <add>, %71, %cst_24 [2] : vector<2x8x8xf32> to vector<2x8xf32>
    %73 = vector.shape_cast %72 : vector<2x8xf32> to vector<2x8x1xf32>
    %74 = tpu.reciprocal %73 {approx = true} : vector<2x8x1xf32> -> vector<2x8x1xf32>
    %75 = vector.broadcast %74 : vector<2x8x1xf32> to vector<2x8x8xf32>
    %76 = arith.mulf %71, %75 : vector<2x8x8xf32>
    %77 = arith.truncf %76 : vector<2x8x8xf32> to vector<2x8x8xbf16>
    %78 = vector.extract_strided_slice %37 {offsets = [0, 8, 0], sizes = [2, 8, 16], strides = [1, 1, 1]} : vector<2x16x16xbf16> to vector<2x8x16xbf16>
    "tpu.trace_start"() <{level = 10 : i32, message = "hnm,hmd->hnd"}> : () -> ()
    %cst_25 = arith.constant dense<0.000000e+00> : vector<2x8x16xf32>
    %79 = tpu.matmul %77, %78, %cst_25 {dimension_numbers = #tpu.dot_dimension_numbers<[2], [1], [1], [2], [0, 0, 0, 1, 1, 2], [0], [0]>} : vector<2x8x8xbf16>, vector<2x8x16xbf16>, vector<2x8x16xf32> -> vector<2x8x16xf32>
    "tpu.trace_stop"() : () -> ()
    %80 = tpu.concatenate %61, %79 in 1 : vector<2x8x16xf32>, vector<2x8x16xf32> -> vector<2x16x16xf32>
    %81 = arith.truncf %80 : vector<2x16x16xf32> to vector<2x16x16xbf16>
    %c0_26 = arith.constant 0 : index
    %c0_27 = arith.constant 0 : index
    %c0_28 = arith.constant 0 : index
    %82 = vector.load %arg6[%c0_26, %c0_27, %c0_28] : memref<2x16x32xbf16, #tpu.memory_space<vmem>>, vector<2x16x32xbf16>
    "tpu.trace_start"() <{level = 10 : i32, message = "hnd,hdo->hno"}> : () -> ()
    %cst_29 = arith.constant dense<0.000000e+00> : vector<2x16x32xf32>
    %83 = tpu.matmul %81, %82, %cst_29 {dimension_numbers = #tpu.dot_dimension_numbers<[2], [1], [1], [2], [0, 0, 0, 1, 1, 2], [0], [0]>} : vector<2x16x16xbf16>, vector<2x16x32xbf16>, vector<2x16x32xf32> -> vector<2x16x32xf32>
    "tpu.trace_stop"() : () -> ()
    %cst_30 = arith.constant dense<0.000000e+00> : vector<16x32xf32>
    %84 = vector.multi_reduction <add>, %83, %cst_30 [0] : vector<2x16x32xf32> to vector<16x32xf32>
    %85 = arith.addf %0, %84 : vector<16x32xf32>
    %c0_31 = arith.constant 0 : index
    %c0_32 = arith.constant 0 : index
    %86 = vector.load %arg7[%c0_31, %c0_32] : memref<1x32xf32, #tpu.memory_space<vmem>>, vector<1x32xf32>
    %87 = vector.broadcast %86 : vector<1x32xf32> to vector<16x32xf32>
    %88 = arith.addf %85, %87 : vector<16x32xf32>
    %c0_33 = arith.constant 0 : index
    %c0_34 = arith.constant 0 : index
    %89 = vector.load %arg8[%c0_33, %c0_34] : memref<1x32xf32, #tpu.memory_space<vmem>>, vector<1x32xf32>
    %c0_35 = arith.constant 0 : index
    %c0_36 = arith.constant 0 : index
    %90 = vector.load %arg9[%c0_35, %c0_36] : memref<1x32xf32, #tpu.memory_space<vmem>>, vector<1x32xf32>
    %cst_37 = arith.constant dense<0.000000e+00> : vector<16xf32>
    %91 = vector.multi_reduction <add>, %88, %cst_37 [1] : vector<16x32xf32> to vector<16xf32>
    %92 = vector.shape_cast %91 : vector<16xf32> to vector<16x1xf32>
    %cst_38 = arith.constant 3.200000e+01 : f32
    %93 = vector.broadcast %cst_38 : f32 to vector<16x1xf32>
    %94 = arith.divf %92, %93 : vector<16x1xf32>
    %95 = vector.broadcast %94 : vector<16x1xf32> to vector<16x32xf32>
    %96 = arith.subf %88, %95 : vector<16x32xf32>
    %97 = arith.mulf %96, %96 : vector<16x32xf32>
    %cst_39 = arith.constant dense<0.000000e+00> : vector<16xf32>
    %98 = vector.multi_reduction <add>, %97, %cst_39 [1] : vector<16x32xf32> to vector<16xf32>
    %99 = vector.shape_cast %98 : vector<16xf32> to vector<16x1xf32>
    %cst_40 = arith.constant 3.200000e+01 : f32
    %100 = vector.broadcast %cst_40 : f32 to vector<16x1xf32>
    %101 = arith.divf %99, %100 : vector<16x1xf32>
    %cst_41 = arith.constant 9.99999974E-6 : f32
    %102 = vector.broadcast %cst_41 : f32 to vector<16x1xf32>
    %103 = arith.addf %101, %102 : vector<16x1xf32>
    %104 = math.rsqrt %103 : vector<16x1xf32>
    %105 = vector.broadcast %104 : vector<16x1xf32> to vector<16x32xf32>
    %106 = arith.mulf %96, %105 : vector<16x32xf32>
    %107 = vector.broadcast %89 : vector<1x32xf32> to vector<16x32xf32>
    %108 = arith.mulf %106, %107 : vector<16x32xf32>
    %109 = vector.broadcast %90 : vector<1x32xf32> to vector<16x32xf32>
    %110 = arith.addf %108, %109 : vector<16x32xf32>
    %111 = arith.truncf %110 : vector<16x32xf32> to vector<16x32xbf16>
    %c0_42 = arith.constant 0 : index
    %c0_43 = arith.constant 0 : index
    %112 = vector.load %arg10[%c0_42, %c0_43] : memref<32x64xbf16, #tpu.memory_space<vmem>>, vector<32x64xbf16>
    %cst_44 = arith.constant dense<0.000000e+00> : vector<16x64xf32>
    %113 = tpu.matmul %111, %112, %cst_44 {dimension_numbers = #tpu.dot_dimension_numbers<[1], [0], [0], [1], [0, 0, 1, 1], [], []>} : vector<16x32xbf16>, vector<32x64xbf16>, vector<16x64xf32> -> vector<16x64xf32>
    %c0_45 = arith.constant 0 : index
    %c0_46 = arith.constant 0 : index
    %114 = vector.load %arg11[%c0_45, %c0_46] : memref<1x64xf32, #tpu.memory_space<vmem>>, vector<1x64xf32>
    %115 = vector.broadcast %114 : vector<1x64xf32> to vector<16x64xf32>
    %116 = arith.addf %113, %115 : vector<16x64xf32>
    %cst_47 = arith.constant 5.000000e-01 : f32
    %117 = vector.broadcast %cst_47 : f32 to vector<16x64xf32>
    %118 = arith.mulf %117, %116 : vector<16x64xf32>
    %cst_48 = arith.constant 0.707106769 : f32
    %119 = vector.broadcast %cst_48 : f32 to vector<16x64xf32>
    %120 = arith.mulf %116, %119 : vector<16x64xf32>
    %121 = math.erf %120 : vector<16x64xf32>
    %cst_49 = arith.constant 1.000000e+00 : f32
    %122 = vector.broadcast %cst_49 : f32 to vector<16x64xf32>
    %123 = arith.addf %122, %121 : vector<16x64xf32>
    %124 = arith.mulf %118, %123 : vector<16x64xf32>
    %125 = arith.truncf %124 : vector<16x64xf32> to vector<16x64xbf16>
    %c0_50 = arith.constant 0 : index
    %c0_51 = arith.constant 0 : index
    %126 = vector.load %arg12[%c0_50, %c0_51] : memref<64x32xbf16, #tpu.memory_space<vmem>>, vector<64x32xbf16>
    %cst_52 = arith.constant dense<0.000000e+00> : vector<16x32xf32>
    %127 = tpu.matmul %125, %126, %cst_52 {dimension_numbers = #tpu.dot_dimension_numbers<[1], [0], [0], [1], [0, 0, 1, 1], [], []>} : vector<16x64xbf16>, vector<64x32xbf16>, vector<16x32xf32> -> vector<16x32xf32>
    %128 = arith.addf %88, %127 : vector<16x32xf32>
    %c0_53 = arith.constant 0 : index
    %c0_54 = arith.constant 0 : index
    %129 = vector.load %arg13[%c0_53, %c0_54] : memref<1x32xf32, #tpu.memory_space<vmem>>, vector<1x32xf32>
    %130 = vector.broadcast %129 : vector<1x32xf32> to vector<16x32xf32>
    %131 = arith.addf %128, %130 : vector<16x32xf32>
    %c0_55 = arith.constant 0 : index
    %c0_56 = arith.constant 0 : index
    %132 = vector.load %arg14[%c0_55, %c0_56] : memref<16x32xf32, #tpu.memory_space<vmem>>, vector<16x32xf32>
    tpu.vector_store %arg14[%c0_55, %c0_56], %131 {strides = array<i32>} : memref<16x32xf32, #tpu.memory_space<vmem>>, vector<16x32xf32>,
    return
  }
  func.func @transform_0(%arg0: i32) -> (i32, i32) {
    %c0_i32 = arith.constant 0 : i32
    %c0_i32_0 = arith.constant 0 : i32
    return %arg0, %c0_i32 : i32, i32
  }
  func.func @transform_1(%arg0: i32) -> (i32, i32) {
    %c0_i32 = arith.constant 0 : i32
    %c0_i32_0 = arith.constant 0 : i32
    %c0_i32_1 = arith.constant 0 : i32
    return %c0_i32, %c0_i32_0 : i32, i32
  }
  func.func @transform_2(%arg0: i32) -> (i32, i32) {
    %c0_i32 = arith.constant 0 : i32
    %c0_i32_0 = arith.constant 0 : i32
    %c0_i32_1 = arith.constant 0 : i32
    return %c0_i32, %c0_i32_0 : i32, i32
  }
  func.func @transform_3(%arg0: i32) -> (i32, i32, i32) {
    %c0_i32 = arith.constant 0 : i32
    %c0_i32_0 = arith.constant 0 : i32
    %c0_i32_1 = arith.constant 0 : i32
    %c0_i32_2 = arith.constant 0 : i32
    return %c0_i32, %c0_i32_0, %c0_i32_1 : i32, i32, i32
  }
  func.func @transform_4(%arg0: i32) -> (i32, i32, i32) {
    %c0_i32 = arith.constant 0 : i32
    %c0_i32_0 = arith.constant 0 : i32
    %c0_i32_1 = arith.constant 0 : i32
    %c0_i32_2 = arith.constant 0 : i32
    return %c0_i32, %c0_i32_0, %c0_i32_1 : i32, i32, i32
  }
  func.func @transform_5(%arg0: i32) -> (i32, i32, i32) {
    %c0_i32 = arith.constant 0 : i32
    %c0_i32_0 = arith.constant 0 : i32
    %c0_i32_1 = arith.constant 0 : i32
    %c0_i32_2 = arith.constant 0 : i32
    return %c0_i32, %c0_i32_0, %c0_i32_1 : i32, i32, i32
  }
  func.func @transform_6(%arg0: i32) -> (i32, i32) {
    %c0_i32 = arith.constant 0 : i32
    %c0_i32_0 = arith.constant 0 : i32
    %c0_i32_1 = arith.constant 0 : i32
    return %c0_i32, %c0_i32_0 : i32, i32
  }
  func.func @transform_7(%arg0: i32) -> (i32, i32) {
    %c0_i32 = arith.constant 0 : i32
    %c0_i32_0 = arith.constant 0 : i32
    %c0_i32_1 = arith.constant 0 : i32
    return %c0_i32, %c0_i32_0 : i32, i32
  }
  func.func @transform_8(%arg0: i32) -> (i32, i32) {
    %c0_i32 = arith.constant 0 : i32
    %c0_i32_0 = arith.constant 0 : i32
    %c0_i32_1 = arith.constant 0 : i32
    return %c0_i32, %c0_i32_0 : i32, i32
  }
  func.func @transform_9(%arg0: i32) -> (i32, i32) {
    %c0_i32 = arith.constant 0 : i32
    %c0_i32_0 = arith.constant 0 : i32
    %c0_i32_1 = arith.constant 0 : i32
    return %c0_i32, %c0_i32_0 : i32, i32
  }
  func.func @transform_10(%arg0: i32) -> (i32, i32) {
    %c0_i32 = arith.constant 0 : i32
    %c0_i32_0 = arith.constant 0 : i32
    %c0_i32_1 = arith.constant 0 : i32
    return %c0_i32, %c0_i32_0 : i32, i32
  }
  func.func @transform_11(%arg0: i32) -> (i32, i32) {
    %c0_i32 = arith.constant 0 : i32
    %c0_i32_0 = arith.constant 0 : i32
    %c0_i32_1 = arith.constant 0 : i32
    return %c0_i32, %c0_i32_0 : i32, i32
  }
  func.func @transform_12(%arg0: i32) -> (i32, i32) {
    %c0_i32 = arith.constant 0 : i32
    %c0_i32_0 = arith.constant 0 : i32
    %c0_i32_1 = arith.constant 0 : i32
    return %c0_i32, %c0_i32_0 : i32, i32
  }
  func.func @transform_13(%arg0: i32) -> (i32, i32) {
    %c0_i32 = arith.constant 0 : i32
    %c0_i32_0 = arith.constant 0 : i32
    return %arg0, %c0_i32 : i32, i32
  }
}

module attributes {stable_mosaic.version = 11 : i64} {
  func.func @patch_embed_kernel(%arg0: i32, %arg1: memref<1x4x256xf32, #tpu.memory_space<vmem>>, %arg2: memref<256x32xbf16, #tpu.memory_space<vmem>>, %arg3: memref<1x32xf32, #tpu.memory_space<vmem>>, %arg4: memref<1x32xf32, #tpu.memory_space<vmem>>, %arg5: memref<1x32xf32, #tpu.memory_space<vmem>>, %arg6: memref<1x32xf32, #tpu.memory_space<vmem>>, %arg7: memref<4x32xf32, #tpu.memory_space<vmem>>, %arg8: memref<8x32xf32, #tpu.memory_space<vmem>>) attributes {dimension_semantics = [#tpu.dimension_semantics<parallel>], iteration_bounds = array<i64: 2>, scalar_prefetch = 0 : i64, scratch_operands = 0 : i64, tpu.core_type = #tpu.core_type<tc>, window_params = [{transform_indices = @transform_0, window_bounds = array<i64: 1, 4, 256>}, {pipeline_mode = #tpu.pipeline_mode<synchronous>, transform_indices = @transform_1, window_bounds = array<i64: 256, 32>}, {pipeline_mode = #tpu.pipeline_mode<synchronous>, transform_indices = @transform_2, window_bounds = array<i64: 1, 32>}, {pipeline_mode = #tpu.pipeline_mode<synchronous>, transform_indices = @transform_3, window_bounds = array<i64: 1, 32>}, {pipeline_mode = #tpu.pipeline_mode<synchronous>, transform_indices = @transform_4, window_bounds = array<i64: 1, 32>}, {pipeline_mode = #tpu.pipeline_mode<synchronous>, transform_indices = @transform_5, window_bounds = array<i64: 1, 32>}, {pipeline_mode = #tpu.pipeline_mode<synchronous>, transform_indices = @transform_6, window_bounds = array<i64: 4, 32>}, {transform_indices = @transform_7, window_bounds = array<i64: 8, 32>}]} {
    %c0 = arith.constant 0 : index
    %c0_0 = arith.constant 0 : index
    %c0_1 = arith.constant 0 : index
    %0 = vector.load %arg1[%c0, %c0_0, %c0_1] : memref<1x4x256xf32, #tpu.memory_space<vmem>>, vector<1x4x256xf32>
    %1 = vector.shape_cast %0 : vector<1x4x256xf32> to vector<4x256xf32>
    %2 = arith.truncf %1 : vector<4x256xf32> to vector<4x256xbf16>
    %c0_2 = arith.constant 0 : index
    %c0_3 = arith.constant 0 : index
    %3 = vector.load %arg2[%c0_2, %c0_3] : memref<256x32xbf16, #tpu.memory_space<vmem>>, vector<256x32xbf16>
    %cst = arith.constant dense<0.000000e+00> : vector<4x32xf32>
    %4 = tpu.matmul %2, %3, %cst {dimension_numbers = #tpu.dot_dimension_numbers<[1], [0], [0], [1], [0, 0, 1, 1], [], []>} : vector<4x256xbf16>, vector<256x32xbf16>, vector<4x32xf32> -> vector<4x32xf32>
    %c0_4 = arith.constant 0 : index
    %c0_5 = arith.constant 0 : index
    %5 = vector.load %arg3[%c0_4, %c0_5] : memref<1x32xf32, #tpu.memory_space<vmem>>, vector<1x32xf32>
    %6 = vector.broadcast %5 : vector<1x32xf32> to vector<4x32xf32>
    %7 = arith.addf %4, %6 : vector<4x32xf32>
    %c0_6 = arith.constant 0 : index
    %c0_7 = arith.constant 0 : index
    %8 = vector.load %arg4[%c0_6, %c0_7] : memref<1x32xf32, #tpu.memory_space<vmem>>, vector<1x32xf32>
    %c0_8 = arith.constant 0 : index
    %c0_9 = arith.constant 0 : index
    %9 = vector.load %arg5[%c0_8, %c0_9] : memref<1x32xf32, #tpu.memory_space<vmem>>, vector<1x32xf32>
    %cst_10 = arith.constant dense<0.000000e+00> : vector<4xf32>
    %10 = vector.multi_reduction <add>, %7, %cst_10 [1] : vector<4x32xf32> to vector<4xf32>
    %11 = vector.shape_cast %10 : vector<4xf32> to vector<4x1xf32>
    %cst_11 = arith.constant 3.200000e+01 : f32
    %12 = vector.broadcast %cst_11 : f32 to vector<4x1xf32>
    %13 = arith.divf %11, %12 : vector<4x1xf32>
    %14 = vector.broadcast %13 : vector<4x1xf32> to vector<4x32xf32>
    %15 = arith.subf %7, %14 : vector<4x32xf32>
    %16 = arith.mulf %15, %15 : vector<4x32xf32>
    %cst_12 = arith.constant dense<0.000000e+00> : vector<4xf32>
    %17 = vector.multi_reduction <add>, %16, %cst_12 [1] : vector<4x32xf32> to vector<4xf32>
    %18 = vector.shape_cast %17 : vector<4xf32> to vector<4x1xf32>
    %cst_13 = arith.constant 3.200000e+01 : f32
    %19 = vector.broadcast %cst_13 : f32 to vector<4x1xf32>
    %20 = arith.divf %18, %19 : vector<4x1xf32>
    %cst_14 = arith.constant 9.99999974E-6 : f32
    %21 = vector.broadcast %cst_14 : f32 to vector<4x1xf32>
    %22 = arith.addf %20, %21 : vector<4x1xf32>
    %23 = math.rsqrt %22 : vector<4x1xf32>
    %24 = vector.broadcast %23 : vector<4x1xf32> to vector<4x32xf32>
    %25 = arith.mulf %15, %24 : vector<4x32xf32>
    %26 = vector.broadcast %8 : vector<1x32xf32> to vector<4x32xf32>
    %27 = arith.mulf %25, %26 : vector<4x32xf32>
    %28 = vector.broadcast %9 : vector<1x32xf32> to vector<4x32xf32>
    %29 = arith.addf %27, %28 : vector<4x32xf32>
    %c0_15 = arith.constant 0 : index
    %c0_16 = arith.constant 0 : index
    %30 = vector.load %arg7[%c0_15, %c0_16] : memref<4x32xf32, #tpu.memory_space<vmem>>, vector<4x32xf32>
    %31 = arith.addf %29, %30 : vector<4x32xf32>
    %c0_17 = arith.constant 0 : index
    %c0_18 = arith.constant 0 : index
    %32 = vector.load %arg6[%c0_17, %c0_18] : memref<1x32xf32, #tpu.memory_space<vmem>>, vector<1x32xf32>
    %c0_19 = arith.constant 0 : index
    %c0_20 = arith.constant 0 : index
    %33 = vector.load %arg8[%c0_19, %c0_20] : memref<8x32xf32, #tpu.memory_space<vmem>>, vector<1x32xf32>
    tpu.vector_store %arg8[%c0_19, %c0_20], %32 {strides = array<i32>} : memref<8x32xf32, #tpu.memory_space<vmem>>, vector<1x32xf32>,
    %c1 = arith.constant 1 : index
    %c0_21 = arith.constant 0 : index
    %34 = vector.load %arg8[%c1, %c0_21] : memref<8x32xf32, #tpu.memory_space<vmem>>, vector<4x32xf32>
    tpu.vector_store %arg8[%c1, %c0_21], %31 {strides = array<i32>} : memref<8x32xf32, #tpu.memory_space<vmem>>, vector<4x32xf32>,
    %cst_22 = arith.constant 0.000000e+00 : f32
    %35 = vector.broadcast %cst_22 : f32 to vector<3x32xf32>
    %c5 = arith.constant 5 : index
    %c0_23 = arith.constant 0 : index
    %36 = vector.load %arg8[%c5, %c0_23] : memref<8x32xf32, #tpu.memory_space<vmem>>, vector<3x32xf32>
    tpu.vector_store %arg8[%c5, %c0_23], %35 {strides = array<i32>} : memref<8x32xf32, #tpu.memory_space<vmem>>, vector<3x32xf32>,
    return
  }
  func.func @transform_0(%arg0: i32) -> (i32, i32, i32) {
    %c0_i32 = arith.constant 0 : i32
    %c0_i32_0 = arith.constant 0 : i32
    %c0_i32_1 = arith.constant 0 : i32
    return %arg0, %c0_i32, %c0_i32_0 : i32, i32, i32
  }
  func.func @transform_1(%arg0: i32) -> (i32, i32) {
    %c0_i32 = arith.constant 0 : i32
    %c0_i32_0 = arith.constant 0 : i32
    %c0_i32_1 = arith.constant 0 : i32
    return %c0_i32, %c0_i32_0 : i32, i32
  }
  func.func @transform_2(%arg0: i32) -> (i32, i32) {
    %c0_i32 = arith.constant 0 : i32
    %c0_i32_0 = arith.constant 0 : i32
    %c0_i32_1 = arith.constant 0 : i32
    return %c0_i32, %c0_i32_0 : i32, i32
  }
  func.func @transform_3(%arg0: i32) -> (i32, i32) {
    %c0_i32 = arith.constant 0 : i32
    %c0_i32_0 = arith.constant 0 : i32
    %c0_i32_1 = arith.constant 0 : i32
    return %c0_i32, %c0_i32_0 : i32, i32
  }
  func.func @transform_4(%arg0: i32) -> (i32, i32) {
    %c0_i32 = arith.constant 0 : i32
    %c0_i32_0 = arith.constant 0 : i32
    %c0_i32_1 = arith.constant 0 : i32
    return %c0_i32, %c0_i32_0 : i32, i32
  }
  func.func @transform_5(%arg0: i32) -> (i32, i32) {
    %c0_i32 = arith.constant 0 : i32
    %c0_i32_0 = arith.constant 0 : i32
    %c0_i32_1 = arith.constant 0 : i32
    return %c0_i32, %c0_i32_0 : i32, i32
  }
  func.func @transform_6(%arg0: i32) -> (i32, i32) {
    %c0_i32 = arith.constant 0 : i32
    %c0_i32_0 = arith.constant 0 : i32
    %c0_i32_1 = arith.constant 0 : i32
    return %c0_i32, %c0_i32_0 : i32, i32
  }
  func.func @transform_7(%arg0: i32) -> (i32, i32) {
    %c0_i32 = arith.constant 0 : i32
    %c0_i32_0 = arith.constant 0 : i32
    return %arg0, %c0_i32 : i32, i32
  }
}

module attributes {stable_mosaic.version = 11 : i64} {
  func.func @head_kernel(%arg0: i32, %arg1: memref<2x32xf32, #tpu.memory_space<vmem>>, %arg2: memref<1x32xf32, #tpu.memory_space<vmem>>, %arg3: memref<1x32xf32, #tpu.memory_space<vmem>>, %arg4: memref<32x128xbf16, #tpu.memory_space<vmem>>, %arg5: memref<1x128xf32, #tpu.memory_space<vmem>>, %arg6: memref<2x128xf32, #tpu.memory_space<vmem>>) attributes {dimension_semantics = [#tpu.dimension_semantics<parallel>], iteration_bounds = array<i64: 1>, scalar_prefetch = 0 : i64, scratch_operands = 0 : i64, tpu.core_type = #tpu.core_type<tc>, window_params = [{transform_indices = @transform_0, window_bounds = array<i64: 2, 32>}, {pipeline_mode = #tpu.pipeline_mode<synchronous>, transform_indices = @transform_1, window_bounds = array<i64: 1, 32>}, {pipeline_mode = #tpu.pipeline_mode<synchronous>, transform_indices = @transform_2, window_bounds = array<i64: 1, 32>}, {pipeline_mode = #tpu.pipeline_mode<synchronous>, transform_indices = @transform_3, window_bounds = array<i64: 32, 128>}, {pipeline_mode = #tpu.pipeline_mode<synchronous>, transform_indices = @transform_4, window_bounds = array<i64: 1, 128>}, {transform_indices = @transform_5, window_bounds = array<i64: 2, 128>}]} {
    %c0 = arith.constant 0 : index
    %c0_0 = arith.constant 0 : index
    %0 = vector.load %arg1[%c0, %c0_0] : memref<2x32xf32, #tpu.memory_space<vmem>>, vector<2x32xf32>
    %c0_1 = arith.constant 0 : index
    %c0_2 = arith.constant 0 : index
    %1 = vector.load %arg2[%c0_1, %c0_2] : memref<1x32xf32, #tpu.memory_space<vmem>>, vector<1x32xf32>
    %c0_3 = arith.constant 0 : index
    %c0_4 = arith.constant 0 : index
    %2 = vector.load %arg3[%c0_3, %c0_4] : memref<1x32xf32, #tpu.memory_space<vmem>>, vector<1x32xf32>
    %cst = arith.constant dense<0.000000e+00> : vector<2xf32>
    %3 = vector.multi_reduction <add>, %0, %cst [1] : vector<2x32xf32> to vector<2xf32>
    %4 = vector.shape_cast %3 : vector<2xf32> to vector<2x1xf32>
    %cst_5 = arith.constant 3.200000e+01 : f32
    %5 = vector.broadcast %cst_5 : f32 to vector<2x1xf32>
    %6 = arith.divf %4, %5 : vector<2x1xf32>
    %7 = vector.broadcast %6 : vector<2x1xf32> to vector<2x32xf32>
    %8 = arith.subf %0, %7 : vector<2x32xf32>
    %9 = arith.mulf %8, %8 : vector<2x32xf32>
    %cst_6 = arith.constant dense<0.000000e+00> : vector<2xf32>
    %10 = vector.multi_reduction <add>, %9, %cst_6 [1] : vector<2x32xf32> to vector<2xf32>
    %11 = vector.shape_cast %10 : vector<2xf32> to vector<2x1xf32>
    %cst_7 = arith.constant 3.200000e+01 : f32
    %12 = vector.broadcast %cst_7 : f32 to vector<2x1xf32>
    %13 = arith.divf %11, %12 : vector<2x1xf32>
    %cst_8 = arith.constant 9.99999974E-6 : f32
    %14 = vector.broadcast %cst_8 : f32 to vector<2x1xf32>
    %15 = arith.addf %13, %14 : vector<2x1xf32>
    %16 = math.rsqrt %15 : vector<2x1xf32>
    %17 = vector.broadcast %16 : vector<2x1xf32> to vector<2x32xf32>
    %18 = arith.mulf %8, %17 : vector<2x32xf32>
    %19 = vector.broadcast %1 : vector<1x32xf32> to vector<2x32xf32>
    %20 = arith.mulf %18, %19 : vector<2x32xf32>
    %21 = vector.broadcast %2 : vector<1x32xf32> to vector<2x32xf32>
    %22 = arith.addf %20, %21 : vector<2x32xf32>
    %23 = arith.truncf %22 : vector<2x32xf32> to vector<2x32xbf16>
    %c0_9 = arith.constant 0 : index
    %c0_10 = arith.constant 0 : index
    %24 = vector.load %arg4[%c0_9, %c0_10] : memref<32x128xbf16, #tpu.memory_space<vmem>>, vector<32x128xbf16>
    %cst_11 = arith.constant dense<0.000000e+00> : vector<2x128xf32>
    %25 = tpu.matmul %23, %24, %cst_11 {dimension_numbers = #tpu.dot_dimension_numbers<[1], [0], [0], [1], [0, 0, 1, 1], [], []>} : vector<2x32xbf16>, vector<32x128xbf16>, vector<2x128xf32> -> vector<2x128xf32>
    %c0_12 = arith.constant 0 : index
    %c0_13 = arith.constant 0 : index
    %26 = vector.load %arg5[%c0_12, %c0_13] : memref<1x128xf32, #tpu.memory_space<vmem>>, vector<1x128xf32>
    %27 = vector.broadcast %26 : vector<1x128xf32> to vector<2x128xf32>
    %28 = arith.addf %25, %27 : vector<2x128xf32>
    %c0_14 = arith.constant 0 : index
    %c0_15 = arith.constant 0 : index
    %29 = vector.load %arg6[%c0_14, %c0_15] : memref<2x128xf32, #tpu.memory_space<vmem>>, vector<2x128xf32>
    tpu.vector_store %arg6[%c0_14, %c0_15], %28 {strides = array<i32>} : memref<2x128xf32, #tpu.memory_space<vmem>>, vector<2x128xf32>,
    return
  }
  func.func @transform_0(%arg0: i32) -> (i32, i32) {
    %c0_i32 = arith.constant 0 : i32
    %c0_i32_0 = arith.constant 0 : i32
    return %arg0, %c0_i32 : i32, i32
  }
  func.func @transform_1(%arg0: i32) -> (i32, i32) {
    %c0_i32 = arith.constant 0 : i32
    %c0_i32_0 = arith.constant 0 : i32
    %c0_i32_1 = arith.constant 0 : i32
    return %c0_i32, %c0_i32_0 : i32, i32
  }
  func.func @transform_2(%arg0: i32) -> (i32, i32) {
    %c0_i32 = arith.constant 0 : i32
    %c0_i32_0 = arith.constant 0 : i32
    %c0_i32_1 = arith.constant 0 : i32
    return %c0_i32, %c0_i32_0 : i32, i32
  }
  func.func @transform_3(%arg0: i32) -> (i32, i32) {
    %c0_i32 = arith.constant 0 : i32
    %c0_i32_0 = arith.constant 0 : i32
    %c0_i32_1 = arith.constant 0 : i32
    return %c0_i32, %c0_i32_0 : i32, i32
  }
  func.func @transform_4(%arg0: i32) -> (i32, i32) {
    %c0_i32 = arith.constant 0 : i32
    %c0_i32_0 = arith.constant 0 : i32
    %c0_i32_1 = arith.constant 0 : i32
    return %c0_i32, %c0_i32_0 : i32, i32
  }
  func.func @transform_5(%arg0: i32) -> (i32, i32) {
    %c0_i32 = arith.constant 0 : i32
    %c0_i32_0 = arith.constant 0 : i32
    return %arg0, %c0_i32 : i32, i32
  }
}

</mosaic_0001>

<llo_original>
// kernel: vit_forward.4
$region0: #{vit_forward.4}
  #allocation0 [shape = 'u32[]', space=smem, size = 0x4, offset = 0x4, fixed_abs, tag = 'smem constant byte address 0x4 - core index']
  #allocation1 [shape = 'u32[144,128]{1,0:T(1,128)}', space=vmem, size = 0x12000, scoped, tag = 'internal scratch']
  %s0 = inlined_call_operand.vmem [shape: f32[2,4,256], index: 0, kind: input, shape index: {}]
  %s1 = inlined_call_operand.vmem [shape: bf16[256,32], index: 1, kind: input, shape index: {}]
  %s2 = inlined_call_operand.vmem [shape: f32[1,32], index: 2, kind: input, shape index: {}]
  %s3 = inlined_call_operand.vmem [shape: f32[1,32], index: 3, kind: input, shape index: {}]
  %s4 = inlined_call_operand.vmem [shape: f32[1,32], index: 4, kind: input, shape index: {}]
  %s5 = inlined_call_operand.vmem [shape: f32[1,32], index: 5, kind: input, shape index: {}]
  %s6 = inlined_call_operand.vmem [shape: f32[4,32], index: 6, kind: input, shape index: {}]
  %s7 = inlined_call_operand.vmem [shape: f32[16,32], index: 7, kind: output, shape index: {}]
  %s8 = sld [smem:[#allocation0]]
  $region61: #{vit_forward.4} parent=0
    _
  %s10 = ssub.s32 1, %s8
  %s11 = scalar_select 0, %s10, %s8
  loop: start=0, step=1, limit=4
  $region2: #{vit_forward.4} parent=0 // loop_pre_header
    _
  $region3: #{vit_forward.4} parent=0 // loop_header
    %s13 = sphi 0, %s17
    %p14 = scmp.ge.s32.totalorder %s13, 4
    %s23 = sphi 0, %s25
    %s26 = sphi 0, %s23
    %s27 = sphi 0, %s26
    %s43 = sphi 0, %s27
    %s47 = sphi 0, %s47
    %s49 = sphi 0, %s47
    %s50 = sphi 0, %s49
    %s64 = sphi 0, %s50
    %s68 = sphi 0, %s68
    %s70 = sphi 0, %s68
    %s71 = sphi 0, %s70
    %s85 = sphi 0, %s71
    %s89 = sphi 0, %s89
    %s91 = sphi 0, %s89
    %s92 = sphi 0, %s91
    %s106 = sphi 0, %s92
    %s110 = sphi 0, %s110
    %s112 = sphi 0, %s110
    %s113 = sphi 0, %s112
    %s127 = sphi 0, %s113
    %s131 = sphi 0, %s131
    %s133 = sphi 0, %s131
    %s134 = sphi 0, %s133
    %s148 = sphi 0, %s134
    %s152 = sphi 0, %s152
    %s154 = sphi 0, %s152
    %s155 = sphi 0, %s154
    %s169 = sphi 0, %s155
    %s175 = sphi 0, %s177
    %s178 = sphi 0, %s175
    %s179 = sphi 0, %s178
    %s195 = sphi 0, %s179
  $region4: #{vit_forward.4} parent=0 // loop_header_branch
    %16 = sbr.rel (%p14) target = $region8
  $region5: #{vit_forward.4} parent=0 // loop_body
    %s18 = ssub.s32 %s13, 1
    %s19 = ssub.s32 %s13, 2
    %s20 = sadd.s32 %s13, 1
    %s21 = ssub.s32 %s13, %s20
    %p22 = scmp.eq.s32.totalorder %s21, 0
    %s24 = sadd.s32 %s23, 1
    %s25 = scalar_select %p22, %s23, %s24
    %p28 = pneg %p22
    %p29 = scmp.eq.s32.totalorder %s13, 1
    %p30 = por %p28, %p29
    %p31 = scmp.ne.s32.totalorder %s23, %s26
    %p32 = scmp.eq.s32.totalorder %s13, 0
    %p33 = por %p31, %p32
    %p34 = scmp.ne.s32.totalorder %s23, %s26
    %p35 = scmp.eq.s32.totalorder %s18, 1
    %p36 = por %p34, %p35
    %p37 = scmp.ne.s32.totalorder %s26, %s27
    %p38 = scmp.eq.s32.totalorder %s18, 0
    %p39 = por %p37, %p38
    %p40 = scmp.ne.s32.totalorder %s26, %s27
    %p41 = scmp.eq.s32.totalorder %s19, 1
    %p42 = por %p40, %p41
    %p44 = scmp.ne.s32.totalorder %s27, %s43
    %p45 = scmp.eq.s32.totalorder %s19, 0
    %p46 = por %p44, %p45
    %s48 = sadd.s32 %s47, 1
    %p51 = scmp.eq.s32.totalorder %s13, 1
    %p52 = scmp.ne.s32.totalorder %s47, %s49
    %p53 = scmp.eq.s32.totalorder %s13, 0
    %p54 = por %p52, %p53
    %p55 = scmp.ne.s32.totalorder %s47, %s49
    %p56 = scmp.eq.s32.totalorder %s18, 1
    %p57 = por %p55, %p56
    %p58 = scmp.ne.s32.totalorder %s49, %s50
    %p59 = scmp.eq.s32.totalorder %s18, 0
    %p60 = por %p58, %p59
    %p61 = scmp.ne.s32.totalorder %s49, %s50
    %p62 = scmp.eq.s32.totalorder %s19, 1
    %p63 = por %p61, %p62
    %p65 = scmp.ne.s32.totalorder %s50, %s64
    %p66 = scmp.eq.s32.totalorder %s19, 0
    %p67 = por %p65, %p66
    %s69 = sadd.s32 %s68, 1
    %p72 = scmp.eq.s32.totalorder %s13, 1
    %p73 = scmp.ne.s32.totalorder %s68, %s70
    %p74 = scmp.eq.s32.totalorder %s13, 0
    %p75 = por %p73, %p74
    %p76 = scmp.ne.s32.totalorder %s68, %s70
    %p77 = scmp.eq.s32.totalorder %s18, 1
    %p78 = por %p76, %p77
    %p79 = scmp.ne.s32.totalorder %s70, %s71
    %p80 = scmp.eq.s32.totalorder %s18, 0
    %p81 = por %p79, %p80
    %p82 = scmp.ne.s32.totalorder %s70, %s71
    %p83 = scmp.eq.s32.totalorder %s19, 1
    %p84 = por %p82, %p83
    %p86 = scmp.ne.s32.totalorder %s71, %s85
    %p87 = scmp.eq.s32.totalorder %s19, 0
    %p88 = por %p86, %p87
    %s90 = sadd.s32 %s89, 1
    %p93 = scmp.eq.s32.totalorder %s13, 1
    %p94 = scmp.ne.s32.totalorder %s89, %s91
    %p95 = scmp.eq.s32.totalorder %s13, 0
    %p96 = por %p94, %p95
    %p97 = scmp.ne.s32.totalorder %s89, %s91
    %p98 = scmp.eq.s32.totalorder %s18, 1
    %p99 = por %p97, %p98
    %p100 = scmp.ne.s32.totalorder %s91, %s92
    %p101 = scmp.eq.s32.totalorder %s18, 0
    %p102 = por %p100, %p101
    %p103 = scmp.ne.s32.totalorder %s91, %s92
    %p104 = scmp.eq.s32.totalorder %s19, 1
    %p105 = por %p103, %p104
    %p107 = scmp.ne.s32.totalorder %s92, %s106
    %p108 = scmp.eq.s32.totalorder %s19, 0
    %p109 = por %p107, %p108
    %s111 = sadd.s32 %s110, 1
    %p114 = scmp.eq.s32.totalorder %s13, 1
    %p115 = scmp.ne.s32.totalorder %s110, %s112
    %p116 = scmp.eq.s32.totalorder %s13, 0
    %p117 = por %p115, %p116
    %p118 = scmp.ne.s32.totalorder %s110, %s112
    %p119 = scmp.eq.s32.totalorder %s18, 1
    %p120 = por %p118, %p119
    %p121 = scmp.ne.s32.totalorder %s112, %s113
    %p122 = scmp.eq.s32.totalorder %s18, 0
    %p123 = por %p121, %p122
    %p124 = scmp.ne.s32.totalorder %s112, %s113
    %p125 = scmp.eq.s32.totalorder %s19, 1
    %p126 = por %p124, %p125
    %p128 = scmp.ne.s32.totalorder %s113, %s127
    %p129 = scmp.eq.s32.totalorder %s19, 0
    %p130 = por %p128, %p129
    %s132 = sadd.s32 %s131, 1
    %p135 = scmp.eq.s32.totalorder %s13, 1
    %p136 = scmp.ne.s32.totalorder %s131, %s133
    %p137 = scmp.eq.s32.totalorder %s13, 0
    %p138 = por %p136, %p137
    %p139 = scmp.ne.s32.totalorder %s131, %s133
    %p140 = scmp.eq.s32.totalorder %s18, 1
    %p141 = por %p139, %p140
    %p142 = scmp.ne.s32.totalorder %s133, %s134
    %p143 = scmp.eq.s32.totalorder %s18, 0
    %p144 = por %p142, %p143
    %p145 = scmp.ne.s32.totalorder %s133, %s134
    %p146 = scmp.eq.s32.totalorder %s19, 1
    %p147 = por %p145, %p146
    %p149 = scmp.ne.s32.totalorder %s134, %s148
    %p150 = scmp.eq.s32.totalorder %s19, 0
    %p151 = por %p149, %p150
    %s153 = sadd.s32 %s152, 1
    %p156 = scmp.eq.s32.totalorder %s13, 1
    %p157 = scmp.ne.s32.totalorder %s152, %s154
    %p158 = scmp.eq.s32.totalorder %s13, 0
    %p159 = por %p157, %p158
    %p160 = scmp.ne.s32.totalorder %s152, %s154
    %p161 = scmp.eq.s32.totalorder %s18, 1
    %p162 = por %p160, %p161
    %p163 = scmp.ne.s32.totalorder %s154, %s155
    %p164 = scmp.eq.s32.totalorder %s18, 0
    %p165 = por %p163, %p164
    %p166 = scmp.ne.s32.totalorder %s154, %s155
    %p167 = scmp.eq.s32.totalorder %s19, 1
    %p168 = por %p166, %p167
    %p170 = scmp.ne.s32.totalorder %s155, %s169
    %p171 = scmp.eq.s32.totalorder %s19, 0
    %p172 = por %p170, %p171
    %s173 = ssub.s32 %s13, %s20
    %p174 = scmp.eq.s32.totalorder %s173, 0
    %s176 = sadd.s32 %s175, 1
    %s177 = scalar_select %p174, %s175, %s176
    %p180 = pneg %p174
    %p181 = scmp.eq.s32.totalorder %s13, 1
    %p182 = por %p180, %p181
    %p183 = scmp.ne.s32.totalorder %s175, %s178
    %p184 = scmp.eq.s32.totalorder %s13, 0
    %p185 = por %p183, %p184
    %p186 = scmp.ne.s32.totalorder %s175, %s178
    %p187 = scmp.eq.s32.totalorder %s18, 1
    %p188 = por %p186, %p187
    %p189 = scmp.ne.s32.totalorder %s178, %s179
    %p190 = scmp.eq.s32.totalorder %s18, 0
    %p191 = por %p189, %p190
    %p192 = scmp.ne.s32.totalorder %s178, %s179
    %p193 = scmp.eq.s32.totalorder %s19, 1
    %p194 = por %p192, %p193
    %p196 = scmp.ne.s32.totalorder %s179, %s195
    %p197 = scmp.eq.s32.totalorder %s19, 0
    %p198 = por %p196, %p197
    %p199 = scmp.le.s32.totalorder 1, %s13
    %p200 = scmp.lt.s32.totalorder %s13, 3
    %p201 = pnand %p199, %p200
    %p202 = pneg %p201
    // Predicated region
    $region9: #{vit_forward.4} parent=5 // pred_check
      _
    $region10: #{vit_forward.4} parent=5 // pred_check_branch
      %204 = sbr.rel (%p201) target = $region12
    $region11: #{vit_forward.4} parent=5 // pred_region
      %s205 = ssub.s32 %s13, 1
      // Predicated region
      $region13: #{vit_forward.4} parent=11 // pred_check
        %p206 = pneg %p60
      $region14: #{vit_forward.4} parent=11 // pred_check_branch
        %208 = sbr.rel (%p206) target = $region16
      $region15: #{vit_forward.4} parent=11 // pred_region
        _
      $region16: #{vit_forward.4} parent=11 // pred_fallthru
        _
      // Predicated region
      $region17: #{vit_forward.4} parent=11 // pred_check
        %p209 = pneg %p81
      $region18: #{vit_forward.4} parent=11 // pred_check_branch
        %211 = sbr.rel (%p209) target = $region20
      $region19: #{vit_forward.4} parent=11 // pred_region
        _
      $region20: #{vit_forward.4} parent=11 // pred_fallthru
        _
      // Predicated region
      $region21: #{vit_forward.4} parent=11 // pred_check
        %p212 = pneg %p102
      $region22: #{vit_forward.4} parent=11 // pred_check_branch
        %214 = sbr.rel (%p212) target = $region24
      $region23: #{vit_forward.4} parent=11 // pred_region
        _
      $region24: #{vit_forward.4} parent=11 // pred_fallthru
        _
      // Predicated region
      $region25: #{vit_forward.4} parent=11 // pred_check
        %p215 = pneg %p123
      $region26: #{vit_forward.4} parent=11 // pred_check_branch
        %217 = sbr.rel (%p215) target = $region28
      $region27: #{vit_forward.4} parent=11 // pred_region
        _
      $region28: #{vit_forward.4} parent=11 // pred_fallthru
        _
      // Predicated region
      $region29: #{vit_forward.4} parent=11 // pred_check
        %p218 = pneg %p144
      $region30: #{vit_forward.4} parent=11 // pred_check_branch
        %220 = sbr.rel (%p218) target = $region32
      $region31: #{vit_forward.4} parent=11 // pred_region
        _
      $region32: #{vit_forward.4} parent=11 // pred_fallthru
        _
      // Predicated region
      $region33: #{vit_forward.4} parent=11 // pred_check
        %p221 = pneg %p165
      $region34: #{vit_forward.4} parent=11 // pred_check_branch
        %223 = sbr.rel (%p221) target = $region36
      $region35: #{vit_forward.4} parent=11 // pred_region
        _
      $region36: #{vit_forward.4} parent=11 // pred_fallthru
        _
    $region12: #{vit_forward.4} parent=5 // pred_fallthru
      _
    %p224 = scmp.lt.s32.totalorder %s13, 2
    // Predicated region
    $region37: #{vit_forward.4} parent=5 // pred_check
      %p225 = pneg %p224
    $region38: #{vit_forward.4} parent=5 // pred_check_branch
      %227 = sbr.rel (%p225) target = $region40
    $region39: #{vit_forward.4} parent=5 // pred_region
      // Predicated region
      $region41: #{vit_forward.4} parent=39 // pred_check
        %p228 = pneg %p33
      $region42: #{vit_forward.4} parent=39 // pred_check_branch
        %230 = sbr.rel (%p228) target = $region44
      $region43: #{vit_forward.4} parent=39 // pred_region
        %p231 = scmp.lt.s32.totalorder %s13, 1
        %s232 = scalar_select %p231, %s13, 1
        %s233 = smul.addr %s232, 2
        %s234 = smul.addr %s233, 4
        %s235 = scalar_lea.vmem %s0, %s234
      $region44: #{vit_forward.4} parent=39 // pred_fallthru
        _
    $region40: #{vit_forward.4} parent=5 // pred_fallthru
      _
    %p236 = scmp.le.s32.totalorder 1, %s13
    %p237 = scmp.lt.s32.totalorder %s13, 3
    %p238 = pnand %p236, %p237
    %p239 = pneg %p238
    // Predicated region
    $region45: #{vit_forward.4} parent=5 // pred_check
      _
    $region46: #{vit_forward.4} parent=5 // pred_check_branch
      %241 = sbr.rel (%p238) target = $region48
    $region47: #{vit_forward.4} parent=5 // pred_region
      %s242 = ssub.s32 %s13, 1
      %p243 = scmp.lt.s32.totalorder %s18, 1
      %s244 = scalar_select %p243, %s18, 1
      %s245 = smul.addr %s244, 2
      %s246 = smul.addr %s245, 4
      %s247 = scalar_lea.vmem %s0, %s246
      %p248 = pneg %p39
      %p249 = pneg %p36
      %p250 = pneg %p60
      %p251 = pneg %p57
      %p252 = pneg %p81
      %p253 = pneg %p78
      %p254 = pneg %p102
      %p255 = pneg %p99
      %p256 = pneg %p123
      %p257 = pneg %p120
      %p258 = pneg %p144
      %p259 = pneg %p141
      %p260 = pneg %p165
      %p261 = pneg %p162
      %p262 = pneg %p191
      %p263 = pneg %p188
      %p264 = scmp.lt.s32.totalorder %s18, 1
      %s265 = scalar_select %p264, %s18, 1
      %s266 = smul.addr %s265, 8
      %s267 = scalar_lea.vmem %s7, %s266
      %p268 = scmp.lt.s32.totalorder %s18, 1
      %s269 = scalar_select %p268, %s18, 1
      %s270 = smul.addr %s269, 2
      %s271 = smul.addr %s270, 4
      %s272 = scalar_lea.vmem %s0, %s271
      %p273 = scmp.lt.s32.totalorder %s18, 1
      %s274 = scalar_select %p273, %s18, 1
      %s275 = smul.addr %s274, 8
      %s276 = scalar_lea.vmem %s7, %s275
      %v278 = vld [vmem:[%s272] sm:$0xff]
      %v280 = vcombine.high %v278, %v278
      %v282 = vpack.c.bf16 %v278, %v278
      %v283 = vpack.c.bf16 %v280, %v280
      %v284 = vld [vmem:[%s1] sm:$0xf]
      %v285 = vld [vmem:[%s1 + $0x4] sm:$0xf]
      %v286 = vld [vmem:[%s1 + $0x8] sm:$0xf]
      %v287 = vld [vmem:[%s1 + $0xc] sm:$0xf]
      %v288 = vld [vmem:[%s1 + $0x10] sm:$0xf]
      %v289 = vld [vmem:[%s1 + $0x14] sm:$0xf]
      %v290 = vld [vmem:[%s1 + $0x18] sm:$0xf]
      %v291 = vld [vmem:[%s1 + $0x1c] sm:$0xf]
      %v292 = vld [vmem:[%s1 + $0x20] sm:$0xf]
      %v293 = vld [vmem:[%s1 + $0x24] sm:$0xf]
      %v294 = vld [vmem:[%s1 + $0x28] sm:$0xf]
      %v295 = vld [vmem:[%s1 + $0x2c] sm:$0xf]
      %v296 = vld [vmem:[%s1 + $0x30] sm:$0xf]
      %v297 = vld [vmem:[%s1 + $0x34] sm:$0xf]
      %v298 = vld [vmem:[%s1 + $0x38] sm:$0xf]
      %v299 = vld [vmem:[%s1 + $0x3c] sm:$0xf]
      %v300 = vld [vmem:[%s1 + $0x40] sm:$0xf]
      %v301 = vld [vmem:[%s1 + $0x44] sm:$0xf]
      %v302 = vld [vmem:[%s1 + $0x48] sm:$0xf]
      %v303 = vld [vmem:[%s1 + $0x4c] sm:$0xf]
      %v304 = vld [vmem:[%s1 + $0x50] sm:$0xf]
      %v305 = vld [vmem:[%s1 + $0x54] sm:$0xf]
      %v306 = vld [vmem:[%s1 + $0x58] sm:$0xf]
      %v307 = vld [vmem:[%s1 + $0x5c] sm:$0xf]
      %v308 = vld [vmem:[%s1 + $0x60] sm:$0xf]
      %v309 = vld [vmem:[%s1 + $0x64] sm:$0xf]
      %v310 = vld [vmem:[%s1 + $0x68] sm:$0xf]
      %v311 = vld [vmem:[%s1 + $0x6c] sm:$0xf]
      %v312 = vld [vmem:[%s1 + $0x70] sm:$0xf]
      %v313 = vld [vmem:[%s1 + $0x74] sm:$0xf]
      %v314 = vld [vmem:[%s1 + $0x78] sm:$0xf]
      %v315 = vld [vmem:[%s1 + $0x7c] sm:$0xf]
      %v316 = vld [vmem:[%s2] sm:$0x1]
      %v318 = vlaneseq
      %v319 = vshrl.u32 %v318, 7
      %v320 = vsub.s32 0, %v319
      %v321 = vrot.slane %v316, %v320
      %v355 = vunpack.c.l.b16 %v284
      %v356 = vunpack.c.l.b16 %v285
      %v357 = vunpack.c.l.b16 %v286
      %v358 = vunpack.c.l.b16 %v287
      %v359 = vunpack.c.l.b16 %v288
      %v360 = vunpack.c.l.b16 %v289
      %v361 = vunpack.c.l.b16 %v290
      %v362 = vunpack.c.l.b16 %v291
      %v363 = vunpack.c.l.b16 %v292
      %v364 = vunpack.c.l.b16 %v293
      %v365 = vunpack.c.l.b16 %v294
      %v366 = vunpack.c.l.b16 %v295
      %v367 = vunpack.c.l.b16 %v296
      %v368 = vunpack.c.l.b16 %v297
      %v369 = vunpack.c.l.b16 %v298
      %v370 = vunpack.c.l.b16 %v299
      %v371 = vunpack.c.l.b16 %v300
      %v372 = vunpack.c.l.b16 %v301
      %v373 = vunpack.c.l.b16 %v302
      %v374 = vunpack.c.l.b16 %v303
      %v375 = vunpack.c.l.b16 %v304
      %v376 = vunpack.c.l.b16 %v305
      %v377 = vunpack.c.l.b16 %v306
      %v378 = vunpack.c.l.b16 %v307
      %v379 = vunpack.c.l.b16 %v308
      %v380 = vunpack.c.l.b16 %v309
      %v381 = vunpack.c.l.b16 %v310
      %v382 = vunpack.c.l.b16 %v311
      %v383 = vunpack.c.l.b16 %v312
      %v384 = vunpack.c.l.b16 %v313
      %v385 = vunpack.c.l.b16 %v314
      %v386 = vunpack.c.l.b16 %v315
      %v387 = vpack.c.b16 %v356, %v355
      %v388 = vpack.c.b16 %v358, %v357
      %v389 = vpack.c.b16 %v360, %v359
      %v390 = vpack.c.b16 %v362, %v361
      %v391 = vpack.c.b16 %v364, %v363
      %v392 = vpack.c.b16 %v366, %v365
      %v393 = vpack.c.b16 %v368, %v367
      %v394 = vpack.c.b16 %v370, %v369
      %v395 = vpack.c.b16 %v372, %v371
      %v396 = vpack.c.b16 %v374, %v373
      %v397 = vpack.c.b16 %v376, %v375
      %v398 = vpack.c.b16 %v378, %v377
      %v399 = vpack.c.b16 %v380, %v379
      %v400 = vpack.c.b16 %v382, %v381
      %v401 = vpack.c.b16 %v384, %v383
      %v402 = vpack.c.b16 %v386, %v385
      %419 = vmatprep.subr.bf16.mxu0 0
      %420 = vmatpush1.bf16.msra.mxu0 %v387
      %421 = vmatprep.subr.bf16.mxu0 0
      %422 = vmatpush1.bf16.msra.mxu0 %v388
      %423 = vmatprep.subr.bf16.mxu0 0
      %424 = vmatpush1.bf16.msra.mxu0 %v389
      %425 = vmatprep.subr.bf16.mxu0 0
      %426 = vmatpush1.bf16.msra.mxu0 %v390
      %427 = vmatprep.subr.bf16.mxu0 0
      %428 = vmatpush1.bf16.msra.mxu0 %v391
      %429 = vmatprep.subr.bf16.mxu0 0
      %430 = vmatpush1.bf16.msra.mxu0 %v392
      %431 = vmatprep.subr.bf16.mxu0 0
      %432 = vmatpush1.bf16.msra.mxu0 %v393
      %433 = vmatprep.subr.bf16.mxu0 0
      %434 = vmatpush1.bf16.msra.mxu0 %v394
      %435 = vmatprep.subr.bf16.mxu0 0
      %436 = vmatpush1.bf16.msra.mxu0 %v395
      %437 = vmatprep.subr.bf16.mxu0 0
      %438 = vmatpush1.bf16.msra.mxu0 %v396
      %439 = vmatprep.subr.bf16.mxu0 0
      %440 = vmatpush1.bf16.msra.mxu0 %v397
      %441 = vmatprep.subr.bf16.mxu0 0
      %442 = vmatpush1.bf16.msra.mxu0 %v398
      %443 = vmatprep.subr.bf16.mxu0 0
      %444 = vmatpush1.bf16.msra.mxu0 %v399
      %445 = vmatprep.subr.bf16.mxu0 0
      %446 = vmatpush1.bf16.msra.mxu0 %v400
      %447 = vmatprep.subr.bf16.mxu0 0
      %448 = vmatpush1.bf16.msra.mxu0 %v401
      %449 = vmatprep.subr.bf16.mxu0 0
      %450 = vmatpush1.bf16.msra.mxu0 %v402
      %451 = vmatprep.mubr.bf16.mxu0 %v283
      %452 = vmatmul.mubr.bf16.gmra.mrb[0].mxu0 %v282
      %v453 = vpop.f32.mrb[0].mxu0
      %v454 = vadd.f32 %v321, %v453
      %v455 = vpop.f32.mrb[0].mxu0
      %v456 = vpop.f32.mrb[0].mxu0
      %v457 = vpop.f32.mrb[0].mxu0
      %458 = vdwg.mxu0
      %v459 = vld [vmem:[%s3] sm:$0x1]
      %v460 = vld [vmem:[%s4] sm:$0x1]
      %vm461 = vcmask 257024
      %v462 = vsel %vm461, %v454, 0.0
      %463 = vadd.xlane.f32.xlu0 %v462
      %v464 = vpop.xlane.xlu0 %463
      %v465 = vrcp.pop 32.0
      %v466 = vmul.f32 %v464, %v465
      %v467 = vsub.f32 %v454, %v466
      %v468 = vmul.f32 %v467, %v467
      %v469 = vsel %vm461, %v468, 0.0
      %470 = vadd.xlane.f32.xlu0 %v469
      %v471 = vpop.xlane.xlu0 %470
      %v472 = vmul.f32 %v471, %v465
      %v473 = vadd.f32 %v472, 1e-05
      %v474 = vrsqrt.pop %v473
      %v475 = vmul.f32 %v467, %v474
      %v477 = vlaneseq
      %v478 = vshrl.u32 %v477, 7
      %v479 = vsub.s32 0, %v478
      %v480 = vrot.slane %v459, %v479
      %v482 = vmul.f32 %v475, %v480
      %v484 = vlaneseq
      %v485 = vshrl.u32 %v484, 7
      %v486 = vsub.s32 0, %v485
      %v487 = vrot.slane %v460, %v486
      %v489 = vadd.f32 %v482, %v487
      %v490 = vld [vmem:[%s6] sm:$0xf]
      %v491 = vadd.f32 %v489, %v490
      %v492 = vld [vmem:[%s5] sm:$0x1]
      %vm493 = vcmask 253952
      %494 = vst.msk [vmem:[%s276] sm:$0x1] %vm493, %v492
      %495 = vst.msk [vmem:[%s276 + $0x1] sm:$0xf] %vm461, %v491
      %vm496 = vcmask 256000
      %497 = vst.msk [vmem:[%s276 + $0x5] sm:$0x7] %vm496, 0.0
      %p498 = scmp.lt.s32.totalorder %s18, 1
      %s499 = scalar_select %p498, %s18, 1
      %s500 = smul.addr %s499, 8
      %s501 = scalar_lea.vmem %s7, %s500
      // Predicated region
      $region49: #{vit_forward.4} parent=47 // pred_check
        %p502 = pneg %p188
      $region50: #{vit_forward.4} parent=47 // pred_check_branch
        %504 = sbr.rel (%p502) target = $region52
      $region51: #{vit_forward.4} parent=47 // pred_region
        _
      $region52: #{vit_forward.4} parent=47 // pred_fallthru
        _
    $region48: #{vit_forward.4} parent=5 // pred_fallthru
      _
    %p505 = scmp.le.s32.totalorder 2, %s13
    // Predicated region
    $region53: #{vit_forward.4} parent=5 // pred_check
      %p506 = pneg %p505
    $region54: #{vit_forward.4} parent=5 // pred_check_branch
      %508 = sbr.rel (%p506) target = $region56
    $region55: #{vit_forward.4} parent=5 // pred_region
      %s509 = ssub.s32 %s13, 2
      // Predicated region
      $region57: #{vit_forward.4} parent=55 // pred_check
        %p510 = pneg %p194
      $region58: #{vit_forward.4} parent=55 // pred_check_branch
        %512 = sbr.rel (%p510) target = $region60
      $region59: #{vit_forward.4} parent=55 // pred_region
        %p513 = scmp.lt.s32.totalorder %s19, 1
        %s514 = scalar_select %p513, %s19, 1
        %s515 = smul.addr %s514, 8
        %s516 = scalar_lea.vmem %s7, %s515
      $region60: #{vit_forward.4} parent=55 // pred_fallthru
        _
    $region56: #{vit_forward.4} parent=5 // pred_fallthru
      _
  $region6: #{vit_forward.4} parent=0 // loop_footer
    %s17 = sadd.s32 1, %s13
  $region7: #{vit_forward.4} parent=0 // loop_footer_branch
    %12 = sbr.rel target = $region3
  $region8: #{vit_forward.4} parent=0 // loop_exit
    _

// kernel: vit_forward.7
$region0: #{vit_forward.7}
  #allocation0 [shape = 'u32[]', space=smem, size = 0x4, offset = 0x4, fixed_abs, tag = 'smem constant byte address 0x4 - core index']
  #allocation1 [shape = 'u32[144,128]{1,0:T(1,128)}', space=vmem, size = 0x12000, scoped, tag = 'internal scratch']
  %s0 = inlined_call_operand.vmem [shape: f32[2,32], index: 0, kind: input, shape index: {}]
  %s1 = inlined_call_operand.vmem [shape: f32[1,32], index: 1, kind: input, shape index: {}]
  %s2 = inlined_call_operand.vmem [shape: f32[1,32], index: 2, kind: input, shape index: {}]
  %s3 = inlined_call_operand.vmem [shape: bf16[32,128], index: 3, kind: input, shape index: {}]
  %s4 = inlined_call_operand.vmem [shape: f32[1,128], index: 4, kind: input, shape index: {}]
  %s5 = inlined_call_operand.hbm [shape: f32[2,128], index: 5, kind: output, shape index: {}]
  %s6 = sld [smem:[#allocation0]]
  $region30: #{vit_forward.7} parent=0
    _
  %s8 = ssub.s32 1, %s6
  %s9 = scalar_select 0, %s8, %s6
  $region1: #{vit_forward.7} parent=0
    #allocation2 [shape = 'u8[1024]{0}', space=vmem, size = 0x400, scoped, tag = 'output window, operand 0, single buffered']
    #allocation3 [shape = 's32[1]{0}', space=sflag, size = 0x4, scoped, tag = 'scoped memory for vit_forward.7']
    %10 = vsyncpa [#allocation3], 0
    // Predicated region
    $region2: #{vit_forward.7} parent=1 // pred_check
      _
    $region3: #{vit_forward.7} parent=1 // pred_check_branch
      %12 = sbr.rel (0) target = $region5
    $region4: #{vit_forward.7} parent=1 // pred_region
      _
    $region5: #{vit_forward.7} parent=1 // pred_fallthru
      _
    // Predicated region
    $region6: #{vit_forward.7} parent=1 // pred_check
      _
    $region7: #{vit_forward.7} parent=1 // pred_check_branch
      %14 = sbr.rel (0) target = $region9
    $region8: #{vit_forward.7} parent=1 // pred_region
      _
    $region9: #{vit_forward.7} parent=1 // pred_fallthru
      _
    // Predicated region
    $region10: #{vit_forward.7} parent=1 // pred_check
      _
    $region11: #{vit_forward.7} parent=1 // pred_check_branch
      %16 = sbr.rel (0) target = $region13
    $region12: #{vit_forward.7} parent=1 // pred_region
      _
    $region13: #{vit_forward.7} parent=1 // pred_fallthru
      _
    // Predicated region
    $region14: #{vit_forward.7} parent=1 // pred_check
      _
    $region15: #{vit_forward.7} parent=1 // pred_check_branch
      %18 = sbr.rel (0) target = $region17
    $region16: #{vit_forward.7} parent=1 // pred_region
      _
    $region17: #{vit_forward.7} parent=1 // pred_fallthru
      _
    // Predicated region
    $region18: #{vit_forward.7} parent=1 // pred_check
      _
    $region19: #{vit_forward.7} parent=1 // pred_check_branch
      %20 = sbr.rel (0) target = $region21
    $region20: #{vit_forward.7} parent=1 // pred_region
      _
    $region21: #{vit_forward.7} parent=1 // pred_fallthru
      _
    %v22 = vld [vmem:[%s0] sm:$0x3]
    %v23 = vld [vmem:[%s1] sm:$0x1]
    %v24 = vld [vmem:[%s2] sm:$0x1]
    %vm25 = vcmask 254976
    %v26 = vsel %vm25, %v22, 0.0
    %27 = vadd.xlane.f32.xlu0 %v26
    %v28 = vpop.xlane.xlu0 %27
    %v29 = vrcp.pop 32.0
    %v30 = vmul.f32 %v28, %v29
    %v31 = vsub.f32 %v22, %v30
    %v32 = vmul.f32 %v31, %v31
    %v33 = vsel %vm25, %v32, 0.0
    %34 = vadd.xlane.f32.xlu0 %v33
    %v35 = vpop.xlane.xlu0 %34
    %v36 = vmul.f32 %v35, %v29
    %v37 = vadd.f32 %v36, 1e-05
    %v38 = vrsqrt.pop %v37
    %v39 = vmul.f32 %v31, %v38
    %v41 = vlaneseq
    %v42 = vshrl.u32 %v41, 7
    %v43 = vsub.s32 0, %v42
    %v44 = vrot.slane %v23, %v43
    %v46 = vmul.f32 %v39, %v44
    %v48 = vlaneseq
    %v49 = vshrl.u32 %v48, 7
    %v50 = vsub.s32 0, %v49
    %v51 = vrot.slane %v24, %v50
    %v53 = vadd.f32 %v46, %v51
    %v54 = vpack.c.bf16 %v53, %v53
    %v55 = vld [vmem:[%s3] sm:$0xf]
    %v56 = vld [vmem:[%s3 + $0x4] sm:$0xf]
    %v57 = vld [vmem:[%s3 + $0x8] sm:$0xf]
    %v58 = vld [vmem:[%s3 + $0xc] sm:$0xf]
    %v59 = vld [vmem:[%s4] sm:$0x1]
    %v61 = vlaneseq
    %v62 = vshrl.u32 %v61, 7
    %v63 = vsub.s32 0, %v62
    %v64 = vrot.slane %v59, %v63
    %v70 = vunpack.c.l.b16 %v55
    %v71 = vunpack.c.l.b16 %v56
    %v72 = vunpack.c.l.b16 %v57
    %v73 = vunpack.c.l.b16 %v58
    %v74 = vpack.c.b16 %v71, %v70
    %v75 = vpack.c.b16 %v73, %v72
    %vm78 = vcmask 261120
    %v80 = vsel %vm78, %v54, 0
    %82 = vmatprep.subr.bf16.mxu0 0
    %83 = vmatpush1.bf16.msra.mxu0 %v74
    %84 = vmatprep.subr.bf16.mxu0 0
    %85 = vmatpush1.bf16.msra.mxu0 %v75
    %86 = vmatprep.subr.bf16.mxu0 0
    %87 = vmatpush1.bf16.msra.mxu0 0
    %88 = vmatprep.subr.bf16.mxu0 0
    %89 = vmatpush1.bf16.msra.mxu0 0
    %90 = vmatprep.subr.bf16.mxu0 0
    %91 = vmatpush1.bf16.msra.mxu0 0
    %92 = vmatprep.subr.bf16.mxu0 0
    %93 = vmatpush1.bf16.msra.mxu0 0
    %94 = vmatprep.subr.bf16.mxu0 0
    %95 = vmatpush1.bf16.msra.mxu0 0
    %96 = vmatprep.subr.bf16.mxu0 0
    %97 = vmatpush1.bf16.msra.mxu0 0
    %98 = vmatprep.subr.bf16.mxu0 0
    %99 = vmatpush1.bf16.msra.mxu0 0
    %100 = vmatprep.subr.bf16.mxu0 0
    %101 = vmatpush1.bf16.msra.mxu0 0
    %102 = vmatprep.subr.bf16.mxu0 0
    %103 = vmatpush1.bf16.msra.mxu0 0
    %104 = vmatprep.subr.bf16.mxu0 0
    %105 = vmatpush1.bf16.msra.mxu0 0
    %106 = vmatprep.subr.bf16.mxu0 0
    %107 = vmatpush1.bf16.msra.mxu0 0
    %108 = vmatprep.subr.bf16.mxu0 0
    %109 = vmatpush1.bf16.msra.mxu0 0
    %110 = vmatprep.subr.bf16.mxu0 0
    %111 = vmatpush1.bf16.msra.mxu0 0
    %112 = vmatprep.subr.bf16.mxu0 0
    %113 = vmatpush1.bf16.msra.mxu0 0
    %114 = vmatprep.mubr.bf16.mxu0 0
    %115 = vmatmul.mubr.bf16.gmra.mrb[0].mxu0 %v80
    %v116 = vpop.f32.mrb[0].mxu0
    %v117 = vadd.f32 %v64, %v116
    %v118 = vpop.f32.mrb[0].mxu0
    %v119 = vpop.f32.mrb[0].mxu0
    %v120 = vpop.f32.mrb[0].mxu0
    %121 = vdwg.mxu0
    %122 = vst [vmem:[#allocation2] sm:$0x3] %v117
    // Predicated region
    $region22: #{vit_forward.7} parent=1 // pred_check
      _
    $region23: #{vit_forward.7} parent=1 // pred_check_branch
      %124 = sbr.rel (0) target = $region25
    $region24: #{vit_forward.7} parent=1 // pred_region
      %s126 = ssub.s32 32, 32
      %127 = vsyncadd [#allocation3], %s126
      %s129 = sshll.u32 [#allocation2], 4
      %s130 = int_to_ptr.vmem [resolvable:$true] %s129
      %132 = dma.vmem_to_hbm [thread:$0]  %s130, 32, %s5, [#allocation3]
    $region25: #{vit_forward.7} parent=1 // pred_fallthru
      _
    // Predicated region
    $region26: #{vit_forward.7} parent=1 // pred_check
      _
    $region27: #{vit_forward.7} parent=1 // pred_check_branch
      %134 = sbr.rel (0) target = $region29
    $region28: #{vit_forward.7} parent=1 // pred_region
      %135 = dma.done [#allocation3], 32
    $region29: #{vit_forward.7} parent=1 // pred_fallthru
      _
    %136 = vsyncpa [#allocation3], 1

// kernel: vit_forward.5
$region0: #{vit_forward.5}
  #allocation0 [shape = 'u32[]', space=smem, size = 0x4, offset = 0x4, fixed_abs, tag = 'smem constant byte address 0x4 - core index']
  #allocation1 [shape = 'u32[144,128]{1,0:T(1,128)}', space=vmem, size = 0x12000, scoped, tag = 'internal scratch']
  %s0 = inlined_call_operand.vmem [shape: f32[16,32], index: 0, kind: input, shape index: {}]
  %s1 = inlined_call_operand.vmem [shape: f32[1,32], index: 1, kind: input, shape index: {}]
  %s2 = inlined_call_operand.vmem [shape: f32[1,32], index: 2, kind: input, shape index: {}]
  %s3 = inlined_call_operand.vmem [shape: bf16[2,32,48], index: 3, kind: input, shape index: {}]
  %s4 = inlined_call_operand.vmem [shape: f32[2,1,16], index: 4, kind: input, shape index: {}]
  %s5 = inlined_call_operand.vmem [shape: bf16[2,16,32], index: 5, kind: input, shape index: {}]
  %s6 = inlined_call_operand.vmem [shape: f32[1,32], index: 6, kind: input, shape index: {}]
  %s7 = inlined_call_operand.vmem [shape: f32[1,32], index: 7, kind: input, shape index: {}]
  %s8 = inlined_call_operand.vmem [shape: f32[1,32], index: 8, kind: input, shape index: {}]
  %s9 = inlined_call_operand.vmem [shape: bf16[32,64], index: 9, kind: input, shape index: {}]
  %s10 = inlined_call_operand.vmem [shape: f32[1,64], index: 10, kind: input, shape index: {}]
  %s11 = inlined_call_operand.vmem [shape: bf16[64,32], index: 11, kind: input, shape index: {}]
  %s12 = inlined_call_operand.vmem [shape: f32[1,32], index: 12, kind: input, shape index: {}]
  %s13 = inlined_call_operand.vmem [shape: f32[16,32], index: 13, kind: output, shape index: {}]
  %s14 = sld [smem:[#allocation0]]
  $region62: #{vit_forward.5} parent=0
    _
  %s16 = ssub.s32 1, %s14
  %s17 = scalar_select 0, %s16, %s14
  // Predicated region
  $region2: #{vit_forward.5} parent=0 // pred_check
    _
  $region3: #{vit_forward.5} parent=0 // pred_check_branch
    %19 = sbr.rel (0) target = $region5
  $region4: #{vit_forward.5} parent=0 // pred_region
    _
  $region5: #{vit_forward.5} parent=0 // pred_fallthru
    _
  // Predicated region
  $region6: #{vit_forward.5} parent=0 // pred_check
    _
  $region7: #{vit_forward.5} parent=0 // pred_check_branch
    %21 = sbr.rel (0) target = $region9
  $region8: #{vit_forward.5} parent=0 // pred_region
    _
  $region9: #{vit_forward.5} parent=0 // pred_fallthru
    _
  // Predicated region
  $region10: #{vit_forward.5} parent=0 // pred_check
    _
  $region11: #{vit_forward.5} parent=0 // pred_check_branch
    %23 = sbr.rel (0) target = $region13
  $region12: #{vit_forward.5} parent=0 // pred_region
    _
  $region13: #{vit_forward.5} parent=0 // pred_fallthru
    _
  // Predicated region
  $region14: #{vit_forward.5} parent=0 // pred_check
    _
  $region15: #{vit_forward.5} parent=0 // pred_check_branch
    %25 = sbr.rel (0) target = $region17
  $region16: #{vit_forward.5} parent=0 // pred_region
    _
  $region17: #{vit_forward.5} parent=0 // pred_fallthru
    _
  // Predicated region
  $region18: #{vit_forward.5} parent=0 // pred_check
    _
  $region19: #{vit_forward.5} parent=0 // pred_check_branch
    %27 = sbr.rel (0) target = $region21
  $region20: #{vit_forward.5} parent=0 // pred_region
    _
  $region21: #{vit_forward.5} parent=0 // pred_fallthru
    _
  // Predicated region
  $region22: #{vit_forward.5} parent=0 // pred_check
    _
  $region23: #{vit_forward.5} parent=0 // pred_check_branch
    %29 = sbr.rel (0) target = $region25
  $region24: #{vit_forward.5} parent=0 // pred_region
    _
  $region25: #{vit_forward.5} parent=0 // pred_fallthru
    _
  // Predicated region
  $region26: #{vit_forward.5} parent=0 // pred_check
    _
  $region27: #{vit_forward.5} parent=0 // pred_check_branch
    %31 = sbr.rel (0) target = $region29
  $region28: #{vit_forward.5} parent=0 // pred_region
    _
  $region29: #{vit_forward.5} parent=0 // pred_fallthru
    _
  // Predicated region
  $region30: #{vit_forward.5} parent=0 // pred_check
    _
  $region31: #{vit_forward.5} parent=0 // pred_check_branch
    %33 = sbr.rel (0) target = $region33
  $region32: #{vit_forward.5} parent=0 // pred_region
    _
  $region33: #{vit_forward.5} parent=0 // pred_fallthru
    _
  // Predicated region
  $region34: #{vit_forward.5} parent=0 // pred_check
    _
  $region35: #{vit_forward.5} parent=0 // pred_check_branch
    %35 = sbr.rel (0) target = $region37
  $region36: #{vit_forward.5} parent=0 // pred_region
    _
  $region37: #{vit_forward.5} parent=0 // pred_fallthru
    _
  // Predicated region
  $region38: #{vit_forward.5} parent=0 // pred_check
    _
  $region39: #{vit_forward.5} parent=0 // pred_check_branch
    %37 = sbr.rel (0) target = $region41
  $region40: #{vit_forward.5} parent=0 // pred_region
    _
  $region41: #{vit_forward.5} parent=0 // pred_fallthru
    _
  // Predicated region
  $region42: #{vit_forward.5} parent=0 // pred_check
    _
  $region43: #{vit_forward.5} parent=0 // pred_check_branch
    %39 = sbr.rel (0) target = $region45
  $region44: #{vit_forward.5} parent=0 // pred_region
    _
  $region45: #{vit_forward.5} parent=0 // pred_fallthru
    _
  // Predicated region
  $region46: #{vit_forward.5} parent=0 // pred_check
    _
  $region47: #{vit_forward.5} parent=0 // pred_check_branch
    %41 = sbr.rel (0) target = $region49
  $region48: #{vit_forward.5} parent=0 // pred_region
    _
  $region49: #{vit_forward.5} parent=0 // pred_fallthru
    _
  // Predicated region
  $region50: #{vit_forward.5} parent=0 // pred_check
    _
  $region51: #{vit_forward.5} parent=0 // pred_check_branch
    %43 = sbr.rel (0) target = $region53
  $region52: #{vit_forward.5} parent=0 // pred_region
    _
  $region53: #{vit_forward.5} parent=0 // pred_fallthru
    _
  %v45 = vld [vmem:[%s0] sm:$0xff]
  %v46 = vld [vmem:[%s0 + $0x8] sm:$0xff]
  %v47 = vld [vmem:[%s1] sm:$0x1]
  %v48 = vld [vmem:[%s2] sm:$0x1]
  %vm49 = vcmask 261120
  %v50 = vsel %vm49, %v45, 0.0
  %51 = vadd.xlane.f32.xlu0 %v50
  %v52 = vpop.xlane.xlu0 %51
  %v53 = vsel %vm49, %v46, 0.0
  %54 = vadd.xlane.f32.xlu0 %v53
  %v55 = vpop.xlane.xlu0 %54
  %v56 = vrcp.pop 32.0
  %v57 = vmul.f32 %v52, %v56
  %v58 = vmul.f32 %v55, %v56
  %v59 = vsub.f32 %v45, %v57
  %v60 = vsub.f32 %v46, %v58
  %v61 = vmul.f32 %v59, %v59
  %v62 = vmul.f32 %v60, %v60
  %v63 = vsel %vm49, %v61, 0.0
  %64 = vadd.xlane.f32.xlu0 %v63
  %v65 = vpop.xlane.xlu0 %64
  %v66 = vsel %vm49, %v62, 0.0
  %67 = vadd.xlane.f32.xlu0 %v66
  %v68 = vpop.xlane.xlu0 %67
  %v69 = vmul.f32 %v65, %v56
  %v70 = vmul.f32 %v68, %v56
  %v71 = vadd.f32 %v69, 1e-05
  %v72 = vadd.f32 %v70, 1e-05
  %v73 = vrsqrt.pop %v71
  %v74 = vrsqrt.pop %v72
  %v75 = vmul.f32 %v59, %v73
  %v76 = vmul.f32 %v60, %v74
  %v78 = vlaneseq
  %v79 = vshrl.u32 %v78, 7
  %v80 = vsub.s32 0, %v79
  %v81 = vrot.slane %v47, %v80
  %v83 = vmul.f32 %v75, %v81
  %v84 = vmul.f32 %v76, %v81
  %v86 = vlaneseq
  %v87 = vshrl.u32 %v86, 7
  %v88 = vsub.s32 0, %v87
  %v89 = vrot.slane %v48, %v88
  %v91 = vadd.f32 %v83, %v89
  %v92 = vadd.f32 %v84, %v89
  %v93 = vpack.c.bf16 %v92, %v91
  %v94 = vld [vmem:[%s3] sm:$0xf]
  %v95 = vld [vmem:[%s3 + $0x4] sm:$0xf]
  %v96 = vld [vmem:[%s3 + $0x8] sm:$0xf]
  %v97 = vld [vmem:[%s3 + $0xc] sm:$0xf]
  %v98 = vld [vmem:[%s3 + $0x10] sm:$0xf]
  %v99 = vld [vmem:[%s3 + $0x14] sm:$0xf]
  %v100 = vld [vmem:[%s3 + $0x18] sm:$0xf]
  %v101 = vld [vmem:[%s3 + $0x1c] sm:$0xf]
  %v106 = vunpack.c.l.b16 %v94
  %v107 = vunpack.c.l.b16 %v95
  %v108 = vunpack.c.l.b16 %v96
  %v109 = vunpack.c.l.b16 %v97
  %v110 = vpack.c.b16 %v107, %v106
  %v111 = vpack.c.b16 %v109, %v108
  %v115 = vsel %vm49, %v93, 0
  %117 = vmatprep.subr.bf16.mxu0 0
  %118 = vmatpush1.bf16.msra.mxu0 %v110
  %119 = vmatprep.subr.bf16.mxu0 0
  %120 = vmatpush1.bf16.msra.mxu0 %v111
  %121 = vmatprep.subr.bf16.mxu0 0
  %122 = vmatpush1.bf16.msra.mxu0 0
  %123 = vmatprep.subr.bf16.mxu0 0
  %124 = vmatpush1.bf16.msra.mxu0 0
  %125 = vmatprep.subr.bf16.mxu0 0
  %126 = vmatpush1.bf16.msra.mxu0 0
  %127 = vmatprep.subr.bf16.mxu0 0
  %128 = vmatpush1.bf16.msra.mxu0 0
  %129 = vmatprep.subr.bf16.mxu0 0
  %130 = vmatpush1.bf16.msra.mxu0 0
  %131 = vmatprep.subr.bf16.mxu0 0
  %132 = vmatpush1.bf16.msra.mxu0 0
  %133 = vmatprep.subr.bf16.mxu0 0
  %134 = vmatpush1.bf16.msra.mxu0 0
  %135 = vmatprep.subr.bf16.mxu0 0
  %136 = vmatpush1.bf16.msra.mxu0 0
  %137 = vmatprep.subr.bf16.mxu0 0
  %138 = vmatpush1.bf16.msra.mxu0 0
  %139 = vmatprep.subr.bf16.mxu0 0
  %140 = vmatpush1.bf16.msra.mxu0 0
  %141 = vmatprep.subr.bf16.mxu0 0
  %142 = vmatpush1.bf16.msra.mxu0 0
  %143 = vmatprep.subr.bf16.mxu0 0
  %144 = vmatpush1.bf16.msra.mxu0 0
  %145 = vmatprep.subr.bf16.mxu0 0
  %146 = vmatpush1.bf16.msra.mxu0 0
  %147 = vmatprep.subr.bf16.mxu0 0
  %148 = vmatpush1.bf16.msra.mxu0 0
  %149 = vmatprep.mubr.bf16.mxu0 0
  %150 = vmatmul.mubr.bf16.gmra.mrb[0].mxu0 %v115
  %v151 = vpop.f32.mrb[0].mxu0
  %v152 = vadd.f32 0.0, %v151
  %v153 = vpop.f32.mrb[0].mxu0
  %v154 = vpop.f32.mrb[0].mxu0
  %v155 = vadd.f32 0.0, %v154
  %v156 = vpop.f32.mrb[0].mxu0
  %157 = vdwg.mxu0
  %v162 = vunpack.c.l.b16 %v98
  %v163 = vunpack.c.l.b16 %v99
  %v164 = vunpack.c.l.b16 %v100
  %v165 = vunpack.c.l.b16 %v101
  %v166 = vpack.c.b16 %v163, %v162
  %v167 = vpack.c.b16 %v165, %v164
  %170 = vmatprep.subr.bf16.mxu0 0
  %171 = vmatpush1.bf16.msra.mxu0 %v166
  %172 = vmatprep.subr.bf16.mxu0 0
  %173 = vmatpush1.bf16.msra.mxu0 %v167
  %174 = vmatprep.subr.bf16.mxu0 0
  %175 = vmatpush1.bf16.msra.mxu0 0
  %176 = vmatprep.subr.bf16.mxu0 0
  %177 = vmatpush1.bf16.msra.mxu0 0
  %178 = vmatprep.subr.bf16.mxu0 0
  %179 = vmatpush1.bf16.msra.mxu0 0
  %180 = vmatprep.subr.bf16.mxu0 0
  %181 = vmatpush1.bf16.msra.mxu0 0
  %182 = vmatprep.subr.bf16.mxu0 0
  %183 = vmatpush1.bf16.msra.mxu0 0
  %184 = vmatprep.subr.bf16.mxu0 0
  %185 = vmatpush1.bf16.msra.mxu0 0
  %186 = vmatprep.subr.bf16.mxu0 0
  %187 = vmatpush1.bf16.msra.mxu0 0
  %188 = vmatprep.subr.bf16.mxu0 0
  %189 = vmatpush1.bf16.msra.mxu0 0
  %190 = vmatprep.subr.bf16.mxu0 0
  %191 = vmatpush1.bf16.msra.mxu0 0
  %192 = vmatprep.subr.bf16.mxu0 0
  %193 = vmatpush1.bf16.msra.mxu0 0
  %194 = vmatprep.subr.bf16.mxu0 0
  %195 = vmatpush1.bf16.msra.mxu0 0
  %196 = vmatprep.subr.bf16.mxu0 0
  %197 = vmatpush1.bf16.msra.mxu0 0
  %198 = vmatprep.subr.bf16.mxu0 0
  %199 = vmatpush1.bf16.msra.mxu0 0
  %200 = vmatprep.subr.bf16.mxu0 0
  %201 = vmatpush1.bf16.msra.mxu0 0
  %202 = vmatprep.mubr.bf16.mxu0 0
  %203 = vmatmul.mubr.bf16.gmra.mrb[0].mxu0 %v115
  %v204 = vpop.f32.mrb[0].mxu0
  %v205 = vadd.f32 0.0, %v204
  %v206 = vpop.f32.mrb[0].mxu0
  %v207 = vpop.f32.mrb[0].mxu0
  %v208 = vadd.f32 0.0, %v207
  %v209 = vpop.f32.mrb[0].mxu0
  %210 = vdwg.mxu0
  %v211 = vpack.c.bf16 %v155, %v152
  %v212 = vpack.c.bf16 %v208, %v205
  %v213 = vld [vmem:[%s4] sm:$0x1]
  %v214 = vld [vmem:[%s4 + $0x1] sm:$0x1]
  %v217 = vlaneseq
  %v218 = vshrl.u32 %v217, 7
  %v219 = vsub.s32 0, %v218
  %v220 = vrot.slane %v213, %v219
  %v221 = vlaneseq
  %v222 = vshrl.u32 %v221, 7
  %v223 = vsub.s32 0, %v222
  %v224 = vrot.slane %v214, %v223
  %225 = vrot.lane.b32.xlu0 %v220, 32
  %v226 = vpop.permute.xlu0 %225
  %227 = vrot.lane.b32.xlu0 %v224, 32
  %v228 = vpop.permute.xlu0 %227
  %v231 = vadd.f32 %v152, %v226
  %v232 = vadd.f32 %v155, %v226
  %v233 = vadd.f32 %v205, %v228
  %v234 = vadd.f32 %v208, %v228
  %v235 = vpack.c.bf16 %v232, %v231
  %v236 = vpack.c.bf16 %v234, %v233
  %v237 = vlaneseq
  %v238 = vand.u32 %v237, 127
  %vm239 = vcmp.lt.s32.totalorder %v238, 5
  %v240 = vsel %vm239, 0.0, -1e+30
  %242 = vrot.lane.b32.xlu0 %v211, 112
  %v243 = vpop.permute.xlu0 %242
  %vm244 = vcmask 130048
  %v246 = vsel %vm244, %v211, 0
  %v249 = vsel %vm244, %v243, 0
  %251 = vmatprep.subr.bf16.mxu0 0
  %252 = vmatpush1.bf16.xpose.msra.mxu0 %v249
  %253 = vmatprep.subr.bf16.mxu0 0
  %254 = vmatpush1.bf16.xpose.msra.mxu0 0
  %255 = vmatprep.subr.bf16.mxu0 0
  %256 = vmatpush1.bf16.xpose.msra.mxu0 0
  %257 = vmatprep.subr.bf16.mxu0 0
  %258 = vmatpush1.bf16.xpose.msra.mxu0 0
  %259 = vmatprep.subr.bf16.mxu0 0
  %260 = vmatpush1.bf16.xpose.msra.mxu0 0
  %261 = vmatprep.subr.bf16.mxu0 0
  %262 = vmatpush1.bf16.xpose.msra.mxu0 0
  %263 = vmatprep.subr.bf16.mxu0 0
  %264 = vmatpush1.bf16.xpose.msra.mxu0 0
  %265 = vmatprep.subr.bf16.mxu0 0
  %266 = vmatpush1.bf16.xpose.msra.mxu0 0
  %267 = vmatprep.subr.bf16.mxu0 0
  %268 = vmatpush1.bf16.xpose.msra.mxu0 0
  %269 = vmatprep.subr.bf16.mxu0 0
  %270 = vmatpush1.bf16.xpose.msra.mxu0 0
  %271 = vmatprep.subr.bf16.mxu0 0
  %272 = vmatpush1.bf16.xpose.msra.mxu0 0
  %273 = vmatprep.subr.bf16.mxu0 0
  %274 = vmatpush1.bf16.xpose.msra.mxu0 0
  %275 = vmatprep.subr.bf16.mxu0 0
  %276 = vmatpush1.bf16.xpose.msra.mxu0 0
  %277 = vmatprep.subr.bf16.mxu0 0
  %278 = vmatpush1.bf16.xpose.msra.mxu0 0
  %279 = vmatprep.subr.bf16.mxu0 0
  %280 = vmatpush1.bf16.xpose.msra.mxu0 0
  %281 = vmatprep.subr.bf16.mxu0 0
  %282 = vmatpush1.bf16.xpose.msra.mxu0 0
  %283 = vmatprep.mubr.bf16.mxu0 0
  %284 = vmatmul.mubr.bf16.gmra.mrb[0].mxu0 %v246
  %v285 = vpop.f32.mrb[0].mxu0
  %v286 = vadd.f32 %v240, %v285
  %v287 = vpop.f32.mrb[0].mxu0
  %v288 = vpop.f32.mrb[0].mxu0
  %v289 = vpop.f32.mrb[0].mxu0
  %290 = vdwg.mxu0
  %292 = vrot.lane.b32.xlu0 %v212, 112
  %v293 = vpop.permute.xlu0 %292
  %v295 = vsel %vm244, %v212, 0
  %v298 = vsel %vm244, %v293, 0
  %300 = vmatprep.subr.bf16.mxu0 0
  %301 = vmatpush1.bf16.xpose.msra.mxu0 %v298
  %302 = vmatprep.subr.bf16.mxu0 0
  %303 = vmatpush1.bf16.xpose.msra.mxu0 0
  %304 = vmatprep.subr.bf16.mxu0 0
  %305 = vmatpush1.bf16.xpose.msra.mxu0 0
  %306 = vmatprep.subr.bf16.mxu0 0
  %307 = vmatpush1.bf16.xpose.msra.mxu0 0
  %308 = vmatprep.subr.bf16.mxu0 0
  %309 = vmatpush1.bf16.xpose.msra.mxu0 0
  %310 = vmatprep.subr.bf16.mxu0 0
  %311 = vmatpush1.bf16.xpose.msra.mxu0 0
  %312 = vmatprep.subr.bf16.mxu0 0
  %313 = vmatpush1.bf16.xpose.msra.mxu0 0
  %314 = vmatprep.subr.bf16.mxu0 0
  %315 = vmatpush1.bf16.xpose.msra.mxu0 0
  %316 = vmatprep.subr.bf16.mxu0 0
  %317 = vmatpush1.bf16.xpose.msra.mxu0 0
  %318 = vmatprep.subr.bf16.mxu0 0
  %319 = vmatpush1.bf16.xpose.msra.mxu0 0
  %320 = vmatprep.subr.bf16.mxu0 0
  %321 = vmatpush1.bf16.xpose.msra.mxu0 0
  %322 = vmatprep.subr.bf16.mxu0 0
  %323 = vmatpush1.bf16.xpose.msra.mxu0 0
  %324 = vmatprep.subr.bf16.mxu0 0
  %325 = vmatpush1.bf16.xpose.msra.mxu0 0
  %326 = vmatprep.subr.bf16.mxu0 0
  %327 = vmatpush1.bf16.xpose.msra.mxu0 0
  %328 = vmatprep.subr.bf16.mxu0 0
  %329 = vmatpush1.bf16.xpose.msra.mxu0 0
  %330 = vmatprep.subr.bf16.mxu0 0
  %331 = vmatpush1.bf16.xpose.msra.mxu0 0
  %332 = vmatprep.mubr.bf16.mxu0 0
  %333 = vmatmul.mubr.bf16.gmra.mrb[0].mxu0 %v295
  %v334 = vpop.f32.mrb[0].mxu0
  %v335 = vadd.f32 %v240, %v334
  %v336 = vpop.f32.mrb[0].mxu0
  %v337 = vpop.f32.mrb[0].mxu0
  %v338 = vpop.f32.mrb[0].mxu0
  %339 = vdwg.mxu0
  %vm340 = vcmask 64512
  %v341 = vsel %vm340, %v286, -inf
  %342 = vmax.xlane.f32.xlu0 %v341
  %v343 = vpop.xlane.xlu0 %342
  %v344 = vsel %vm340, %v335, -inf
  %345 = vmax.xlane.f32.xlu0 %v344
  %v346 = vpop.xlane.xlu0 %345
  %v347 = vsub.f32 %v286, %v343
  %v348 = vsub.f32 %v335, %v346
  %v349 = vmul.f32 %v347, 1.442695
  %v350 = vpow.pop %v349
  %v351 = vmul.f32 %v348, 1.442695
  %v352 = vpow.pop %v351
  %v353 = vsel %vm340, %v350, 0.0
  %354 = vadd.xlane.f32.xlu0 %v353
  %v355 = vpop.xlane.xlu0 %354
  %v356 = vsel %vm340, %v352, 0.0
  %357 = vadd.xlane.f32.xlu0 %v356
  %v358 = vpop.xlane.xlu0 %357
  %v359 = vrcp.pop %v355
  %v360 = vrcp.pop %v358
  %v361 = vmul.f32 %v350, %v359
  %v362 = vmul.f32 %v352, %v360
  %v363 = vpack.c.bf16 %v361, %v361
  %v364 = vpack.c.bf16 %v362, %v362
  %366 = vrot.lane.b32.xlu0 %v235, 96
  %v367 = vpop.permute.xlu0 %366
  %v369 = vsel %vm340, %v363, 0
  %vm371 = vcmask 1043456
  %v373 = vsel %vm371, %v367, 0
  %375 = vmatprep.subr.bf16.mxu0 0
  %376 = vmatpush1.bf16.msra.mxu0 %v373
  %377 = vmatprep.subr.bf16.mxu0 0
  %378 = vmatpush1.bf16.msra.mxu0 0
  %379 = vmatprep.subr.bf16.mxu0 0
  %380 = vmatpush1.bf16.msra.mxu0 0
  %381 = vmatprep.subr.bf16.mxu0 0
  %382 = vmatpush1.bf16.msra.mxu0 0
  %383 = vmatprep.subr.bf16.mxu0 0
  %384 = vmatpush1.bf16.msra.mxu0 0
  %385 = vmatprep.subr.bf16.mxu0 0
  %386 = vmatpush1.bf16.msra.mxu0 0
  %387 = vmatprep.subr.bf16.mxu0 0
  %388 = vmatpush1.bf16.msra.mxu0 0
  %389 = vmatprep.subr.bf16.mxu0 0
  %390 = vmatpush1.bf16.msra.mxu0 0
  %391 = vmatprep.subr.bf16.mxu0 0
  %392 = vmatpush1.bf16.msra.mxu0 0
  %393 = vmatprep.subr.bf16.mxu0 0
  %394 = vmatpush1.bf16.msra.mxu0 0
  %395 = vmatprep.subr.bf16.mxu0 0
  %396 = vmatpush1.bf16.msra.mxu0 0
  %397 = vmatprep.subr.bf16.mxu0 0
  %398 = vmatpush1.bf16.msra.mxu0 0
  %399 = vmatprep.subr.bf16.mxu0 0
  %400 = vmatpush1.bf16.msra.mxu0 0
  %401 = vmatprep.subr.bf16.mxu0 0
  %402 = vmatpush1.bf16.msra.mxu0 0
  %403 = vmatprep.subr.bf16.mxu0 0
  %404 = vmatpush1.bf16.msra.mxu0 0
  %405 = vmatprep.subr.bf16.mxu0 0
  %406 = vmatpush1.bf16.msra.mxu0 0
  %407 = vmatprep.mubr.bf16.mxu0 0
  %408 = vmatmul.mubr.bf16.gmra.mrb[0].mxu0 %v369
  %v409 = vpop.f32.mrb[0].mxu0
  %v410 = vadd.f32 0.0, %v409
  %v411 = vpop.f32.mrb[0].mxu0
  %v412 = vpop.f32.mrb[0].mxu0
  %v413 = vpop.f32.mrb[0].mxu0
  %414 = vdwg.mxu0
  %416 = vrot.lane.b32.xlu0 %v236, 96
  %v417 = vpop.permute.xlu0 %416
  %v419 = vsel %vm340, %v364, 0
  %v422 = vsel %vm371, %v417, 0
  %424 = vmatprep.subr.bf16.mxu0 0
  %425 = vmatpush1.bf16.msra.mxu0 %v422
  %426 = vmatprep.subr.bf16.mxu0 0
  %427 = vmatpush1.bf16.msra.mxu0 0
  %428 = vmatprep.subr.bf16.mxu0 0
  %429 = vmatpush1.bf16.msra.mxu0 0
  %430 = vmatprep.subr.bf16.mxu0 0
  %431 = vmatpush1.bf16.msra.mxu0 0
  %432 = vmatprep.subr.bf16.mxu0 0
  %433 = vmatpush1.bf16.msra.mxu0 0
  %434 = vmatprep.subr.bf16.mxu0 0
  %435 = vmatpush1.bf16.msra.mxu0 0
  %436 = vmatprep.subr.bf16.mxu0 0
  %437 = vmatpush1.bf16.msra.mxu0 0
  %438 = vmatprep.subr.bf16.mxu0 0
  %439 = vmatpush1.bf16.msra.mxu0 0
  %440 = vmatprep.subr.bf16.mxu0 0
  %441 = vmatpush1.bf16.msra.mxu0 0
  %442 = vmatprep.subr.bf16.mxu0 0
  %443 = vmatpush1.bf16.msra.mxu0 0
  %444 = vmatprep.subr.bf16.mxu0 0
  %445 = vmatpush1.bf16.msra.mxu0 0
  %446 = vmatprep.subr.bf16.mxu0 0
  %447 = vmatpush1.bf16.msra.mxu0 0
  %448 = vmatprep.subr.bf16.mxu0 0
  %449 = vmatpush1.bf16.msra.mxu0 0
  %450 = vmatprep.subr.bf16.mxu0 0
  %451 = vmatpush1.bf16.msra.mxu0 0
  %452 = vmatprep.subr.bf16.mxu0 0
  %453 = vmatpush1.bf16.msra.mxu0 0
  %454 = vmatprep.subr.bf16.mxu0 0
  %455 = vmatpush1.bf16.msra.mxu0 0
  %456 = vmatprep.mubr.bf16.mxu0 0
  %457 = vmatmul.mubr.bf16.gmra.mrb[0].mxu0 %v419
  %v458 = vpop.f32.mrb[0].mxu0
  %v459 = vadd.f32 0.0, %v458
  %v460 = vpop.f32.mrb[0].mxu0
  %v461 = vpop.f32.mrb[0].mxu0
  %v462 = vpop.f32.mrb[0].mxu0
  %463 = vdwg.mxu0
  %v464 = vrot.slane %v211, 4
  %465 = vrot.lane.b32.xlu0 %v464, 112
  %v466 = vpop.permute.xlu0 %465
  %v468 = vsel %vm244, %v464, 0
  %v471 = vsel %vm244, %v466, 0
  %473 = vmatprep.subr.bf16.mxu0 0
  %474 = vmatpush1.bf16.xpose.msra.mxu0 %v471
  %475 = vmatprep.subr.bf16.mxu0 0
  %476 = vmatpush1.bf16.xpose.msra.mxu0 0
  %477 = vmatprep.subr.bf16.mxu0 0
  %478 = vmatpush1.bf16.xpose.msra.mxu0 0
  %479 = vmatprep.subr.bf16.mxu0 0
  %480 = vmatpush1.bf16.xpose.msra.mxu0 0
  %481 = vmatprep.subr.bf16.mxu0 0
  %482 = vmatpush1.bf16.xpose.msra.mxu0 0
  %483 = vmatprep.subr.bf16.mxu0 0
  %484 = vmatpush1.bf16.xpose.msra.mxu0 0
  %485 = vmatprep.subr.bf16.mxu0 0
  %486 = vmatpush1.bf16.xpose.msra.mxu0 0
  %487 = vmatprep.subr.bf16.mxu0 0
  %488 = vmatpush1.bf16.xpose.msra.mxu0 0
  %489 = vmatprep.subr.bf16.mxu0 0
  %490 = vmatpush1.bf16.xpose.msra.mxu0 0
  %491 = vmatprep.subr.bf16.mxu0 0
  %492 = vmatpush1.bf16.xpose.msra.mxu0 0
  %493 = vmatprep.subr.bf16.mxu0 0
  %494 = vmatpush1.bf16.xpose.msra.mxu0 0
  %495 = vmatprep.subr.bf16.mxu0 0
  %496 = vmatpush1.bf16.xpose.msra.mxu0 0
  %497 = vmatprep.subr.bf16.mxu0 0
  %498 = vmatpush1.bf16.xpose.msra.mxu0 0
  %499 = vmatprep.subr.bf16.mxu0 0
  %500 = vmatpush1.bf16.xpose.msra.mxu0 0
  %501 = vmatprep.subr.bf16.mxu0 0
  %502 = vmatpush1.bf16.xpose.msra.mxu0 0
  %503 = vmatprep.subr.bf16.mxu0 0
  %504 = vmatpush1.bf16.xpose.msra.mxu0 0
  %505 = vmatprep.mubr.bf16.mxu0 0
  %506 = vmatmul.mubr.bf16.gmra.mrb[0].mxu0 %v468
  %v507 = vpop.f32.mrb[0].mxu0
  %v508 = vadd.f32 %v240, %v507
  %v509 = vpop.f32.mrb[0].mxu0
  %v510 = vpop.f32.mrb[0].mxu0
  %v511 = vpop.f32.mrb[0].mxu0
  %512 = vdwg.mxu0
  %v513 = vrot.slane %v212, 4
  %514 = vrot.lane.b32.xlu0 %v513, 112
  %v515 = vpop.permute.xlu0 %514
  %v517 = vsel %vm244, %v513, 0
  %v520 = vsel %vm244, %v515, 0
  %522 = vmatprep.subr.bf16.mxu0 0
  %523 = vmatpush1.bf16.xpose.msra.mxu0 %v520
  %524 = vmatprep.subr.bf16.mxu0 0
  %525 = vmatpush1.bf16.xpose.msra.mxu0 0
  %526 = vmatprep.subr.bf16.mxu0 0
  %527 = vmatpush1.bf16.xpose.msra.mxu0 0
  %528 = vmatprep.subr.bf16.mxu0 0
  %529 = vmatpush1.bf16.xpose.msra.mxu0 0
  %530 = vmatprep.subr.bf16.mxu0 0
  %531 = vmatpush1.bf16.xpose.msra.mxu0 0
  %532 = vmatprep.subr.bf16.mxu0 0
  %533 = vmatpush1.bf16.xpose.msra.mxu0 0
  %534 = vmatprep.subr.bf16.mxu0 0
  %535 = vmatpush1.bf16.xpose.msra.mxu0 0
  %536 = vmatprep.subr.bf16.mxu0 0
  %537 = vmatpush1.bf16.xpose.msra.mxu0 0
  %538 = vmatprep.subr.bf16.mxu0 0
  %539 = vmatpush1.bf16.xpose.msra.mxu0 0
  %540 = vmatprep.subr.bf16.mxu0 0
  %541 = vmatpush1.bf16.xpose.msra.mxu0 0
  %542 = vmatprep.subr.bf16.mxu0 0
  %543 = vmatpush1.bf16.xpose.msra.mxu0 0
  %544 = vmatprep.subr.bf16.mxu0 0
  %545 = vmatpush1.bf16.xpose.msra.mxu0 0
  %546 = vmatprep.subr.bf16.mxu0 0
  %547 = vmatpush1.bf16.xpose.msra.mxu0 0
  %548 = vmatprep.subr.bf16.mxu0 0
  %549 = vmatpush1.bf16.xpose.msra.mxu0 0
  %550 = vmatprep.subr.bf16.mxu0 0
  %551 = vmatpush1.bf16.xpose.msra.mxu0 0
  %552 = vmatprep.subr.bf16.mxu0 0
  %553 = vmatpush1.bf16.xpose.msra.mxu0 0
  %554 = vmatprep.mubr.bf16.mxu0 0
  %555 = vmatmul.mubr.bf16.gmra.mrb[0].mxu0 %v517
  %v556 = vpop.f32.mrb[0].mxu0
  %v557 = vadd.f32 %v240, %v556
  %v558 = vpop.f32.mrb[0].mxu0
  %v559 = vpop.f32.mrb[0].mxu0
  %v560 = vpop.f32.mrb[0].mxu0
  %561 = vdwg.mxu0
  %v562 = vsel %vm340, %v508, -inf
  %563 = vmax.xlane.f32.xlu0 %v562
  %v564 = vpop.xlane.xlu0 %563
  %v565 = vsel %vm340, %v557, -inf
  %566 = vmax.xlane.f32.xlu0 %v565
  %v567 = vpop.xlane.xlu0 %566
  %v568 = vsub.f32 %v508, %v564
  %v569 = vsub.f32 %v557, %v567
  %v570 = vmul.f32 %v568, 1.442695
  %v571 = vpow.pop %v570
  %v572 = vmul.f32 %v569, 1.442695
  %v573 = vpow.pop %v572
  %v574 = vsel %vm340, %v571, 0.0
  %575 = vadd.xlane.f32.xlu0 %v574
  %v576 = vpop.xlane.xlu0 %575
  %v577 = vsel %vm340, %v573, 0.0
  %578 = vadd.xlane.f32.xlu0 %v577
  %v579 = vpop.xlane.xlu0 %578
  %v580 = vrcp.pop %v576
  %v581 = vrcp.pop %v579
  %v582 = vmul.f32 %v571, %v580
  %v583 = vmul.f32 %v573, %v581
  %v584 = vpack.c.bf16 %v582, %v582
  %v585 = vpack.c.bf16 %v583, %v583
  %v586 = vrot.slane %v235, 4
  %587 = vrot.lane.b32.xlu0 %v586, 96
  %v588 = vpop.permute.xlu0 %587
  %v590 = vsel %vm340, %v584, 0
  %v593 = vsel %vm371, %v588, 0
  %595 = vmatprep.subr.bf16.mxu0 0
  %596 = vmatpush1.bf16.msra.mxu0 %v593
  %597 = vmatprep.subr.bf16.mxu0 0
  %598 = vmatpush1.bf16.msra.mxu0 0
  %599 = vmatprep.subr.bf16.mxu0 0
  %600 = vmatpush1.bf16.msra.mxu0 0
  %601 = vmatprep.subr.bf16.mxu0 0
  %602 = vmatpush1.bf16.msra.mxu0 0
  %603 = vmatprep.subr.bf16.mxu0 0
  %604 = vmatpush1.bf16.msra.mxu0 0
  %605 = vmatprep.subr.bf16.mxu0 0
  %606 = vmatpush1.bf16.msra.mxu0 0
  %607 = vmatprep.subr.bf16.mxu0 0
  %608 = vmatpush1.bf16.msra.mxu0 0
  %609 = vmatprep.subr.bf16.mxu0 0
  %610 = vmatpush1.bf16.msra.mxu0 0
  %611 = vmatprep.subr.bf16.mxu0 0
  %612 = vmatpush1.bf16.msra.mxu0 0
  %613 = vmatprep.subr.bf16.mxu0 0
  %614 = vmatpush1.bf16.msra.mxu0 0
  %615 = vmatprep.subr.bf16.mxu0 0
  %616 = vmatpush1.bf16.msra.mxu0 0
  %617 = vmatprep.subr.bf16.mxu0 0
  %618 = vmatpush1.bf16.msra.mxu0 0
  %619 = vmatprep.subr.bf16.mxu0 0
  %620 = vmatpush1.bf16.msra.mxu0 0
  %621 = vmatprep.subr.bf16.mxu0 0
  %622 = vmatpush1.bf16.msra.mxu0 0
  %623 = vmatprep.subr.bf16.mxu0 0
  %624 = vmatpush1.bf16.msra.mxu0 0
  %625 = vmatprep.subr.bf16.mxu0 0
  %626 = vmatpush1.bf16.msra.mxu0 0
  %627 = vmatprep.mubr.bf16.mxu0 0
  %628 = vmatmul.mubr.bf16.gmra.mrb[0].mxu0 %v590
  %v629 = vpop.f32.mrb[0].mxu0
  %v630 = vadd.f32 0.0, %v629
  %v631 = vpop.f32.mrb[0].mxu0
  %v632 = vpop.f32.mrb[0].mxu0
  %v633 = vpop.f32.mrb[0].mxu0
  %634 = vdwg.mxu0
  %v635 = vrot.slane %v236, 4
  %636 = vrot.lane.b32.xlu0 %v635, 96
  %v637 = vpop.permute.xlu0 %636
  %v639 = vsel %vm340, %v585, 0
  %v642 = vsel %vm371, %v637, 0
  %644 = vmatprep.subr.bf16.mxu0 0
  %645 = vmatpush1.bf16.msra.mxu0 %v642
  %646 = vmatprep.subr.bf16.mxu0 0
  %647 = vmatpush1.bf16.msra.mxu0 0
  %648 = vmatprep.subr.bf16.mxu0 0
  %649 = vmatpush1.bf16.msra.mxu0 0
  %650 = vmatprep.subr.bf16.mxu0 0
  %651 = vmatpush1.bf16.msra.mxu0 0
  %652 = vmatprep.subr.bf16.mxu0 0
  %653 = vmatpush1.bf16.msra.mxu0 0
  %654 = vmatprep.subr.bf16.mxu0 0
  %655 = vmatpush1.bf16.msra.mxu0 0
  %656 = vmatprep.subr.bf16.mxu0 0
  %657 = vmatpush1.bf16.msra.mxu0 0
  %658 = vmatprep.subr.bf16.mxu0 0
  %659 = vmatpush1.bf16.msra.mxu0 0
  %660 = vmatprep.subr.bf16.mxu0 0
  %661 = vmatpush1.bf16.msra.mxu0 0
  %662 = vmatprep.subr.bf16.mxu0 0
  %663 = vmatpush1.bf16.msra.mxu0 0
  %664 = vmatprep.subr.bf16.mxu0 0
  %665 = vmatpush1.bf16.msra.mxu0 0
  %666 = vmatprep.subr.bf16.mxu0 0
  %667 = vmatpush1.bf16.msra.mxu0 0
  %668 = vmatprep.subr.bf16.mxu0 0
  %669 = vmatpush1.bf16.msra.mxu0 0
  %670 = vmatprep.subr.bf16.mxu0 0
  %671 = vmatpush1.bf16.msra.mxu0 0
  %672 = vmatprep.subr.bf16.mxu0 0
  %673 = vmatpush1.bf16.msra.mxu0 0
  %674 = vmatprep.subr.bf16.mxu0 0
  %675 = vmatpush1.bf16.msra.mxu0 0
  %676 = vmatprep.mubr.bf16.mxu0 0
  %677 = vmatmul.mubr.bf16.gmra.mrb[0].mxu0 %v639
  %v678 = vpop.f32.mrb[0].mxu0
  %v679 = vadd.f32 0.0, %v678
  %v680 = vpop.f32.mrb[0].mxu0
  %v681 = vpop.f32.mrb[0].mxu0
  %v682 = vpop.f32.mrb[0].mxu0
  %683 = vdwg.mxu0
  %v684 = vpack.c.bf16 %v630, %v410
  %v685 = vpack.c.bf16 %v679, %v459
  %v686 = vld [vmem:[%s5] sm:$0xf]
  %v687 = vld [vmem:[%s5 + $0x4] sm:$0xf]
  %v688 = vld [vmem:[%s5 + $0x8] sm:$0xf]
  %v689 = vld [vmem:[%s5 + $0xc] sm:$0xf]
  %v692 = vunpack.c.l.b16 %v686
  %v693 = vunpack.c.l.b16 %v687
  %v694 = vpack.c.b16 %v693, %v692
  %v697 = vsel %vm244, %v684, 0
  %699 = vmatprep.subr.bf16.mxu0 0
  %700 = vmatpush1.bf16.msra.mxu0 %v694
  %701 = vmatprep.subr.bf16.mxu0 0
  %702 = vmatpush1.bf16.msra.mxu0 0
  %703 = vmatprep.subr.bf16.mxu0 0
  %704 = vmatpush1.bf16.msra.mxu0 0
  %705 = vmatprep.subr.bf16.mxu0 0
  %706 = vmatpush1.bf16.msra.mxu0 0
  %707 = vmatprep.subr.bf16.mxu0 0
  %708 = vmatpush1.bf16.msra.mxu0 0
  %709 = vmatprep.subr.bf16.mxu0 0
  %710 = vmatpush1.bf16.msra.mxu0 0
  %711 = vmatprep.subr.bf16.mxu0 0
  %712 = vmatpush1.bf16.msra.mxu0 0
  %713 = vmatprep.subr.bf16.mxu0 0
  %714 = vmatpush1.bf16.msra.mxu0 0
  %715 = vmatprep.subr.bf16.mxu0 0
  %716 = vmatpush1.bf16.msra.mxu0 0
  %717 = vmatprep.subr.bf16.mxu0 0
  %718 = vmatpush1.bf16.msra.mxu0 0
  %719 = vmatprep.subr.bf16.mxu0 0
  %720 = vmatpush1.bf16.msra.mxu0 0
  %721 = vmatprep.subr.bf16.mxu0 0
  %722 = vmatpush1.bf16.msra.mxu0 0
  %723 = vmatprep.subr.bf16.mxu0 0
  %724 = vmatpush1.bf16.msra.mxu0 0
  %725 = vmatprep.subr.bf16.mxu0 0
  %726 = vmatpush1.bf16.msra.mxu0 0
  %727 = vmatprep.subr.bf16.mxu0 0
  %728 = vmatpush1.bf16.msra.mxu0 0
  %729 = vmatprep.subr.bf16.mxu0 0
  %730 = vmatpush1.bf16.msra.mxu0 0
  %731 = vmatprep.mubr.bf16.mxu0 0
  %732 = vmatmul.mubr.bf16.gmra.mrb[0].mxu0 %v697
  %v733 = vpop.f32.mrb[0].mxu0
  %v734 = vadd.f32 0.0, %v733
  %v735 = vpop.f32.mrb[0].mxu0
  %v736 = vpop.f32.mrb[0].mxu0
  %v737 = vadd.f32 0.0, %v736
  %v738 = vpop.f32.mrb[0].mxu0
  %739 = vdwg.mxu0
  %v742 = vunpack.c.l.b16 %v688
  %v743 = vunpack.c.l.b16 %v689
  %v744 = vpack.c.b16 %v743, %v742
  %v747 = vsel %vm244, %v685, 0
  %749 = vmatprep.subr.bf16.mxu0 0
  %750 = vmatpush1.bf16.msra.mxu0 %v744
  %751 = vmatprep.subr.bf16.mxu0 0
  %752 = vmatpush1.bf16.msra.mxu0 0
  %753 = vmatprep.subr.bf16.mxu0 0
  %754 = vmatpush1.bf16.msra.mxu0 0
  %755 = vmatprep.subr.bf16.mxu0 0
  %756 = vmatpush1.bf16.msra.mxu0 0
  %757 = vmatprep.subr.bf16.mxu0 0
  %758 = vmatpush1.bf16.msra.mxu0 0
  %759 = vmatprep.subr.bf16.mxu0 0
  %760 = vmatpush1.bf16.msra.mxu0 0
  %761 = vmatprep.subr.bf16.mxu0 0
  %762 = vmatpush1.bf16.msra.mxu0 0
  %763 = vmatprep.subr.bf16.mxu0 0
  %764 = vmatpush1.bf16.msra.mxu0 0
  %765 = vmatprep.subr.bf16.mxu0 0
  %766 = vmatpush1.bf16.msra.mxu0 0
  %767 = vmatprep.subr.bf16.mxu0 0
  %768 = vmatpush1.bf16.msra.mxu0 0
  %769 = vmatprep.subr.bf16.mxu0 0
  %770 = vmatpush1.bf16.msra.mxu0 0
  %771 = vmatprep.subr.bf16.mxu0 0
  %772 = vmatpush1.bf16.msra.mxu0 0
  %773 = vmatprep.subr.bf16.mxu0 0
  %774 = vmatpush1.bf16.msra.mxu0 0
  %775 = vmatprep.subr.bf16.mxu0 0
  %776 = vmatpush1.bf16.msra.mxu0 0
  %777 = vmatprep.subr.bf16.mxu0 0
  %778 = vmatpush1.bf16.msra.mxu0 0
  %779 = vmatprep.subr.bf16.mxu0 0
  %780 = vmatpush1.bf16.msra.mxu0 0
  %781 = vmatprep.mubr.bf16.mxu0 0
  %782 = vmatmul.mubr.bf16.gmra.mrb[0].mxu0 %v747
  %v783 = vpop.f32.mrb[0].mxu0
  %v784 = vadd.f32 0.0, %v783
  %v785 = vpop.f32.mrb[0].mxu0
  %v786 = vpop.f32.mrb[0].mxu0
  %v787 = vadd.f32 0.0, %v786
  %v788 = vpop.f32.mrb[0].mxu0
  %789 = vdwg.mxu0
  %v790 = vsel %vm49, %v734, 0.0
  %v791 = vsel %vm49, %v784, 0.0
  %v792 = vadd.f32 %v790, %v791
  %v793 = vsel %vm49, %v737, 0.0
  %v794 = vsel %vm49, %v787, 0.0
  %v795 = vadd.f32 %v793, %v794
  %v796 = vadd.f32 %v45, %v792
  %v797 = vadd.f32 %v46, %v795
  %v798 = vld [vmem:[%s6] sm:$0x1]
  %v800 = vlaneseq
  %v801 = vshrl.u32 %v800, 7
  %v802 = vsub.s32 0, %v801
  %v803 = vrot.slane %v798, %v802
  %v805 = vadd.f32 %v796, %v803
  %v806 = vadd.f32 %v797, %v803
  %v807 = vld [vmem:[%s7] sm:$0x1]
  %v808 = vld [vmem:[%s8] sm:$0x1]
  %v809 = vsel %vm49, %v805, 0.0
  %810 = vadd.xlane.f32.xlu0 %v809
  %v811 = vpop.xlane.xlu0 %810
  %v812 = vsel %vm49, %v806, 0.0
  %813 = vadd.xlane.f32.xlu0 %v812
  %v814 = vpop.xlane.xlu0 %813
  %v815 = vmul.f32 %v811, %v56
  %v816 = vmul.f32 %v814, %v56
  %v817 = vsub.f32 %v805, %v815
  %v818 = vsub.f32 %v806, %v816
  %v819 = vmul.f32 %v817, %v817
  %v820 = vmul.f32 %v818, %v818
  %v821 = vsel %vm49, %v819, 0.0
  %822 = vadd.xlane.f32.xlu0 %v821
  %v823 = vpop.xlane.xlu0 %822
  %v824 = vsel %vm49, %v820, 0.0
  %825 = vadd.xlane.f32.xlu0 %v824
  %v826 = vpop.xlane.xlu0 %825
  %v827 = vmul.f32 %v823, %v56
  %v828 = vmul.f32 %v826, %v56
  %v829 = vadd.f32 %v827, 1e-05
  %v830 = vadd.f32 %v828, 1e-05
  %v831 = vrsqrt.pop %v829
  %v832 = vrsqrt.pop %v830
  %v833 = vmul.f32 %v817, %v831
  %v834 = vmul.f32 %v818, %v832
  %v836 = vlaneseq
  %v837 = vshrl.u32 %v836, 7
  %v838 = vsub.s32 0, %v837
  %v839 = vrot.slane %v807, %v838
  %v841 = vmul.f32 %v833, %v839
  %v842 = vmul.f32 %v834, %v839
  %v844 = vlaneseq
  %v845 = vshrl.u32 %v844, 7
  %v846 = vsub.s32 0, %v845
  %v847 = vrot.slane %v808, %v846
  %v849 = vadd.f32 %v841, %v847
  %v850 = vadd.f32 %v842, %v847
  %v851 = vpack.c.bf16 %v850, %v849
  %v852 = vld [vmem:[%s9] sm:$0xf]
  %v853 = vld [vmem:[%s9 + $0x4] sm:$0xf]
  %v854 = vld [vmem:[%s9 + $0x8] sm:$0xf]
  %v855 = vld [vmem:[%s9 + $0xc] sm:$0xf]
  %v856 = vld [vmem:[%s10] sm:$0x1]
  %v858 = vlaneseq
  %v859 = vshrl.u32 %v858, 7
  %v860 = vsub.s32 0, %v859
  %v861 = vrot.slane %v856, %v860
  %v867 = vunpack.c.l.b16 %v852
  %v868 = vunpack.c.l.b16 %v853
  %v869 = vunpack.c.l.b16 %v854
  %v870 = vunpack.c.l.b16 %v855
  %v871 = vpack.c.b16 %v868, %v867
  %v872 = vpack.c.b16 %v870, %v869
  %v876 = vsel %vm49, %v851, 0
  %878 = vmatprep.subr.bf16.mxu0 0
  %879 = vmatpush1.bf16.msra.mxu0 %v871
  %880 = vmatprep.subr.bf16.mxu0 0
  %881 = vmatpush1.bf16.msra.mxu0 %v872
  %882 = vmatprep.subr.bf16.mxu0 0
  %883 = vmatpush1.bf16.msra.mxu0 0
  %884 = vmatprep.subr.bf16.mxu0 0
  %885 = vmatpush1.bf16.msra.mxu0 0
  %886 = vmatprep.subr.bf16.mxu0 0
  %887 = vmatpush1.bf16.msra.mxu0 0
  %888 = vmatprep.subr.bf16.mxu0 0
  %889 = vmatpush1.bf16.msra.mxu0 0
  %890 = vmatprep.subr.bf16.mxu0 0
  %891 = vmatpush1.bf16.msra.mxu0 0
  %892 = vmatprep.subr.bf16.mxu0 0
  %893 = vmatpush1.bf16.msra.mxu0 0
  %894 = vmatprep.subr.bf16.mxu0 0
  %895 = vmatpush1.bf16.msra.mxu0 0
  %896 = vmatprep.subr.bf16.mxu0 0
  %897 = vmatpush1.bf16.msra.mxu0 0
  %898 = vmatprep.subr.bf16.mxu0 0
  %899 = vmatpush1.bf16.msra.mxu0 0
  %900 = vmatprep.subr.bf16.mxu0 0
  %901 = vmatpush1.bf16.msra.mxu0 0
  %902 = vmatprep.subr.bf16.mxu0 0
  %903 = vmatpush1.bf16.msra.mxu0 0
  %904 = vmatprep.subr.bf16.mxu0 0
  %905 = vmatpush1.bf16.msra.mxu0 0
  %906 = vmatprep.subr.bf16.mxu0 0
  %907 = vmatpush1.bf16.msra.mxu0 0
  %908 = vmatprep.subr.bf16.mxu0 0
  %909 = vmatpush1.bf16.msra.mxu0 0
  %910 = vmatprep.mubr.bf16.mxu0 0
  %911 = vmatmul.mubr.bf16.gmra.mrb[0].mxu0 %v876
  %v912 = vpop.f32.mrb[0].mxu0
  %v913 = vadd.f32 %v861, %v912
  %v914 = vpop.f32.mrb[0].mxu0
  %v915 = vpop.f32.mrb[0].mxu0
  %v916 = vadd.f32 %v861, %v915
  %v917 = vpop.f32.mrb[0].mxu0
  %918 = vdwg.mxu0
  %v919 = vmul.f32 %v913, 0.5
  %v920 = vmul.f32 %v916, 0.5
  %v921 = vmul.f32 %v913, 0.70710677
  %v922 = vmul.f32 %v916, 0.70710677
  %v923 = verf.f32.pop %v921
  %v924 = verf.f32.pop %v922
  %v925 = vadd.f32 %v923, 1.0
  %v926 = vadd.f32 %v924, 1.0
  %v927 = vmul.f32 %v919, %v925
  %v928 = vmul.f32 %v920, %v926
  %v929 = vpack.c.bf16 %v928, %v927
  %v930 = vld [vmem:[%s11] sm:$0xf]
  %v931 = vld [vmem:[%s11 + $0x4] sm:$0xf]
  %v932 = vld [vmem:[%s11 + $0x8] sm:$0xf]
  %v933 = vld [vmem:[%s11 + $0xc] sm:$0xf]
  %v934 = vld [vmem:[%s11 + $0x10] sm:$0xf]
  %v935 = vld [vmem:[%s11 + $0x14] sm:$0xf]
  %v936 = vld [vmem:[%s11 + $0x18] sm:$0xf]
  %v937 = vld [vmem:[%s11 + $0x1c] sm:$0xf]
  %v946 = vunpack.c.l.b16 %v930
  %v947 = vunpack.c.l.b16 %v931
  %v948 = vunpack.c.l.b16 %v932
  %v949 = vunpack.c.l.b16 %v933
  %v950 = vunpack.c.l.b16 %v934
  %v951 = vunpack.c.l.b16 %v935
  %v952 = vunpack.c.l.b16 %v936
  %v953 = vunpack.c.l.b16 %v937
  %v954 = vpack.c.b16 %v947, %v946
  %v955 = vpack.c.b16 %v949, %v948
  %v956 = vpack.c.b16 %v951, %v950
  %v957 = vpack.c.b16 %v953, %v952
  %vm962 = vcmask 523264
  %v964 = vsel %vm962, %v929, 0
  %966 = vmatprep.subr.bf16.mxu0 0
  %967 = vmatpush1.bf16.msra.mxu0 %v954
  %968 = vmatprep.subr.bf16.mxu0 0
  %969 = vmatpush1.bf16.msra.mxu0 %v955
  %970 = vmatprep.subr.bf16.mxu0 0
  %971 = vmatpush1.bf16.msra.mxu0 %v956
  %972 = vmatprep.subr.bf16.mxu0 0
  %973 = vmatpush1.bf16.msra.mxu0 %v957
  %974 = vmatprep.subr.bf16.mxu0 0
  %975 = vmatpush1.bf16.msra.mxu0 0
  %976 = vmatprep.subr.bf16.mxu0 0
  %977 = vmatpush1.bf16.msra.mxu0 0
  %978 = vmatprep.subr.bf16.mxu0 0
  %979 = vmatpush1.bf16.msra.mxu0 0
  %980 = vmatprep.subr.bf16.mxu0 0
  %981 = vmatpush1.bf16.msra.mxu0 0
  %982 = vmatprep.subr.bf16.mxu0 0
  %983 = vmatpush1.bf16.msra.mxu0 0
  %984 = vmatprep.subr.bf16.mxu0 0
  %985 = vmatpush1.bf16.msra.mxu0 0
  %986 = vmatprep.subr.bf16.mxu0 0
  %987 = vmatpush1.bf16.msra.mxu0 0
  %988 = vmatprep.subr.bf16.mxu0 0
  %989 = vmatpush1.bf16.msra.mxu0 0
  %990 = vmatprep.subr.bf16.mxu0 0
  %991 = vmatpush1.bf16.msra.mxu0 0
  %992 = vmatprep.subr.bf16.mxu0 0
  %993 = vmatpush1.bf16.msra.mxu0 0
  %994 = vmatprep.subr.bf16.mxu0 0
  %995 = vmatpush1.bf16.msra.mxu0 0
  %996 = vmatprep.subr.bf16.mxu0 0
  %997 = vmatpush1.bf16.msra.mxu0 0
  %998 = vmatprep.mubr.bf16.mxu0 0
  %999 = vmatmul.mubr.bf16.gmra.mrb[0].mxu0 %v964
  %v1000 = vpop.f32.mrb[0].mxu0
  %v1001 = vadd.f32 0.0, %v1000
  %v1002 = vpop.f32.mrb[0].mxu0
  %v1003 = vpop.f32.mrb[0].mxu0
  %v1004 = vadd.f32 0.0, %v1003
  %v1005 = vpop.f32.mrb[0].mxu0
  %1006 = vdwg.mxu0
  %v1007 = vadd.f32 %v805, %v1001
  %v1008 = vadd.f32 %v806, %v1004
  %v1009 = vld [vmem:[%s12] sm:$0x1]
  %v1011 = vlaneseq
  %v1012 = vshrl.u32 %v1011, 7
  %v1013 = vsub.s32 0, %v1012
  %v1014 = vrot.slane %v1009, %v1013
  %v1016 = vadd.f32 %v1007, %v1014
  %v1017 = vadd.f32 %v1008, %v1014
  %1018 = vst.msk [vmem:[%s13] sm:$0xff] %vm49, %v1016
  %1019 = vst.msk [vmem:[%s13 + $0x8] sm:$0xff] %vm49, %v1017
  // Predicated region
  $region54: #{vit_forward.5} parent=0 // pred_check
    _
  $region55: #{vit_forward.5} parent=0 // pred_check_branch
    %1021 = sbr.rel (0) target = $region57
  $region56: #{vit_forward.5} parent=0 // pred_region
    _
  $region57: #{vit_forward.5} parent=0 // pred_fallthru
    _
  // Predicated region
  $region58: #{vit_forward.5} parent=0 // pred_check
    _
  $region59: #{vit_forward.5} parent=0 // pred_check_branch
    %1023 = sbr.rel (0) target = $region61
  $region60: #{vit_forward.5} parent=0 // pred_region
    _
  $region61: #{vit_forward.5} parent=0 // pred_fallthru
    _

// kernel: vit_forward.7
$region0: #{vit_forward.7}
  #allocation0 [shape = 'u32[]', space=smem, size = 0x4, offset = 0x4, fixed_abs, tag = 'smem constant byte address 0x4 - core index']
  #allocation1 [shape = 'u32[144,128]{1,0:T(1,128)}', space=vmem, size = 0x12000, scoped, tag = 'internal scratch']
  %s0 = inlined_call_operand.vmem [shape: f32[2,32], index: 0, kind: input, shape index: {}]
  %s1 = inlined_call_operand.vmem [shape: f32[1,32], index: 1, kind: input, shape index: {}]
  %s2 = inlined_call_operand.vmem [shape: f32[1,32], index: 2, kind: input, shape index: {}]
  %s3 = inlined_call_operand.vmem [shape: bf16[32,128], index: 3, kind: input, shape index: {}]
  %s4 = inlined_call_operand.vmem [shape: f32[1,128], index: 4, kind: input, shape index: {}]
  %s5 = inlined_call_operand.hbm [shape: f32[2,128], index: 5, kind: output, shape index: {}]
  %s6 = sld [smem:[#allocation0]]
  $region30: #{vit_forward.7} parent=0
    _
  %s8 = ssub.s32 1, %s6
  %s9 = scalar_select 0, %s8, %s6
  $region1: #{vit_forward.7} parent=0
    #allocation2 [shape = 'u8[1024]{0}', space=vmem, size = 0x400, scoped, tag = 'output window, operand 0, single buffered']
    #allocation3 [shape = 's32[1]{0}', space=sflag, size = 0x4, scoped, tag = 'scoped memory for vit_forward.7']
    %10 = vsyncpa [#allocation3], 0
    // Predicated region
    $region2: #{vit_forward.7} parent=1 // pred_check
      _
    $region3: #{vit_forward.7} parent=1 // pred_check_branch
      %12 = sbr.rel (0) target = $region5
    $region4: #{vit_forward.7} parent=1 // pred_region
      _
    $region5: #{vit_forward.7} parent=1 // pred_fallthru
      _
    // Predicated region
    $region6: #{vit_forward.7} parent=1 // pred_check
      _
    $region7: #{vit_forward.7} parent=1 // pred_check_branch
      %14 = sbr.rel (0) target = $region9
    $region8: #{vit_forward.7} parent=1 // pred_region
      _
    $region9: #{vit_forward.7} parent=1 // pred_fallthru
      _
    // Predicated region
    $region10: #{vit_forward.7} parent=1 // pred_check
      _
    $region11: #{vit_forward.7} parent=1 // pred_check_branch
      %16 = sbr.rel (0) target = $region13
    $region12: #{vit_forward.7} parent=1 // pred_region
      _
    $region13: #{vit_forward.7} parent=1 // pred_fallthru
      _
    // Predicated region
    $region14: #{vit_forward.7} parent=1 // pred_check
      _
    $region15: #{vit_forward.7} parent=1 // pred_check_branch
      %18 = sbr.rel (0) target = $region17
    $region16: #{vit_forward.7} parent=1 // pred_region
      _
    $region17: #{vit_forward.7} parent=1 // pred_fallthru
      _
    // Predicated region
    $region18: #{vit_forward.7} parent=1 // pred_check
      _
    $region19: #{vit_forward.7} parent=1 // pred_check_branch
      %20 = sbr.rel (0) target = $region21
    $region20: #{vit_forward.7} parent=1 // pred_region
      _
    $region21: #{vit_forward.7} parent=1 // pred_fallthru
      _
    %v22 = vld [vmem:[%s0] sm:$0x3]
    %v23 = vld [vmem:[%s1] sm:$0x1]
    %v24 = vld [vmem:[%s2] sm:$0x1]
    %vm25 = vcmask 254976
    %v26 = vsel %vm25, %v22, 0.0
    %27 = vadd.xlane.f32.xlu0 %v26
    %v28 = vpop.xlane.xlu0 %27
    %v29 = vrcp.pop 32.0
    %v30 = vmul.f32 %v28, %v29
    %v31 = vsub.f32 %v22, %v30
    %v32 = vmul.f32 %v31, %v31
    %v33 = vsel %vm25, %v32, 0.0
    %34 = vadd.xlane.f32.xlu0 %v33
    %v35 = vpop.xlane.xlu0 %34
    %v36 = vmul.f32 %v35, %v29
    %v37 = vadd.f32 %v36, 1e-05
    %v38 = vrsqrt.pop %v37
    %v39 = vmul.f32 %v31, %v38
    %v41 = vlaneseq
    %v42 = vshrl.u32 %v41, 7
    %v43 = vsub.s32 0, %v42
    %v44 = vrot.slane %v23, %v43
    %v46 = vmul.f32 %v39, %v44
    %v48 = vlaneseq
    %v49 = vshrl.u32 %v48, 7
    %v50 = vsub.s32 0, %v49
    %v51 = vrot.slane %v24, %v50
    %v53 = vadd.f32 %v46, %v51
    %v54 = vpack.c.bf16 %v53, %v53
    %v55 = vld [vmem:[%s3] sm:$0xf]
    %v56 = vld [vmem:[%s3 + $0x4] sm:$0xf]
    %v57 = vld [vmem:[%s3 + $0x8] sm:$0xf]
    %v58 = vld [vmem:[%s3 + $0xc] sm:$0xf]
    %v59 = vld [vmem:[%s4] sm:$0x1]
    %v61 = vlaneseq
    %v62 = vshrl.u32 %v61, 7
    %v63 = vsub.s32 0, %v62
    %v64 = vrot.slane %v59, %v63
    %v70 = vunpack.c.l.b16 %v55
    %v71 = vunpack.c.l.b16 %v56
    %v72 = vunpack.c.l.b16 %v57
    %v73 = vunpack.c.l.b16 %v58
    %v74 = vpack.c.b16 %v71, %v70
    %v75 = vpack.c.b16 %v73, %v72
    %vm78 = vcmask 261120
    %v80 = vsel %vm78, %v54, 0
    %82 = vmatprep.subr.bf16.mxu0 0
    %83 = vmatpush1.bf16.msra.mxu0 %v74
    %84 = vmatprep.subr.bf16.mxu0 0
    %85 = vmatpush1.bf16.msra.mxu0 %v75
    %86 = vmatprep.subr.bf16.mxu0 0
    %87 = vmatpush1.bf16.msra.mxu0 0
    %88 = vmatprep.subr.bf16.mxu0 0
    %89 = vmatpush1.bf16.msra.mxu0 0
    %90 = vmatprep.subr.bf16.mxu0 0
    %91 = vmatpush1.bf16.msra.mxu0 0
    %92 = vmatprep.subr.bf16.mxu0 0
    %93 = vmatpush1.bf16.msra.mxu0 0
    %94 = vmatprep.subr.bf16.mxu0 0
    %95 = vmatpush1.bf16.msra.mxu0 0
    %96 = vmatprep.subr.bf16.mxu0 0
    %97 = vmatpush1.bf16.msra.mxu0 0
    %98 = vmatprep.subr.bf16.mxu0 0
    %99 = vmatpush1.bf16.msra.mxu0 0
    %100 = vmatprep.subr.bf16.mxu0 0
    %101 = vmatpush1.bf16.msra.mxu0 0
    %102 = vmatprep.subr.bf16.mxu0 0
    %103 = vmatpush1.bf16.msra.mxu0 0
    %104 = vmatprep.subr.bf16.mxu0 0
    %105 = vmatpush1.bf16.msra.mxu0 0
    %106 = vmatprep.subr.bf16.mxu0 0
    %107 = vmatpush1.bf16.msra.mxu0 0
    %108 = vmatprep.subr.bf16.mxu0 0
    %109 = vmatpush1.bf16.msra.mxu0 0
    %110 = vmatprep.subr.bf16.mxu0 0
    %111 = vmatpush1.bf16.msra.mxu0 0
    %112 = vmatprep.subr.bf16.mxu0 0
    %113 = vmatpush1.bf16.msra.mxu0 0
    %114 = vmatprep.mubr.bf16.mxu0 0
    %115 = vmatmul.mubr.bf16.gmra.mrb[0].mxu0 %v80
    %v116 = vpop.f32.mrb[0].mxu0
    %v117 = vadd.f32 %v64, %v116
    %v118 = vpop.f32.mrb[0].mxu0
    %v119 = vpop.f32.mrb[0].mxu0
    %v120 = vpop.f32.mrb[0].mxu0
    %121 = vdwg.mxu0
    %122 = vst [vmem:[#allocation2] sm:$0x3] %v117
    // Predicated region
    $region22: #{vit_forward.7} parent=1 // pred_check
      _
    $region23: #{vit_forward.7} parent=1 // pred_check_branch
      %124 = sbr.rel (0) target = $region25
    $region24: #{vit_forward.7} parent=1 // pred_region
      %s126 = ssub.s32 32, 32
      %127 = vsyncadd [#allocation3], %s126
      %s129 = sshll.u32 [#allocation2], 4
      %s130 = int_to_ptr.vmem [resolvable:$true] %s129
      %132 = dma.vmem_to_hbm [thread:$0]  %s130, 32, %s5, [#allocation3]
    $region25: #{vit_forward.7} parent=1 // pred_fallthru
      _
    // Predicated region
    $region26: #{vit_forward.7} parent=1 // pred_check
      _
    $region27: #{vit_forward.7} parent=1 // pred_check_branch
      %134 = sbr.rel (0) target = $region29
    $region28: #{vit_forward.7} parent=1 // pred_region
      %135 = dma.done [#allocation3], 32
    $region29: #{vit_forward.7} parent=1 // pred_fallthru
      _
    %136 = vsyncpa [#allocation3], 1

// kernel: vit_forward.4
$region0: #{vit_forward.4}
  #allocation0 [shape = 'u32[]', space=smem, size = 0x4, offset = 0x4, fixed_abs, tag = 'smem constant byte address 0x4 - core index']
  #allocation1 [shape = 'u32[144,128]{1,0:T(1,128)}', space=vmem, size = 0x12000, scoped, tag = 'internal scratch']
  %s0 = inlined_call_operand.vmem [shape: f32[2,4,256], index: 0, kind: input, shape index: {}]
  %s1 = inlined_call_operand.vmem [shape: bf16[256,32], index: 1, kind: input, shape index: {}]
  %s2 = inlined_call_operand.vmem [shape: f32[1,32], index: 2, kind: input, shape index: {}]
  %s3 = inlined_call_operand.vmem [shape: f32[1,32], index: 3, kind: input, shape index: {}]
  %s4 = inlined_call_operand.vmem [shape: f32[1,32], index: 4, kind: input, shape index: {}]
  %s5 = inlined_call_operand.vmem [shape: f32[1,32], index: 5, kind: input, shape index: {}]
  %s6 = inlined_call_operand.vmem [shape: f32[4,32], index: 6, kind: input, shape index: {}]
  %s7 = inlined_call_operand.vmem [shape: f32[16,32], index: 7, kind: output, shape index: {}]
  %s8 = sld [smem:[#allocation0]]
  $region61: #{vit_forward.4} parent=0
    _
  %s10 = ssub.s32 1, %s8
  %s11 = scalar_select 0, %s10, %s8
  loop: start=0, step=1, limit=4
  $region2: #{vit_forward.4} parent=0 // loop_pre_header
    _
  $region3: #{vit_forward.4} parent=0 // loop_header
    %s13 = sphi 0, %s17
    %p14 = scmp.ge.s32.totalorder %s13, 4
    %s23 = sphi 0, %s25
    %s26 = sphi 0, %s23
    %s27 = sphi 0, %s26
    %s43 = sphi 0, %s27
    %s47 = sphi 0, %s47
    %s49 = sphi 0, %s47
    %s50 = sphi 0, %s49
    %s64 = sphi 0, %s50
    %s68 = sphi 0, %s68
    %s70 = sphi 0, %s68
    %s71 = sphi 0, %s70
    %s85 = sphi 0, %s71
    %s89 = sphi 0, %s89
    %s91 = sphi 0, %s89
    %s92 = sphi 0, %s91
    %s106 = sphi 0, %s92
    %s110 = sphi 0, %s110
    %s112 = sphi 0, %s110
    %s113 = sphi 0, %s112
    %s127 = sphi 0, %s113
    %s131 = sphi 0, %s131
    %s133 = sphi 0, %s131
    %s134 = sphi 0, %s133
    %s148 = sphi 0, %s134
    %s152 = sphi 0, %s152
    %s154 = sphi 0, %s152
    %s155 = sphi 0, %s154
    %s169 = sphi 0, %s155
    %s175 = sphi 0, %s177
    %s178 = sphi 0, %s175
    %s179 = sphi 0, %s178
    %s195 = sphi 0, %s179
  $region4: #{vit_forward.4} parent=0 // loop_header_branch
    %16 = sbr.rel (%p14) target = $region8
  $region5: #{vit_forward.4} parent=0 // loop_body
    %s18 = ssub.s32 %s13, 1
    %s19 = ssub.s32 %s13, 2
    %s20 = sadd.s32 %s13, 1
    %s21 = ssub.s32 %s13, %s20
    %p22 = scmp.eq.s32.totalorder %s21, 0
    %s24 = sadd.s32 %s23, 1
    %s25 = scalar_select %p22, %s23, %s24
    %p28 = pneg %p22
    %p29 = scmp.eq.s32.totalorder %s13, 1
    %p30 = por %p28, %p29
    %p31 = scmp.ne.s32.totalorder %s23, %s26
    %p32 = scmp.eq.s32.totalorder %s13, 0
    %p33 = por %p31, %p32
    %p34 = scmp.ne.s32.totalorder %s23, %s26
    %p35 = scmp.eq.s32.totalorder %s18, 1
    %p36 = por %p34, %p35
    %p37 = scmp.ne.s32.totalorder %s26, %s27
    %p38 = scmp.eq.s32.totalorder %s18, 0
    %p39 = por %p37, %p38
    %p40 = scmp.ne.s32.totalorder %s26, %s27
    %p41 = scmp.eq.s32.totalorder %s19, 1
    %p42 = por %p40, %p41
    %p44 = scmp.ne.s32.totalorder %s27, %s43
    %p45 = scmp.eq.s32.totalorder %s19, 0
    %p46 = por %p44, %p45
    %s48 = sadd.s32 %s47, 1
    %p51 = scmp.eq.s32.totalorder %s13, 1
    %p52 = scmp.ne.s32.totalorder %s47, %s49
    %p53 = scmp.eq.s32.totalorder %s13, 0
    %p54 = por %p52, %p53
    %p55 = scmp.ne.s32.totalorder %s47, %s49
    %p56 = scmp.eq.s32.totalorder %s18, 1
    %p57 = por %p55, %p56
    %p58 = scmp.ne.s32.totalorder %s49, %s50
    %p59 = scmp.eq.s32.totalorder %s18, 0
    %p60 = por %p58, %p59
    %p61 = scmp.ne.s32.totalorder %s49, %s50
    %p62 = scmp.eq.s32.totalorder %s19, 1
    %p63 = por %p61, %p62
    %p65 = scmp.ne.s32.totalorder %s50, %s64
    %p66 = scmp.eq.s32.totalorder %s19, 0
    %p67 = por %p65, %p66
    %s69 = sadd.s32 %s68, 1
    %p72 = scmp.eq.s32.totalorder %s13, 1
    %p73 = scmp.ne.s32.totalorder %s68, %s70
    %p74 = scmp.eq.s32.totalorder %s13, 0
    %p75 = por %p73, %p74
    %p76 = scmp.ne.s32.totalorder %s68, %s70
    %p77 = scmp.eq.s32.totalorder %s18, 1
    %p78 = por %p76, %p77
    %p79 = scmp.ne.s32.totalorder %s70, %s71
    %p80 = scmp.eq.s32.totalorder %s18, 0
    %p81 = por %p79, %p80
    %p82 = scmp.ne.s32.totalorder %s70, %s71
    %p83 = scmp.eq.s32.totalorder %s19, 1
    %p84 = por %p82, %p83
    %p86 = scmp.ne.s32.totalorder %s71, %s85
    %p87 = scmp.eq.s32.totalorder %s19, 0
    %p88 = por %p86, %p87
    %s90 = sadd.s32 %s89, 1
    %p93 = scmp.eq.s32.totalorder %s13, 1
    %p94 = scmp.ne.s32.totalorder %s89, %s91
    %p95 = scmp.eq.s32.totalorder %s13, 0
    %p96 = por %p94, %p95
    %p97 = scmp.ne.s32.totalorder %s89, %s91
    %p98 = scmp.eq.s32.totalorder %s18, 1
    %p99 = por %p97, %p98
    %p100 = scmp.ne.s32.totalorder %s91, %s92
    %p101 = scmp.eq.s32.totalorder %s18, 0
    %p102 = por %p100, %p101
    %p103 = scmp.ne.s32.totalorder %s91, %s92
    %p104 = scmp.eq.s32.totalorder %s19, 1
    %p105 = por %p103, %p104
    %p107 = scmp.ne.s32.totalorder %s92, %s106
    %p108 = scmp.eq.s32.totalorder %s19, 0
    %p109 = por %p107, %p108
    %s111 = sadd.s32 %s110, 1
    %p114 = scmp.eq.s32.totalorder %s13, 1
    %p115 = scmp.ne.s32.totalorder %s110, %s112
    %p116 = scmp.eq.s32.totalorder %s13, 0
    %p117 = por %p115, %p116
    %p118 = scmp.ne.s32.totalorder %s110, %s112
    %p119 = scmp.eq.s32.totalorder %s18, 1
    %p120 = por %p118, %p119
    %p121 = scmp.ne.s32.totalorder %s112, %s113
    %p122 = scmp.eq.s32.totalorder %s18, 0
    %p123 = por %p121, %p122
    %p124 = scmp.ne.s32.totalorder %s112, %s113
    %p125 = scmp.eq.s32.totalorder %s19, 1
    %p126 = por %p124, %p125
    %p128 = scmp.ne.s32.totalorder %s113, %s127
    %p129 = scmp.eq.s32.totalorder %s19, 0
    %p130 = por %p128, %p129
    %s132 = sadd.s32 %s131, 1
    %p135 = scmp.eq.s32.totalorder %s13, 1
    %p136 = scmp.ne.s32.totalorder %s131, %s133
    %p137 = scmp.eq.s32.totalorder %s13, 0
    %p138 = por %p136, %p137
    %p139 = scmp.ne.s32.totalorder %s131, %s133
    %p140 = scmp.eq.s32.totalorder %s18, 1
    %p141 = por %p139, %p140
    %p142 = scmp.ne.s32.totalorder %s133, %s134
    %p143 = scmp.eq.s32.totalorder %s18, 0
    %p144 = por %p142, %p143
    %p145 = scmp.ne.s32.totalorder %s133, %s134
    %p146 = scmp.eq.s32.totalorder %s19, 1
    %p147 = por %p145, %p146
    %p149 = scmp.ne.s32.totalorder %s134, %s148
    %p150 = scmp.eq.s32.totalorder %s19, 0
    %p151 = por %p149, %p150
    %s153 = sadd.s32 %s152, 1
    %p156 = scmp.eq.s32.totalorder %s13, 1
    %p157 = scmp.ne.s32.totalorder %s152, %s154
    %p158 = scmp.eq.s32.totalorder %s13, 0
    %p159 = por %p157, %p158
    %p160 = scmp.ne.s32.totalorder %s152, %s154
    %p161 = scmp.eq.s32.totalorder %s18, 1
    %p162 = por %p160, %p161
    %p163 = scmp.ne.s32.totalorder %s154, %s155
    %p164 = scmp.eq.s32.totalorder %s18, 0
    %p165 = por %p163, %p164
    %p166 = scmp.ne.s32.totalorder %s154, %s155
    %p167 = scmp.eq.s32.totalorder %s19, 1
    %p168 = por %p166, %p167
    %p170 = scmp.ne.s32.totalorder %s155, %s169
    %p171 = scmp.eq.s32.totalorder %s19, 0
    %p172 = por %p170, %p171
    %s173 = ssub.s32 %s13, %s20
    %p174 = scmp.eq.s32.totalorder %s173, 0
    %s176 = sadd.s32 %s175, 1
    %s177 = scalar_select %p174, %s175, %s176
    %p180 = pneg %p174
    %p181 = scmp.eq.s32.totalorder %s13, 1
    %p182 = por %p180, %p181
    %p183 = scmp.ne.s32.totalorder %s175, %s178
    %p184 = scmp.eq.s32.totalorder %s13, 0
    %p185 = por %p183, %p184
    %p186 = scmp.ne.s32.totalorder %s175, %s178
    %p187 = scmp.eq.s32.totalorder %s18, 1
    %p188 = por %p186, %p187
    %p189 = scmp.ne.s32.totalorder %s178, %s179
    %p190 = scmp.eq.s32.totalorder %s18, 0
    %p191 = por %p189, %p190
    %p192 = scmp.ne.s32.totalorder %s178, %s179
    %p193 = scmp.eq.s32.totalorder %s19, 1
    %p194 = por %p192, %p193
    %p196 = scmp.ne.s32.totalorder %s179, %s195
    %p197 = scmp.eq.s32.totalorder %s19, 0
    %p198 = por %p196, %p197
    %p199 = scmp.le.s32.totalorder 1, %s13
    %p200 = scmp.lt.s32.totalorder %s13, 3
    %p201 = pnand %p199, %p200
    %p202 = pneg %p201
    // Predicated region
    $region9: #{vit_forward.4} parent=5 // pred_check
      _
    $region10: #{vit_forward.4} parent=5 // pred_check_branch
      %204 = sbr.rel (%p201) target = $region12
    $region11: #{vit_forward.4} parent=5 // pred_region
      %s205 = ssub.s32 %s13, 1
      // Predicated region
      $region13: #{vit_forward.4} parent=11 // pred_check
        %p206 = pneg %p60
      $region14: #{vit_forward.4} parent=11 // pred_check_branch
        %208 = sbr.rel (%p206) target = $region16
      $region15: #{vit_forward.4} parent=11 // pred_region
        _
      $region16: #{vit_forward.4} parent=11 // pred_fallthru
        _
      // Predicated region
      $region17: #{vit_forward.4} parent=11 // pred_check
        %p209 = pneg %p81
      $region18: #{vit_forward.4} parent=11 // pred_check_branch
        %211 = sbr.rel (%p209) target = $region20
      $region19: #{vit_forward.4} parent=11 // pred_region
        _
      $region20: #{vit_forward.4} parent=11 // pred_fallthru
        _
      // Predicated region
      $region21: #{vit_forward.4} parent=11 // pred_check
        %p212 = pneg %p102
      $region22: #{vit_forward.4} parent=11 // pred_check_branch
        %214 = sbr.rel (%p212) target = $region24
      $region23: #{vit_forward.4} parent=11 // pred_region
        _
      $region24: #{vit_forward.4} parent=11 // pred_fallthru
        _
      // Predicated region
      $region25: #{vit_forward.4} parent=11 // pred_check
        %p215 = pneg %p123
      $region26: #{vit_forward.4} parent=11 // pred_check_branch
        %217 = sbr.rel (%p215) target = $region28
      $region27: #{vit_forward.4} parent=11 // pred_region
        _
      $region28: #{vit_forward.4} parent=11 // pred_fallthru
        _
      // Predicated region
      $region29: #{vit_forward.4} parent=11 // pred_check
        %p218 = pneg %p144
      $region30: #{vit_forward.4} parent=11 // pred_check_branch
        %220 = sbr.rel (%p218) target = $region32
      $region31: #{vit_forward.4} parent=11 // pred_region
        _
      $region32: #{vit_forward.4} parent=11 // pred_fallthru
        _
      // Predicated region
      $region33: #{vit_forward.4} parent=11 // pred_check
        %p221 = pneg %p165
      $region34: #{vit_forward.4} parent=11 // pred_check_branch
        %223 = sbr.rel (%p221) target = $region36
      $region35: #{vit_forward.4} parent=11 // pred_region
        _
      $region36: #{vit_forward.4} parent=11 // pred_fallthru
        _
    $region12: #{vit_forward.4} parent=5 // pred_fallthru
      _
    %p224 = scmp.lt.s32.totalorder %s13, 2
    // Predicated region
    $region37: #{vit_forward.4} parent=5 // pred_check
      %p225 = pneg %p224
    $region38: #{vit_forward.4} parent=5 // pred_check_branch
      %227 = sbr.rel (%p225) target = $region40
    $region39: #{vit_forward.4} parent=5 // pred_region
      // Predicated region
      $region41: #{vit_forward.4} parent=39 // pred_check
        %p228 = pneg %p33
      $region42: #{vit_forward.4} parent=39 // pred_check_branch
        %230 = sbr.rel (%p228) target = $region44
      $region43: #{vit_forward.4} parent=39 // pred_region
        %p231 = scmp.lt.s32.totalorder %s13, 1
        %s232 = scalar_select %p231, %s13, 1
        %s233 = smul.addr %s232, 2
        %s234 = smul.addr %s233, 4
        %s235 = scalar_lea.vmem %s0, %s234
      $region44: #{vit_forward.4} parent=39 // pred_fallthru
        _
    $region40: #{vit_forward.4} parent=5 // pred_fallthru
      _
    %p236 = scmp.le.s32.totalorder 1, %s13
    %p237 = scmp.lt.s32.totalorder %s13, 3
    %p238 = pnand %p236, %p237
    %p239 = pneg %p238
    // Predicated region
    $region45: #{vit_forward.4} parent=5 // pred_check
      _
    $region46: #{vit_forward.4} parent=5 // pred_check_branch
      %241 = sbr.rel (%p238) target = $region48
    $region47: #{vit_forward.4} parent=5 // pred_region
      %s242 = ssub.s32 %s13, 1
      %p243 = scmp.lt.s32.totalorder %s18, 1
      %s244 = scalar_select %p243, %s18, 1
      %s245 = smul.addr %s244, 2
      %s246 = smul.addr %s245, 4
      %s247 = scalar_lea.vmem %s0, %s246
      %p248 = pneg %p39
      %p249 = pneg %p36
      %p250 = pneg %p60
      %p251 = pneg %p57
      %p252 = pneg %p81
      %p253 = pneg %p78
      %p254 = pneg %p102
      %p255 = pneg %p99
      %p256 = pneg %p123
      %p257 = pneg %p120
      %p258 = pneg %p144
      %p259 = pneg %p141
      %p260 = pneg %p165
      %p261 = pneg %p162
      %p262 = pneg %p191
      %p263 = pneg %p188
      %p264 = scmp.lt.s32.totalorder %s18, 1
      %s265 = scalar_select %p264, %s18, 1
      %s266 = smul.addr %s265, 8
      %s267 = scalar_lea.vmem %s7, %s266
      %p268 = scmp.lt.s32.totalorder %s18, 1
      %s269 = scalar_select %p268, %s18, 1
      %s270 = smul.addr %s269, 2
      %s271 = smul.addr %s270, 4
      %s272 = scalar_lea.vmem %s0, %s271
      %p273 = scmp.lt.s32.totalorder %s18, 1
      %s274 = scalar_select %p273, %s18, 1
      %s275 = smul.addr %s274, 8
      %s276 = scalar_lea.vmem %s7, %s275
      %v278 = vld [vmem:[%s272] sm:$0xff]
      %v280 = vcombine.high %v278, %v278
      %v282 = vpack.c.bf16 %v278, %v278
      %v283 = vpack.c.bf16 %v280, %v280
      %v284 = vld [vmem:[%s1] sm:$0xf]
      %v285 = vld [vmem:[%s1 + $0x4] sm:$0xf]
      %v286 = vld [vmem:[%s1 + $0x8] sm:$0xf]
      %v287 = vld [vmem:[%s1 + $0xc] sm:$0xf]
      %v288 = vld [vmem:[%s1 + $0x10] sm:$0xf]
      %v289 = vld [vmem:[%s1 + $0x14] sm:$0xf]
      %v290 = vld [vmem:[%s1 + $0x18] sm:$0xf]
      %v291 = vld [vmem:[%s1 + $0x1c] sm:$0xf]
      %v292 = vld [vmem:[%s1 + $0x20] sm:$0xf]
      %v293 = vld [vmem:[%s1 + $0x24] sm:$0xf]
      %v294 = vld [vmem:[%s1 + $0x28] sm:$0xf]
      %v295 = vld [vmem:[%s1 + $0x2c] sm:$0xf]
      %v296 = vld [vmem:[%s1 + $0x30] sm:$0xf]
      %v297 = vld [vmem:[%s1 + $0x34] sm:$0xf]
      %v298 = vld [vmem:[%s1 + $0x38] sm:$0xf]
      %v299 = vld [vmem:[%s1 + $0x3c] sm:$0xf]
      %v300 = vld [vmem:[%s1 + $0x40] sm:$0xf]
      %v301 = vld [vmem:[%s1 + $0x44] sm:$0xf]
      %v302 = vld [vmem:[%s1 + $0x48] sm:$0xf]
      %v303 = vld [vmem:[%s1 + $0x4c] sm:$0xf]
      %v304 = vld [vmem:[%s1 + $0x50] sm:$0xf]
      %v305 = vld [vmem:[%s1 + $0x54] sm:$0xf]
      %v306 = vld [vmem:[%s1 + $0x58] sm:$0xf]
      %v307 = vld [vmem:[%s1 + $0x5c] sm:$0xf]
      %v308 = vld [vmem:[%s1 + $0x60] sm:$0xf]
      %v309 = vld [vmem:[%s1 + $0x64] sm:$0xf]
      %v310 = vld [vmem:[%s1 + $0x68] sm:$0xf]
      %v311 = vld [vmem:[%s1 + $0x6c] sm:$0xf]
      %v312 = vld [vmem:[%s1 + $0x70] sm:$0xf]
      %v313 = vld [vmem:[%s1 + $0x74] sm:$0xf]
      %v314 = vld [vmem:[%s1 + $0x78] sm:$0xf]
      %v315 = vld [vmem:[%s1 + $0x7c] sm:$0xf]
      %v316 = vld [vmem:[%s2] sm:$0x1]
      %v318 = vlaneseq
      %v319 = vshrl.u32 %v318, 7
      %v320 = vsub.s32 0, %v319
      %v321 = vrot.slane %v316, %v320
      %v355 = vunpack.c.l.b16 %v284
      %v356 = vunpack.c.l.b16 %v285
      %v357 = vunpack.c.l.b16 %v286
      %v358 = vunpack.c.l.b16 %v287
      %v359 = vunpack.c.l.b16 %v288
      %v360 = vunpack.c.l.b16 %v289
      %v361 = vunpack.c.l.b16 %v290
      %v362 = vunpack.c.l.b16 %v291
      %v363 = vunpack.c.l.b16 %v292
      %v364 = vunpack.c.l.b16 %v293
      %v365 = vunpack.c.l.b16 %v294
      %v366 = vunpack.c.l.b16 %v295
      %v367 = vunpack.c.l.b16 %v296
      %v368 = vunpack.c.l.b16 %v297
      %v369 = vunpack.c.l.b16 %v298
      %v370 = vunpack.c.l.b16 %v299
      %v371 = vunpack.c.l.b16 %v300
      %v372 = vunpack.c.l.b16 %v301
      %v373 = vunpack.c.l.b16 %v302
      %v374 = vunpack.c.l.b16 %v303
      %v375 = vunpack.c.l.b16 %v304
      %v376 = vunpack.c.l.b16 %v305
      %v377 = vunpack.c.l.b16 %v306
      %v378 = vunpack.c.l.b16 %v307
      %v379 = vunpack.c.l.b16 %v308
      %v380 = vunpack.c.l.b16 %v309
      %v381 = vunpack.c.l.b16 %v310
      %v382 = vunpack.c.l.b16 %v311
      %v383 = vunpack.c.l.b16 %v312
      %v384 = vunpack.c.l.b16 %v313
      %v385 = vunpack.c.l.b16 %v314
      %v386 = vunpack.c.l.b16 %v315
      %v387 = vpack.c.b16 %v356, %v355
      %v388 = vpack.c.b16 %v358, %v357
      %v389 = vpack.c.b16 %v360, %v359
      %v390 = vpack.c.b16 %v362, %v361
      %v391 = vpack.c.b16 %v364, %v363
      %v392 = vpack.c.b16 %v366, %v365
      %v393 = vpack.c.b16 %v368, %v367
      %v394 = vpack.c.b16 %v370, %v369
      %v395 = vpack.c.b16 %v372, %v371
      %v396 = vpack.c.b16 %v374, %v373
      %v397 = vpack.c.b16 %v376, %v375
      %v398 = vpack.c.b16 %v378, %v377
      %v399 = vpack.c.b16 %v380, %v379
      %v400 = vpack.c.b16 %v382, %v381
      %v401 = vpack.c.b16 %v384, %v383
      %v402 = vpack.c.b16 %v386, %v385
      %419 = vmatprep.subr.bf16.mxu0 0
      %420 = vmatpush1.bf16.msra.mxu0 %v387
      %421 = vmatprep.subr.bf16.mxu0 0
      %422 = vmatpush1.bf16.msra.mxu0 %v388
      %423 = vmatprep.subr.bf16.mxu0 0
      %424 = vmatpush1.bf16.msra.mxu0 %v389
      %425 = vmatprep.subr.bf16.mxu0 0
      %426 = vmatpush1.bf16.msra.mxu0 %v390
      %427 = vmatprep.subr.bf16.mxu0 0
      %428 = vmatpush1.bf16.msra.mxu0 %v391
      %429 = vmatprep.subr.bf16.mxu0 0
      %430 = vmatpush1.bf16.msra.mxu0 %v392
      %431 = vmatprep.subr.bf16.mxu0 0
      %432 = vmatpush1.bf16.msra.mxu0 %v393
      %433 = vmatprep.subr.bf16.mxu0 0
      %434 = vmatpush1.bf16.msra.mxu0 %v394
      %435 = vmatprep.subr.bf16.mxu0 0
      %436 = vmatpush1.bf16.msra.mxu0 %v395
      %437 = vmatprep.subr.bf16.mxu0 0
      %438 = vmatpush1.bf16.msra.mxu0 %v396
      %439 = vmatprep.subr.bf16.mxu0 0
      %440 = vmatpush1.bf16.msra.mxu0 %v397
      %441 = vmatprep.subr.bf16.mxu0 0
      %442 = vmatpush1.bf16.msra.mxu0 %v398
      %443 = vmatprep.subr.bf16.mxu0 0
      %444 = vmatpush1.bf16.msra.mxu0 %v399
      %445 = vmatprep.subr.bf16.mxu0 0
      %446 = vmatpush1.bf16.msra.mxu0 %v400
      %447 = vmatprep.subr.bf16.mxu0 0
      %448 = vmatpush1.bf16.msra.mxu0 %v401
      %449 = vmatprep.subr.bf16.mxu0 0
      %450 = vmatpush1.bf16.msra.mxu0 %v402
      %451 = vmatprep.mubr.bf16.mxu0 %v283
      %452 = vmatmul.mubr.bf16.gmra.mrb[0].mxu0 %v282
      %v453 = vpop.f32.mrb[0].mxu0
      %v454 = vadd.f32 %v321, %v453
      %v455 = vpop.f32.mrb[0].mxu0
      %v456 = vpop.f32.mrb[0].mxu0
      %v457 = vpop.f32.mrb[0].mxu0
      %458 = vdwg.mxu0
      %v459 = vld [vmem:[%s3] sm:$0x1]
      %v460 = vld [vmem:[%s4] sm:$0x1]
      %vm461 = vcmask 257024
      %v462 = vsel %vm461, %v454, 0.0
      %463 = vadd.xlane.f32.xlu0 %v462
      %v464 = vpop.xlane.xlu0 %463
      %v465 = vrcp.pop 32.0
      %v466 = vmul.f32 %v464, %v465
      %v467 = vsub.f32 %v454, %v466
      %v468 = vmul.f32 %v467, %v467
      %v469 = vsel %vm461, %v468, 0.0
      %470 = vadd.xlane.f32.xlu0 %v469
      %v471 = vpop.xlane.xlu0 %470
      %v472 = vmul.f32 %v471, %v465
      %v473 = vadd.f32 %v472, 1e-05
      %v474 = vrsqrt.pop %v473
      %v475 = vmul.f32 %v467, %v474
      %v477 = vlaneseq
      %v478 = vshrl.u32 %v477, 7
      %v479 = vsub.s32 0, %v478
      %v480 = vrot.slane %v459, %v479
      %v482 = vmul.f32 %v475, %v480
      %v484 = vlaneseq
      %v485 = vshrl.u32 %v484, 7
      %v486 = vsub.s32 0, %v485
      %v487 = vrot.slane %v460, %v486
      %v489 = vadd.f32 %v482, %v487
      %v490 = vld [vmem:[%s6] sm:$0xf]
      %v491 = vadd.f32 %v489, %v490
      %v492 = vld [vmem:[%s5] sm:$0x1]
      %vm493 = vcmask 253952
      %494 = vst.msk [vmem:[%s276] sm:$0x1] %vm493, %v492
      %495 = vst.msk [vmem:[%s276 + $0x1] sm:$0xf] %vm461, %v491
      %vm496 = vcmask 256000
      %497 = vst.msk [vmem:[%s276 + $0x5] sm:$0x7] %vm496, 0.0
      %p498 = scmp.lt.s32.totalorder %s18, 1
      %s499 = scalar_select %p498, %s18, 1
      %s500 = smul.addr %s499, 8
      %s501 = scalar_lea.vmem %s7, %s500
      // Predicated region
      $region49: #{vit_forward.4} parent=47 // pred_check
        %p502 = pneg %p188
      $region50: #{vit_forward.4} parent=47 // pred_check_branch
        %504 = sbr.rel (%p502) target = $region52
      $region51: #{vit_forward.4} parent=47 // pred_region
        _
      $region52: #{vit_forward.4} parent=47 // pred_fallthru
        _
    $region48: #{vit_forward.4} parent=5 // pred_fallthru
      _
    %p505 = scmp.le.s32.totalorder 2, %s13
    // Predicated region
    $region53: #{vit_forward.4} parent=5 // pred_check
      %p506 = pneg %p505
    $region54: #{vit_forward.4} parent=5 // pred_check_branch
      %508 = sbr.rel (%p506) target = $region56
    $region55: #{vit_forward.4} parent=5 // pred_region
      %s509 = ssub.s32 %s13, 2
      // Predicated region
      $region57: #{vit_forward.4} parent=55 // pred_check
        %p510 = pneg %p194
      $region58: #{vit_forward.4} parent=55 // pred_check_branch
        %512 = sbr.rel (%p510) target = $region60
      $region59: #{vit_forward.4} parent=55 // pred_region
        %p513 = scmp.lt.s32.totalorder %s19, 1
        %s514 = scalar_select %p513, %s19, 1
        %s515 = smul.addr %s514, 8
        %s516 = scalar_lea.vmem %s7, %s515
      $region60: #{vit_forward.4} parent=55 // pred_fallthru
        _
    $region56: #{vit_forward.4} parent=5 // pred_fallthru
      _
  $region6: #{vit_forward.4} parent=0 // loop_footer
    %s17 = sadd.s32 1, %s13
  $region7: #{vit_forward.4} parent=0 // loop_footer_branch
    %12 = sbr.rel target = $region3
  $region8: #{vit_forward.4} parent=0 // loop_exit
    _

// kernel: vit_forward.5
$region0: #{vit_forward.5}
  #allocation0 [shape = 'u32[]', space=smem, size = 0x4, offset = 0x4, fixed_abs, tag = 'smem constant byte address 0x4 - core index']
  #allocation1 [shape = 'u32[144,128]{1,0:T(1,128)}', space=vmem, size = 0x12000, scoped, tag = 'internal scratch']
  %s0 = inlined_call_operand.vmem [shape: f32[16,32], index: 0, kind: input, shape index: {}]
  %s1 = inlined_call_operand.vmem [shape: f32[1,32], index: 1, kind: input, shape index: {}]
  %s2 = inlined_call_operand.vmem [shape: f32[1,32], index: 2, kind: input, shape index: {}]
  %s3 = inlined_call_operand.vmem [shape: bf16[2,32,48], index: 3, kind: input, shape index: {}]
  %s4 = inlined_call_operand.vmem [shape: f32[2,1,16], index: 4, kind: input, shape index: {}]
  %s5 = inlined_call_operand.vmem [shape: bf16[2,16,32], index: 5, kind: input, shape index: {}]
  %s6 = inlined_call_operand.vmem [shape: f32[1,32], index: 6, kind: input, shape index: {}]
  %s7 = inlined_call_operand.vmem [shape: f32[1,32], index: 7, kind: input, shape index: {}]
  %s8 = inlined_call_operand.vmem [shape: f32[1,32], index: 8, kind: input, shape index: {}]
  %s9 = inlined_call_operand.vmem [shape: bf16[32,64], index: 9, kind: input, shape index: {}]
  %s10 = inlined_call_operand.vmem [shape: f32[1,64], index: 10, kind: input, shape index: {}]
  %s11 = inlined_call_operand.vmem [shape: bf16[64,32], index: 11, kind: input, shape index: {}]
  %s12 = inlined_call_operand.vmem [shape: f32[1,32], index: 12, kind: input, shape index: {}]
  %s13 = inlined_call_operand.vmem [shape: f32[16,32], index: 13, kind: output, shape index: {}]
  %s14 = sld [smem:[#allocation0]]
  $region62: #{vit_forward.5} parent=0
    _
  %s16 = ssub.s32 1, %s14
  %s17 = scalar_select 0, %s16, %s14
  // Predicated region
  $region2: #{vit_forward.5} parent=0 // pred_check
    _
  $region3: #{vit_forward.5} parent=0 // pred_check_branch
    %19 = sbr.rel (0) target = $region5
  $region4: #{vit_forward.5} parent=0 // pred_region
    _
  $region5: #{vit_forward.5} parent=0 // pred_fallthru
    _
  // Predicated region
  $region6: #{vit_forward.5} parent=0 // pred_check
    _
  $region7: #{vit_forward.5} parent=0 // pred_check_branch
    %21 = sbr.rel (0) target = $region9
  $region8: #{vit_forward.5} parent=0 // pred_region
    _
  $region9: #{vit_forward.5} parent=0 // pred_fallthru
    _
  // Predicated region
  $region10: #{vit_forward.5} parent=0 // pred_check
    _
  $region11: #{vit_forward.5} parent=0 // pred_check_branch
    %23 = sbr.rel (0) target = $region13
  $region12: #{vit_forward.5} parent=0 // pred_region
    _
  $region13: #{vit_forward.5} parent=0 // pred_fallthru
    _
  // Predicated region
  $region14: #{vit_forward.5} parent=0 // pred_check
    _
  $region15: #{vit_forward.5} parent=0 // pred_check_branch
    %25 = sbr.rel (0) target = $region17
  $region16: #{vit_forward.5} parent=0 // pred_region
    _
  $region17: #{vit_forward.5} parent=0 // pred_fallthru
    _
  // Predicated region
  $region18: #{vit_forward.5} parent=0 // pred_check
    _
  $region19: #{vit_forward.5} parent=0 // pred_check_branch
    %27 = sbr.rel (0) target = $region21
  $region20: #{vit_forward.5} parent=0 // pred_region
    _
  $region21: #{vit_forward.5} parent=0 // pred_fallthru
    _
  // Predicated region
  $region22: #{vit_forward.5} parent=0 // pred_check
    _
  $region23: #{vit_forward.5} parent=0 // pred_check_branch
    %29 = sbr.rel (0) target = $region25
  $region24: #{vit_forward.5} parent=0 // pred_region
    _
  $region25: #{vit_forward.5} parent=0 // pred_fallthru
    _
  // Predicated region
  $region26: #{vit_forward.5} parent=0 // pred_check
    _
  $region27: #{vit_forward.5} parent=0 // pred_check_branch
    %31 = sbr.rel (0) target = $region29
  $region28: #{vit_forward.5} parent=0 // pred_region
    _
  $region29: #{vit_forward.5} parent=0 // pred_fallthru
    _
  // Predicated region
  $region30: #{vit_forward.5} parent=0 // pred_check
    _
  $region31: #{vit_forward.5} parent=0 // pred_check_branch
    %33 = sbr.rel (0) target = $region33
  $region32: #{vit_forward.5} parent=0 // pred_region
    _
  $region33: #{vit_forward.5} parent=0 // pred_fallthru
    _
  // Predicated region
  $region34: #{vit_forward.5} parent=0 // pred_check
    _
  $region35: #{vit_forward.5} parent=0 // pred_check_branch
    %35 = sbr.rel (0) target = $region37
  $region36: #{vit_forward.5} parent=0 // pred_region
    _
  $region37: #{vit_forward.5} parent=0 // pred_fallthru
    _
  // Predicated region
  $region38: #{vit_forward.5} parent=0 // pred_check
    _
  $region39: #{vit_forward.5} parent=0 // pred_check_branch
    %37 = sbr.rel (0) target = $region41
  $region40: #{vit_forward.5} parent=0 // pred_region
    _
  $region41: #{vit_forward.5} parent=0 // pred_fallthru
    _
  // Predicated region
  $region42: #{vit_forward.5} parent=0 // pred_check
    _
  $region43: #{vit_forward.5} parent=0 // pred_check_branch
    %39 = sbr.rel (0) target = $region45
  $region44: #{vit_forward.5} parent=0 // pred_region
    _
  $region45: #{vit_forward.5} parent=0 // pred_fallthru
    _
  // Predicated region
  $region46: #{vit_forward.5} parent=0 // pred_check
    _
  $region47: #{vit_forward.5} parent=0 // pred_check_branch
    %41 = sbr.rel (0) target = $region49
  $region48: #{vit_forward.5} parent=0 // pred_region
    _
  $region49: #{vit_forward.5} parent=0 // pred_fallthru
    _
  // Predicated region
  $region50: #{vit_forward.5} parent=0 // pred_check
    _
  $region51: #{vit_forward.5} parent=0 // pred_check_branch
    %43 = sbr.rel (0) target = $region53
  $region52: #{vit_forward.5} parent=0 // pred_region
    _
  $region53: #{vit_forward.5} parent=0 // pred_fallthru
    _
  %v45 = vld [vmem:[%s0] sm:$0xff]
  %v46 = vld [vmem:[%s0 + $0x8] sm:$0xff]
  %v47 = vld [vmem:[%s1] sm:$0x1]
  %v48 = vld [vmem:[%s2] sm:$0x1]
  %vm49 = vcmask 261120
  %v50 = vsel %vm49, %v45, 0.0
  %51 = vadd.xlane.f32.xlu0 %v50
  %v52 = vpop.xlane.xlu0 %51
  %v53 = vsel %vm49, %v46, 0.0
  %54 = vadd.xlane.f32.xlu0 %v53
  %v55 = vpop.xlane.xlu0 %54
  %v56 = vrcp.pop 32.0
  %v57 = vmul.f32 %v52, %v56
  %v58 = vmul.f32 %v55, %v56
  %v59 = vsub.f32 %v45, %v57
  %v60 = vsub.f32 %v46, %v58
  %v61 = vmul.f32 %v59, %v59
  %v62 = vmul.f32 %v60, %v60
  %v63 = vsel %vm49, %v61, 0.0
  %64 = vadd.xlane.f32.xlu0 %v63
  %v65 = vpop.xlane.xlu0 %64
  %v66 = vsel %vm49, %v62, 0.0
  %67 = vadd.xlane.f32.xlu0 %v66
  %v68 = vpop.xlane.xlu0 %67
  %v69 = vmul.f32 %v65, %v56
  %v70 = vmul.f32 %v68, %v56
  %v71 = vadd.f32 %v69, 1e-05
  %v72 = vadd.f32 %v70, 1e-05
  %v73 = vrsqrt.pop %v71
  %v74 = vrsqrt.pop %v72
  %v75 = vmul.f32 %v59, %v73
  %v76 = vmul.f32 %v60, %v74
  %v78 = vlaneseq
  %v79 = vshrl.u32 %v78, 7
  %v80 = vsub.s32 0, %v79
  %v81 = vrot.slane %v47, %v80
  %v83 = vmul.f32 %v75, %v81
  %v84 = vmul.f32 %v76, %v81
  %v86 = vlaneseq
  %v87 = vshrl.u32 %v86, 7
  %v88 = vsub.s32 0, %v87
  %v89 = vrot.slane %v48, %v88
  %v91 = vadd.f32 %v83, %v89
  %v92 = vadd.f32 %v84, %v89
  %v93 = vpack.c.bf16 %v92, %v91
  %v94 = vld [vmem:[%s3] sm:$0xf]
  %v95 = vld [vmem:[%s3 + $0x4] sm:$0xf]
  %v96 = vld [vmem:[%s3 + $0x8] sm:$0xf]
  %v97 = vld [vmem:[%s3 + $0xc] sm:$0xf]
  %v98 = vld [vmem:[%s3 + $0x10] sm:$0xf]
  %v99 = vld [vmem:[%s3 + $0x14] sm:$0xf]
  %v100 = vld [vmem:[%s3 + $0x18] sm:$0xf]
  %v101 = vld [vmem:[%s3 + $0x1c] sm:$0xf]
  %v106 = vunpack.c.l.b16 %v94
  %v107 = vunpack.c.l.b16 %v95
  %v108 = vunpack.c.l.b16 %v96
  %v109 = vunpack.c.l.b16 %v97
  %v110 = vpack.c.b16 %v107, %v106
  %v111 = vpack.c.b16 %v109, %v108
  %v115 = vsel %vm49, %v93, 0
  %117 = vmatprep.subr.bf16.mxu0 0
  %118 = vmatpush1.bf16.msra.mxu0 %v110
  %119 = vmatprep.subr.bf16.mxu0 0
  %120 = vmatpush1.bf16.msra.mxu0 %v111
  %121 = vmatprep.subr.bf16.mxu0 0
  %122 = vmatpush1.bf16.msra.mxu0 0
  %123 = vmatprep.subr.bf16.mxu0 0
  %124 = vmatpush1.bf16.msra.mxu0 0
  %125 = vmatprep.subr.bf16.mxu0 0
  %126 = vmatpush1.bf16.msra.mxu0 0
  %127 = vmatprep.subr.bf16.mxu0 0
  %128 = vmatpush1.bf16.msra.mxu0 0
  %129 = vmatprep.subr.bf16.mxu0 0
  %130 = vmatpush1.bf16.msra.mxu0 0
  %131 = vmatprep.subr.bf16.mxu0 0
  %132 = vmatpush1.bf16.msra.mxu0 0
  %133 = vmatprep.subr.bf16.mxu0 0
  %134 = vmatpush1.bf16.msra.mxu0 0
  %135 = vmatprep.subr.bf16.mxu0 0
  %136 = vmatpush1.bf16.msra.mxu0 0
  %137 = vmatprep.subr.bf16.mxu0 0
  %138 = vmatpush1.bf16.msra.mxu0 0
  %139 = vmatprep.subr.bf16.mxu0 0
  %140 = vmatpush1.bf16.msra.mxu0 0
  %141 = vmatprep.subr.bf16.mxu0 0
  %142 = vmatpush1.bf16.msra.mxu0 0
  %143 = vmatprep.subr.bf16.mxu0 0
  %144 = vmatpush1.bf16.msra.mxu0 0
  %145 = vmatprep.subr.bf16.mxu0 0
  %146 = vmatpush1.bf16.msra.mxu0 0
  %147 = vmatprep.subr.bf16.mxu0 0
  %148 = vmatpush1.bf16.msra.mxu0 0
  %149 = vmatprep.mubr.bf16.mxu0 0
  %150 = vmatmul.mubr.bf16.gmra.mrb[0].mxu0 %v115
  %v151 = vpop.f32.mrb[0].mxu0
  %v152 = vadd.f32 0.0, %v151
  %v153 = vpop.f32.mrb[0].mxu0
  %v154 = vpop.f32.mrb[0].mxu0
  %v155 = vadd.f32 0.0, %v154
  %v156 = vpop.f32.mrb[0].mxu0
  %157 = vdwg.mxu0
  %v162 = vunpack.c.l.b16 %v98
  %v163 = vunpack.c.l.b16 %v99
  %v164 = vunpack.c.l.b16 %v100
  %v165 = vunpack.c.l.b16 %v101
  %v166 = vpack.c.b16 %v163, %v162
  %v167 = vpack.c.b16 %v165, %v164
  %170 = vmatprep.subr.bf16.mxu0 0
  %171 = vmatpush1.bf16.msra.mxu0 %v166
  %172 = vmatprep.subr.bf16.mxu0 0
  %173 = vmatpush1.bf16.msra.mxu0 %v167
  %174 = vmatprep.subr.bf16.mxu0 0
  %175 = vmatpush1.bf16.msra.mxu0 0
  %176 = vmatprep.subr.bf16.mxu0 0
  %177 = vmatpush1.bf16.msra.mxu0 0
  %178 = vmatprep.subr.bf16.mxu0 0
  %179 = vmatpush1.bf16.msra.mxu0 0
  %180 = vmatprep.subr.bf16.mxu0 0
  %181 = vmatpush1.bf16.msra.mxu0 0
  %182 = vmatprep.subr.bf16.mxu0 0
  %183 = vmatpush1.bf16.msra.mxu0 0
  %184 = vmatprep.subr.bf16.mxu0 0
  %185 = vmatpush1.bf16.msra.mxu0 0
  %186 = vmatprep.subr.bf16.mxu0 0
  %187 = vmatpush1.bf16.msra.mxu0 0
  %188 = vmatprep.subr.bf16.mxu0 0
  %189 = vmatpush1.bf16.msra.mxu0 0
  %190 = vmatprep.subr.bf16.mxu0 0
  %191 = vmatpush1.bf16.msra.mxu0 0
  %192 = vmatprep.subr.bf16.mxu0 0
  %193 = vmatpush1.bf16.msra.mxu0 0
  %194 = vmatprep.subr.bf16.mxu0 0
  %195 = vmatpush1.bf16.msra.mxu0 0
  %196 = vmatprep.subr.bf16.mxu0 0
  %197 = vmatpush1.bf16.msra.mxu0 0
  %198 = vmatprep.subr.bf16.mxu0 0
  %199 = vmatpush1.bf16.msra.mxu0 0
  %200 = vmatprep.subr.bf16.mxu0 0
  %201 = vmatpush1.bf16.msra.mxu0 0
  %202 = vmatprep.mubr.bf16.mxu0 0
  %203 = vmatmul.mubr.bf16.gmra.mrb[0].mxu0 %v115
  %v204 = vpop.f32.mrb[0].mxu0
  %v205 = vadd.f32 0.0, %v204
  %v206 = vpop.f32.mrb[0].mxu0
  %v207 = vpop.f32.mrb[0].mxu0
  %v208 = vadd.f32 0.0, %v207
  %v209 = vpop.f32.mrb[0].mxu0
  %210 = vdwg.mxu0
  %v211 = vpack.c.bf16 %v155, %v152
  %v212 = vpack.c.bf16 %v208, %v205
  %v213 = vld [vmem:[%s4] sm:$0x1]
  %v214 = vld [vmem:[%s4 + $0x1] sm:$0x1]
  %v217 = vlaneseq
  %v218 = vshrl.u32 %v217, 7
  %v219 = vsub.s32 0, %v218
  %v220 = vrot.slane %v213, %v219
  %v221 = vlaneseq
  %v222 = vshrl.u32 %v221, 7
  %v223 = vsub.s32 0, %v222
  %v224 = vrot.slane %v214, %v223
  %225 = vrot.lane.b32.xlu0 %v220, 32
  %v226 = vpop.permute.xlu0 %225
  %227 = vrot.lane.b32.xlu0 %v224, 32
  %v228 = vpop.permute.xlu0 %227
  %v231 = vadd.f32 %v152, %v226
  %v232 = vadd.f32 %v155, %v226
  %v233 = vadd.f32 %v205, %v228
  %v234 = vadd.f32 %v208, %v228
  %v235 = vpack.c.bf16 %v232, %v231
  %v236 = vpack.c.bf16 %v234, %v233
  %v237 = vlaneseq
  %v238 = vand.u32 %v237, 127
  %vm239 = vcmp.lt.s32.totalorder %v238, 5
  %v240 = vsel %vm239, 0.0, -1e+30
  %242 = vrot.lane.b32.xlu0 %v211, 112
  %v243 = vpop.permute.xlu0 %242
  %vm244 = vcmask 130048
  %v246 = vsel %vm244, %v211, 0
  %v249 = vsel %vm244, %v243, 0
  %251 = vmatprep.subr.bf16.mxu0 0
  %252 = vmatpush1.bf16.xpose.msra.mxu0 %v249
  %253 = vmatprep.subr.bf16.mxu0 0
  %254 = vmatpush1.bf16.xpose.msra.mxu0 0
  %255 = vmatprep.subr.bf16.mxu0 0
  %256 = vmatpush1.bf16.xpose.msra.mxu0 0
  %257 = vmatprep.subr.bf16.mxu0 0
  %258 = vmatpush1.bf16.xpose.msra.mxu0 0
  %259 = vmatprep.subr.bf16.mxu0 0
  %260 = vmatpush1.bf16.xpose.msra.mxu0 0
  %261 = vmatprep.subr.bf16.mxu0 0
  %262 = vmatpush1.bf16.xpose.msra.mxu0 0
  %263 = vmatprep.subr.bf16.mxu0 0
  %264 = vmatpush1.bf16.xpose.msra.mxu0 0
  %265 = vmatprep.subr.bf16.mxu0 0
  %266 = vmatpush1.bf16.xpose.msra.mxu0 0
  %267 = vmatprep.subr.bf16.mxu0 0
  %268 = vmatpush1.bf16.xpose.msra.mxu0 0
  %269 = vmatprep.subr.bf16.mxu0 0
  %270 = vmatpush1.bf16.xpose.msra.mxu0 0
  %271 = vmatprep.subr.bf16.mxu0 0
  %272 = vmatpush1.bf16.xpose.msra.mxu0 0
  %273 = vmatprep.subr.bf16.mxu0 0
  %274 = vmatpush1.bf16.xpose.msra.mxu0 0
  %275 = vmatprep.subr.bf16.mxu0 0
  %276 = vmatpush1.bf16.xpose.msra.mxu0 0
  %277 = vmatprep.subr.bf16.mxu0 0
  %278 = vmatpush1.bf16.xpose.msra.mxu0 0
  %279 = vmatprep.subr.bf16.mxu0 0
  %280 = vmatpush1.bf16.xpose.msra.mxu0 0
  %281 = vmatprep.subr.bf16.mxu0 0
  %282 = vmatpush1.bf16.xpose.msra.mxu0 0
  %283 = vmatprep.mubr.bf16.mxu0 0
  %284 = vmatmul.mubr.bf16.gmra.mrb[0].mxu0 %v246
  %v285 = vpop.f32.mrb[0].mxu0
  %v286 = vadd.f32 %v240, %v285
  %v287 = vpop.f32.mrb[0].mxu0
  %v288 = vpop.f32.mrb[0].mxu0
  %v289 = vpop.f32.mrb[0].mxu0
  %290 = vdwg.mxu0
  %292 = vrot.lane.b32.xlu0 %v212, 112
  %v293 = vpop.permute.xlu0 %292
  %v295 = vsel %vm244, %v212, 0
  %v298 = vsel %vm244, %v293, 0
  %300 = vmatprep.subr.bf16.mxu0 0
  %301 = vmatpush1.bf16.xpose.msra.mxu0 %v298
  %302 = vmatprep.subr.bf16.mxu0 0
  %303 = vmatpush1.bf16.xpose.msra.mxu0 0
  %304 = vmatprep.subr.bf16.mxu0 0
  %305 = vmatpush1.bf16.xpose.msra.mxu0 0
  %306 = vmatprep.subr.bf16.mxu0 0
  %307 = vmatpush1.bf16.xpose.msra.mxu0 0
  %308 = vmatprep.subr.bf16.mxu0 0
  %309 = vmatpush1.bf16.xpose.msra.mxu0 0
  %310 = vmatprep.subr.bf16.mxu0 0
  %311 = vmatpush1.bf16.xpose.msra.mxu0 0
  %312 = vmatprep.subr.bf16.mxu0 0
  %313 = vmatpush1.bf16.xpose.msra.mxu0 0
  %314 = vmatprep.subr.bf16.mxu0 0
  %315 = vmatpush1.bf16.xpose.msra.mxu0 0
  %316 = vmatprep.subr.bf16.mxu0 0
  %317 = vmatpush1.bf16.xpose.msra.mxu0 0
  %318 = vmatprep.subr.bf16.mxu0 0
  %319 = vmatpush1.bf16.xpose.msra.mxu0 0
  %320 = vmatprep.subr.bf16.mxu0 0
  %321 = vmatpush1.bf16.xpose.msra.mxu0 0
  %322 = vmatprep.subr.bf16.mxu0 0
  %323 = vmatpush1.bf16.xpose.msra.mxu0 0
  %324 = vmatprep.subr.bf16.mxu0 0
  %325 = vmatpush1.bf16.xpose.msra.mxu0 0
  %326 = vmatprep.subr.bf16.mxu0 0
  %327 = vmatpush1.bf16.xpose.msra.mxu0 0
  %328 = vmatprep.subr.bf16.mxu0 0
  %329 = vmatpush1.bf16.xpose.msra.mxu0 0
  %330 = vmatprep.subr.bf16.mxu0 0
  %331 = vmatpush1.bf16.xpose.msra.mxu0 0
  %332 = vmatprep.mubr.bf16.mxu0 0
  %333 = vmatmul.mubr.bf16.gmra.mrb[0].mxu0 %v295
  %v334 = vpop.f32.mrb[0].mxu0
  %v335 = vadd.f32 %v240, %v334
  %v336 = vpop.f32.mrb[0].mxu0
  %v337 = vpop.f32.mrb[0].mxu0
  %v338 = vpop.f32.mrb[0].mxu0
  %339 = vdwg.mxu0
  %vm340 = vcmask 64512
  %v341 = vsel %vm340, %v286, -inf
  %342 = vmax.xlane.f32.xlu0 %v341
  %v343 = vpop.xlane.xlu0 %342
  %v344 = vsel %vm340, %v335, -inf
  %345 = vmax.xlane.f32.xlu0 %v344
  %v346 = vpop.xlane.xlu0 %345
  %v347 = vsub.f32 %v286, %v343
  %v348 = vsub.f32 %v335, %v346
  %v349 = vmul.f32 %v347, 1.442695
  %v350 = vpow.pop %v349
  %v351 = vmul.f32 %v348, 1.442695
  %v352 = vpow.pop %v351
  %v353 = vsel %vm340, %v350, 0.0
  %354 = vadd.xlane.f32.xlu0 %v353
  %v355 = vpop.xlane.xlu0 %354
  %v356 = vsel %vm340, %v352, 0.0
  %357 = vadd.xlane.f32.xlu0 %v356
  %v358 = vpop.xlane.xlu0 %357
  %v359 = vrcp.pop %v355
  %v360 = vrcp.pop %v358
  %v361 = vmul.f32 %v350, %v359
  %v362 = vmul.f32 %v352, %v360
  %v363 = vpack.c.bf16 %v361, %v361
  %v364 = vpack.c.bf16 %v362, %v362
  %366 = vrot.lane.b32.xlu0 %v235, 96
  %v367 = vpop.permute.xlu0 %366
  %v369 = vsel %vm340, %v363, 0
  %vm371 = vcmask 1043456
  %v373 = vsel %vm371, %v367, 0
  %375 = vmatprep.subr.bf16.mxu0 0
  %376 = vmatpush1.bf16.msra.mxu0 %v373
  %377 = vmatprep.subr.bf16.mxu0 0
  %378 = vmatpush1.bf16.msra.mxu0 0
  %379 = vmatprep.subr.bf16.mxu0 0
  %380 = vmatpush1.bf16.msra.mxu0 0
  %381 = vmatprep.subr.bf16.mxu0 0
  %382 = vmatpush1.bf16.msra.mxu0 0
  %383 = vmatprep.subr.bf16.mxu0 0
  %384 = vmatpush1.bf16.msra.mxu0 0
  %385 = vmatprep.subr.bf16.mxu0 0
  %386 = vmatpush1.bf16.msra.mxu0 0
  %387 = vmatprep.subr.bf16.mxu0 0
  %388 = vmatpush1.bf16.msra.mxu0 0
  %389 = vmatprep.subr.bf16.mxu0 0
  %390 = vmatpush1.bf16.msra.mxu0 0
  %391 = vmatprep.subr.bf16.mxu0 0
  %392 = vmatpush1.bf16.msra.mxu0 0
  %393 = vmatprep.subr.bf16.mxu0 0
  %394 = vmatpush1.bf16.msra.mxu0 0
  %395 = vmatprep.subr.bf16.mxu0 0
  %396 = vmatpush1.bf16.msra.mxu0 0
  %397 = vmatprep.subr.bf16.mxu0 0
  %398 = vmatpush1.bf16.msra.mxu0 0
  %399 = vmatprep.subr.bf16.mxu0 0
  %400 = vmatpush1.bf16.msra.mxu0 0
  %401 = vmatprep.subr.bf16.mxu0 0
  %402 = vmatpush1.bf16.msra.mxu0 0
  %403 = vmatprep.subr.bf16.mxu0 0
  %404 = vmatpush1.bf16.msra.mxu0 0
  %405 = vmatprep.subr.bf16.mxu0 0
  %406 = vmatpush1.bf16.msra.mxu0 0
  %407 = vmatprep.mubr.bf16.mxu0 0
  %408 = vmatmul.mubr.bf16.gmra.mrb[0].mxu0 %v369
  %v409 = vpop.f32.mrb[0].mxu0
  %v410 = vadd.f32 0.0, %v409
  %v411 = vpop.f32.mrb[0].mxu0
  %v412 = vpop.f32.mrb[0].mxu0
  %v413 = vpop.f32.mrb[0].mxu0
  %414 = vdwg.mxu0
  %416 = vrot.lane.b32.xlu0 %v236, 96
  %v417 = vpop.permute.xlu0 %416
  %v419 = vsel %vm340, %v364, 0
  %v422 = vsel %vm371, %v417, 0
  %424 = vmatprep.subr.bf16.mxu0 0
  %425 = vmatpush1.bf16.msra.mxu0 %v422
  %426 = vmatprep.subr.bf16.mxu0 0
  %427 = vmatpush1.bf16.msra.mxu0 0
  %428 = vmatprep.subr.bf16.mxu0 0
  %429 = vmatpush1.bf16.msra.mxu0 0
  %430 = vmatprep.subr.bf16.mxu0 0
  %431 = vmatpush1.bf16.msra.mxu0 0
  %432 = vmatprep.subr.bf16.mxu0 0
  %433 = vmatpush1.bf16.msra.mxu0 0
  %434 = vmatprep.subr.bf16.mxu0 0
  %435 = vmatpush1.bf16.msra.mxu0 0
  %436 = vmatprep.subr.bf16.mxu0 0
  %437 = vmatpush1.bf16.msra.mxu0 0
  %438 = vmatprep.subr.bf16.mxu0 0
  %439 = vmatpush1.bf16.msra.mxu0 0
  %440 = vmatprep.subr.bf16.mxu0 0
  %441 = vmatpush1.bf16.msra.mxu0 0
  %442 = vmatprep.subr.bf16.mxu0 0
  %443 = vmatpush1.bf16.msra.mxu0 0
  %444 = vmatprep.subr.bf16.mxu0 0
  %445 = vmatpush1.bf16.msra.mxu0 0
  %446 = vmatprep.subr.bf16.mxu0 0
  %447 = vmatpush1.bf16.msra.mxu0 0
  %448 = vmatprep.subr.bf16.mxu0 0
  %449 = vmatpush1.bf16.msra.mxu0 0
  %450 = vmatprep.subr.bf16.mxu0 0
  %451 = vmatpush1.bf16.msra.mxu0 0
  %452 = vmatprep.subr.bf16.mxu0 0
  %453 = vmatpush1.bf16.msra.mxu0 0
  %454 = vmatprep.subr.bf16.mxu0 0
  %455 = vmatpush1.bf16.msra.mxu0 0
  %456 = vmatprep.mubr.bf16.mxu0 0
  %457 = vmatmul.mubr.bf16.gmra.mrb[0].mxu0 %v419
  %v458 = vpop.f32.mrb[0].mxu0
  %v459 = vadd.f32 0.0, %v458
  %v460 = vpop.f32.mrb[0].mxu0
  %v461 = vpop.f32.mrb[0].mxu0
  %v462 = vpop.f32.mrb[0].mxu0
  %463 = vdwg.mxu0
  %v464 = vrot.slane %v211, 4
  %465 = vrot.lane.b32.xlu0 %v464, 112
  %v466 = vpop.permute.xlu0 %465
  %v468 = vsel %vm244, %v464, 0
  %v471 = vsel %vm244, %v466, 0
  %473 = vmatprep.subr.bf16.mxu0 0
  %474 = vmatpush1.bf16.xpose.msra.mxu0 %v471
  %475 = vmatprep.subr.bf16.mxu0 0
  %476 = vmatpush1.bf16.xpose.msra.mxu0 0
  %477 = vmatprep.subr.bf16.mxu0 0
  %478 = vmatpush1.bf16.xpose.msra.mxu0 0
  %479 = vmatprep.subr.bf16.mxu0 0
  %480 = vmatpush1.bf16.xpose.msra.mxu0 0
  %481 = vmatprep.subr.bf16.mxu0 0
  %482 = vmatpush1.bf16.xpose.msra.mxu0 0
  %483 = vmatprep.subr.bf16.mxu0 0
  %484 = vmatpush1.bf16.xpose.msra.mxu0 0
  %485 = vmatprep.subr.bf16.mxu0 0
  %486 = vmatpush1.bf16.xpose.msra.mxu0 0
  %487 = vmatprep.subr.bf16.mxu0 0
  %488 = vmatpush1.bf16.xpose.msra.mxu0 0
  %489 = vmatprep.subr.bf16.mxu0 0
  %490 = vmatpush1.bf16.xpose.msra.mxu0 0
  %491 = vmatprep.subr.bf16.mxu0 0
  %492 = vmatpush1.bf16.xpose.msra.mxu0 0
  %493 = vmatprep.subr.bf16.mxu0 0
  %494 = vmatpush1.bf16.xpose.msra.mxu0 0
  %495 = vmatprep.subr.bf16.mxu0 0
  %496 = vmatpush1.bf16.xpose.msra.mxu0 0
  %497 = vmatprep.subr.bf16.mxu0 0
  %498 = vmatpush1.bf16.xpose.msra.mxu0 0
  %499 = vmatprep.subr.bf16.mxu0 0
  %500 = vmatpush1.bf16.xpose.msra.mxu0 0
  %501 = vmatprep.subr.bf16.mxu0 0
  %502 = vmatpush1.bf16.xpose.msra.mxu0 0
  %503 = vmatprep.subr.bf16.mxu0 0
  %504 = vmatpush1.bf16.xpose.msra.mxu0 0
  %505 = vmatprep.mubr.bf16.mxu0 0
  %506 = vmatmul.mubr.bf16.gmra.mrb[0].mxu0 %v468
  %v507 = vpop.f32.mrb[0].mxu0
  %v508 = vadd.f32 %v240, %v507
  %v509 = vpop.f32.mrb[0].mxu0
  %v510 = vpop.f32.mrb[0].mxu0
  %v511 = vpop.f32.mrb[0].mxu0
  %512 = vdwg.mxu0
  %v513 = vrot.slane %v212, 4
  %514 = vrot.lane.b32.xlu0 %v513, 112
  %v515 = vpop.permute.xlu0 %514
  %v517 = vsel %vm244, %v513, 0
  %v520 = vsel %vm244, %v515, 0
  %522 = vmatprep.subr.bf16.mxu0 0
  %523 = vmatpush1.bf16.xpose.msra.mxu0 %v520
  %524 = vmatprep.subr.bf16.mxu0 0
  %525 = vmatpush1.bf16.xpose.msra.mxu0 0
  %526 = vmatprep.subr.bf16.mxu0 0
  %527 = vmatpush1.bf16.xpose.msra.mxu0 0
  %528 = vmatprep.subr.bf16.mxu0 0
  %529 = vmatpush1.bf16.xpose.msra.mxu0 0
  %530 = vmatprep.subr.bf16.mxu0 0
  %531 = vmatpush1.bf16.xpose.msra.mxu0 0
  %532 = vmatprep.subr.bf16.mxu0 0
  %533 = vmatpush1.bf16.xpose.msra.mxu0 0
  %534 = vmatprep.subr.bf16.mxu0 0
  %535 = vmatpush1.bf16.xpose.msra.mxu0 0
  %536 = vmatprep.subr.bf16.mxu0 0
  %537 = vmatpush1.bf16.xpose.msra.mxu0 0
  %538 = vmatprep.subr.bf16.mxu0 0
  %539 = vmatpush1.bf16.xpose.msra.mxu0 0
  %540 = vmatprep.subr.bf16.mxu0 0
  %541 = vmatpush1.bf16.xpose.msra.mxu0 0
  %542 = vmatprep.subr.bf16.mxu0 0
  %543 = vmatpush1.bf16.xpose.msra.mxu0 0
  %544 = vmatprep.subr.bf16.mxu0 0
  %545 = vmatpush1.bf16.xpose.msra.mxu0 0
  %546 = vmatprep.subr.bf16.mxu0 0
  %547 = vmatpush1.bf16.xpose.msra.mxu0 0
  %548 = vmatprep.subr.bf16.mxu0 0
  %549 = vmatpush1.bf16.xpose.msra.mxu0 0
  %550 = vmatprep.subr.bf16.mxu0 0
  %551 = vmatpush1.bf16.xpose.msra.mxu0 0
  %552 = vmatprep.subr.bf16.mxu0 0
  %553 = vmatpush1.bf16.xpose.msra.mxu0 0
  %554 = vmatprep.mubr.bf16.mxu0 0
  %555 = vmatmul.mubr.bf16.gmra.mrb[0].mxu0 %v517
  %v556 = vpop.f32.mrb[0].mxu0
  %v557 = vadd.f32 %v240, %v556
  %v558 = vpop.f32.mrb[0].mxu0
  %v559 = vpop.f32.mrb[0].mxu0
  %v560 = vpop.f32.mrb[0].mxu0
  %561 = vdwg.mxu0
  %v562 = vsel %vm340, %v508, -inf
  %563 = vmax.xlane.f32.xlu0 %v562
  %v564 = vpop.xlane.xlu0 %563
  %v565 = vsel %vm340, %v557, -inf
  %566 = vmax.xlane.f32.xlu0 %v565
  %v567 = vpop.xlane.xlu0 %566
  %v568 = vsub.f32 %v508, %v564
  %v569 = vsub.f32 %v557, %v567
  %v570 = vmul.f32 %v568, 1.442695
  %v571 = vpow.pop %v570
  %v572 = vmul.f32 %v569, 1.442695
  %v573 = vpow.pop %v572
  %v574 = vsel %vm340, %v571, 0.0
  %575 = vadd.xlane.f32.xlu0 %v574
  %v576 = vpop.xlane.xlu0 %575
  %v577 = vsel %vm340, %v573, 0.0
  %578 = vadd.xlane.f32.xlu0 %v577
  %v579 = vpop.xlane.xlu0 %578
  %v580 = vrcp.pop %v576
  %v581 = vrcp.pop %v579
  %v582 = vmul.f32 %v571, %v580
  %v583 = vmul.f32 %v573, %v581
  %v584 = vpack.c.bf16 %v582, %v582
  %v585 = vpack.c.bf16 %v583, %v583
  %v586 = vrot.slane %v235, 4
  %587 = vrot.lane.b32.xlu0 %v586, 96
  %v588 = vpop.permute.xlu0 %587
  %v590 = vsel %vm340, %v584, 0
  %v593 = vsel %vm371, %v588, 0
  %595 = vmatprep.subr.bf16.mxu0 0
  %596 = vmatpush1.bf16.msra.mxu0 %v593
  %597 = vmatprep.subr.bf16.mxu0 0
  %598 = vmatpush1.bf16.msra.mxu0 0
  %599 = vmatprep.subr.bf16.mxu0 0
  %600 = vmatpush1.bf16.msra.mxu0 0
  %601 = vmatprep.subr.bf16.mxu0 0
  %602 = vmatpush1.bf16.msra.mxu0 0
  %603 = vmatprep.subr.bf16.mxu0 0
  %604 = vmatpush1.bf16.msra.mxu0 0
  %605 = vmatprep.subr.bf16.mxu0 0
  %606 = vmatpush1.bf16.msra.mxu0 0
  %607 = vmatprep.subr.bf16.mxu0 0
  %608 = vmatpush1.bf16.msra.mxu0 0
  %609 = vmatprep.subr.bf16.mxu0 0
  %610 = vmatpush1.bf16.msra.mxu0 0
  %611 = vmatprep.subr.bf16.mxu0 0
  %612 = vmatpush1.bf16.msra.mxu0 0
  %613 = vmatprep.subr.bf16.mxu0 0
  %614 = vmatpush1.bf16.msra.mxu0 0
  %615 = vmatprep.subr.bf16.mxu0 0
  %616 = vmatpush1.bf16.msra.mxu0 0
  %617 = vmatprep.subr.bf16.mxu0 0
  %618 = vmatpush1.bf16.msra.mxu0 0
  %619 = vmatprep.subr.bf16.mxu0 0
  %620 = vmatpush1.bf16.msra.mxu0 0
  %621 = vmatprep.subr.bf16.mxu0 0
  %622 = vmatpush1.bf16.msra.mxu0 0
  %623 = vmatprep.subr.bf16.mxu0 0
  %624 = vmatpush1.bf16.msra.mxu0 0
  %625 = vmatprep.subr.bf16.mxu0 0
  %626 = vmatpush1.bf16.msra.mxu0 0
  %627 = vmatprep.mubr.bf16.mxu0 0
  %628 = vmatmul.mubr.bf16.gmra.mrb[0].mxu0 %v590
  %v629 = vpop.f32.mrb[0].mxu0
  %v630 = vadd.f32 0.0, %v629
  %v631 = vpop.f32.mrb[0].mxu0
  %v632 = vpop.f32.mrb[0].mxu0
  %v633 = vpop.f32.mrb[0].mxu0
  %634 = vdwg.mxu0
  %v635 = vrot.slane %v236, 4
  %636 = vrot.lane.b32.xlu0 %v635, 96
  %v637 = vpop.permute.xlu0 %636
  %v639 = vsel %vm340, %v585, 0
  %v642 = vsel %vm371, %v637, 0
  %644 = vmatprep.subr.bf16.mxu0 0
  %645 = vmatpush1.bf16.msra.mxu0 %v642
  %646 = vmatprep.subr.bf16.mxu0 0
  %647 = vmatpush1.bf16.msra.mxu0 0
  %648 = vmatprep.subr.bf16.mxu0 0
  %649 = vmatpush1.bf16.msra.mxu0 0
  %650 = vmatprep.subr.bf16.mxu0 0
  %651 = vmatpush1.bf16.msra.mxu0 0
  %652 = vmatprep.subr.bf16.mxu0 0
  %653 = vmatpush1.bf16.msra.mxu0 0
  %654 = vmatprep.subr.bf16.mxu0 0
  %655 = vmatpush1.bf16.msra.mxu0 0
  %656 = vmatprep.subr.bf16.mxu0 0
  %657 = vmatpush1.bf16.msra.mxu0 0
  %658 = vmatprep.subr.bf16.mxu0 0
  %659 = vmatpush1.bf16.msra.mxu0 0
  %660 = vmatprep.subr.bf16.mxu0 0
  %661 = vmatpush1.bf16.msra.mxu0 0
  %662 = vmatprep.subr.bf16.mxu0 0
  %663 = vmatpush1.bf16.msra.mxu0 0
  %664 = vmatprep.subr.bf16.mxu0 0
  %665 = vmatpush1.bf16.msra.mxu0 0
  %666 = vmatprep.subr.bf16.mxu0 0
  %667 = vmatpush1.bf16.msra.mxu0 0
  %668 = vmatprep.subr.bf16.mxu0 0
  %669 = vmatpush1.bf16.msra.mxu0 0
  %670 = vmatprep.subr.bf16.mxu0 0
  %671 = vmatpush1.bf16.msra.mxu0 0
  %672 = vmatprep.subr.bf16.mxu0 0
  %673 = vmatpush1.bf16.msra.mxu0 0
  %674 = vmatprep.subr.bf16.mxu0 0
  %675 = vmatpush1.bf16.msra.mxu0 0
  %676 = vmatprep.mubr.bf16.mxu0 0
  %677 = vmatmul.mubr.bf16.gmra.mrb[0].mxu0 %v639
  %v678 = vpop.f32.mrb[0].mxu0
  %v679 = vadd.f32 0.0, %v678
  %v680 = vpop.f32.mrb[0].mxu0
  %v681 = vpop.f32.mrb[0].mxu0
  %v682 = vpop.f32.mrb[0].mxu0
  %683 = vdwg.mxu0
  %v684 = vpack.c.bf16 %v630, %v410
  %v685 = vpack.c.bf16 %v679, %v459
  %v686 = vld [vmem:[%s5] sm:$0xf]
  %v687 = vld [vmem:[%s5 + $0x4] sm:$0xf]
  %v688 = vld [vmem:[%s5 + $0x8] sm:$0xf]
  %v689 = vld [vmem:[%s5 + $0xc] sm:$0xf]
  %v692 = vunpack.c.l.b16 %v686
  %v693 = vunpack.c.l.b16 %v687
  %v694 = vpack.c.b16 %v693, %v692
  %v697 = vsel %vm244, %v684, 0
  %699 = vmatprep.subr.bf16.mxu0 0
  %700 = vmatpush1.bf16.msra.mxu0 %v694
  %701 = vmatprep.subr.bf16.mxu0 0
  %702 = vmatpush1.bf16.msra.mxu0 0
  %703 = vmatprep.subr.bf16.mxu0 0
  %704 = vmatpush1.bf16.msra.mxu0 0
  %705 = vmatprep.subr.bf16.mxu0 0
  %706 = vmatpush1.bf16.msra.mxu0 0
  %707 = vmatprep.subr.bf16.mxu0 0
  %708 = vmatpush1.bf16.msra.mxu0 0
  %709 = vmatprep.subr.bf16.mxu0 0
  %710 = vmatpush1.bf16.msra.mxu0 0
  %711 = vmatprep.subr.bf16.mxu0 0
  %712 = vmatpush1.bf16.msra.mxu0 0
  %713 = vmatprep.subr.bf16.mxu0 0
  %714 = vmatpush1.bf16.msra.mxu0 0
  %715 = vmatprep.subr.bf16.mxu0 0
  %716 = vmatpush1.bf16.msra.mxu0 0
  %717 = vmatprep.subr.bf16.mxu0 0
  %718 = vmatpush1.bf16.msra.mxu0 0
  %719 = vmatprep.subr.bf16.mxu0 0
  %720 = vmatpush1.bf16.msra.mxu0 0
  %721 = vmatprep.subr.bf16.mxu0 0
  %722 = vmatpush1.bf16.msra.mxu0 0
  %723 = vmatprep.subr.bf16.mxu0 0
  %724 = vmatpush1.bf16.msra.mxu0 0
  %725 = vmatprep.subr.bf16.mxu0 0
  %726 = vmatpush1.bf16.msra.mxu0 0
  %727 = vmatprep.subr.bf16.mxu0 0
  %728 = vmatpush1.bf16.msra.mxu0 0
  %729 = vmatprep.subr.bf16.mxu0 0
  %730 = vmatpush1.bf16.msra.mxu0 0
  %731 = vmatprep.mubr.bf16.mxu0 0
  %732 = vmatmul.mubr.bf16.gmra.mrb[0].mxu0 %v697
  %v733 = vpop.f32.mrb[0].mxu0
  %v734 = vadd.f32 0.0, %v733
  %v735 = vpop.f32.mrb[0].mxu0
  %v736 = vpop.f32.mrb[0].mxu0
  %v737 = vadd.f32 0.0, %v736
  %v738 = vpop.f32.mrb[0].mxu0
  %739 = vdwg.mxu0
  %v742 = vunpack.c.l.b16 %v688
  %v743 = vunpack.c.l.b16 %v689
  %v744 = vpack.c.b16 %v743, %v742
  %v747 = vsel %vm244, %v685, 0
  %749 = vmatprep.subr.bf16.mxu0 0
  %750 = vmatpush1.bf16.msra.mxu0 %v744
  %751 = vmatprep.subr.bf16.mxu0 0
  %752 = vmatpush1.bf16.msra.mxu0 0
  %753 = vmatprep.subr.bf16.mxu0 0
  %754 = vmatpush1.bf16.msra.mxu0 0
  %755 = vmatprep.subr.bf16.mxu0 0
  %756 = vmatpush1.bf16.msra.mxu0 0
  %757 = vmatprep.subr.bf16.mxu0 0
  %758 = vmatpush1.bf16.msra.mxu0 0
  %759 = vmatprep.subr.bf16.mxu0 0
  %760 = vmatpush1.bf16.msra.mxu0 0
  %761 = vmatprep.subr.bf16.mxu0 0
  %762 = vmatpush1.bf16.msra.mxu0 0
  %763 = vmatprep.subr.bf16.mxu0 0
  %764 = vmatpush1.bf16.msra.mxu0 0
  %765 = vmatprep.subr.bf16.mxu0 0
  %766 = vmatpush1.bf16.msra.mxu0 0
  %767 = vmatprep.subr.bf16.mxu0 0
  %768 = vmatpush1.bf16.msra.mxu0 0
  %769 = vmatprep.subr.bf16.mxu0 0
  %770 = vmatpush1.bf16.msra.mxu0 0
  %771 = vmatprep.subr.bf16.mxu0 0
  %772 = vmatpush1.bf16.msra.mxu0 0
  %773 = vmatprep.subr.bf16.mxu0 0
  %774 = vmatpush1.bf16.msra.mxu0 0
  %775 = vmatprep.subr.bf16.mxu0 0
  %776 = vmatpush1.bf16.msra.mxu0 0
  %777 = vmatprep.subr.bf16.mxu0 0
  %778 = vmatpush1.bf16.msra.mxu0 0
  %779 = vmatprep.subr.bf16.mxu0 0
  %780 = vmatpush1.bf16.msra.mxu0 0
  %781 = vmatprep.mubr.bf16.mxu0 0
  %782 = vmatmul.mubr.bf16.gmra.mrb[0].mxu0 %v747
  %v783 = vpop.f32.mrb[0].mxu0
  %v784 = vadd.f32 0.0, %v783
  %v785 = vpop.f32.mrb[0].mxu0
  %v786 = vpop.f32.mrb[0].mxu0
  %v787 = vadd.f32 0.0, %v786
  %v788 = vpop.f32.mrb[0].mxu0
  %789 = vdwg.mxu0
  %v790 = vsel %vm49, %v734, 0.0
  %v791 = vsel %vm49, %v784, 0.0
  %v792 = vadd.f32 %v790, %v791
  %v793 = vsel %vm49, %v737, 0.0
  %v794 = vsel %vm49, %v787, 0.0
  %v795 = vadd.f32 %v793, %v794
  %v796 = vadd.f32 %v45, %v792
  %v797 = vadd.f32 %v46, %v795
  %v798 = vld [vmem:[%s6] sm:$0x1]
  %v800 = vlaneseq
  %v801 = vshrl.u32 %v800, 7
  %v802 = vsub.s32 0, %v801
  %v803 = vrot.slane %v798, %v802
  %v805 = vadd.f32 %v796, %v803
  %v806 = vadd.f32 %v797, %v803
  %v807 = vld [vmem:[%s7] sm:$0x1]
  %v808 = vld [vmem:[%s8] sm:$0x1]
  %v809 = vsel %vm49, %v805, 0.0
  %810 = vadd.xlane.f32.xlu0 %v809
  %v811 = vpop.xlane.xlu0 %810
  %v812 = vsel %vm49, %v806, 0.0
  %813 = vadd.xlane.f32.xlu0 %v812
  %v814 = vpop.xlane.xlu0 %813
  %v815 = vmul.f32 %v811, %v56
  %v816 = vmul.f32 %v814, %v56
  %v817 = vsub.f32 %v805, %v815
  %v818 = vsub.f32 %v806, %v816
  %v819 = vmul.f32 %v817, %v817
  %v820 = vmul.f32 %v818, %v818
  %v821 = vsel %vm49, %v819, 0.0
  %822 = vadd.xlane.f32.xlu0 %v821
  %v823 = vpop.xlane.xlu0 %822
  %v824 = vsel %vm49, %v820, 0.0
  %825 = vadd.xlane.f32.xlu0 %v824
  %v826 = vpop.xlane.xlu0 %825
  %v827 = vmul.f32 %v823, %v56
  %v828 = vmul.f32 %v826, %v56
  %v829 = vadd.f32 %v827, 1e-05
  %v830 = vadd.f32 %v828, 1e-05
  %v831 = vrsqrt.pop %v829
  %v832 = vrsqrt.pop %v830
  %v833 = vmul.f32 %v817, %v831
  %v834 = vmul.f32 %v818, %v832
  %v836 = vlaneseq
  %v837 = vshrl.u32 %v836, 7
  %v838 = vsub.s32 0, %v837
  %v839 = vrot.slane %v807, %v838
  %v841 = vmul.f32 %v833, %v839
  %v842 = vmul.f32 %v834, %v839
  %v844 = vlaneseq
  %v845 = vshrl.u32 %v844, 7
  %v846 = vsub.s32 0, %v845
  %v847 = vrot.slane %v808, %v846
  %v849 = vadd.f32 %v841, %v847
  %v850 = vadd.f32 %v842, %v847
  %v851 = vpack.c.bf16 %v850, %v849
  %v852 = vld [vmem:[%s9] sm:$0xf]
  %v853 = vld [vmem:[%s9 + $0x4] sm:$0xf]
  %v854 = vld [vmem:[%s9 + $0x8] sm:$0xf]
  %v855 = vld [vmem:[%s9 + $0xc] sm:$0xf]
  %v856 = vld [vmem:[%s10] sm:$0x1]
  %v858 = vlaneseq
  %v859 = vshrl.u32 %v858, 7
  %v860 = vsub.s32 0, %v859
  %v861 = vrot.slane %v856, %v860
  %v867 = vunpack.c.l.b16 %v852
  %v868 = vunpack.c.l.b16 %v853
  %v869 = vunpack.c.l.b16 %v854
  %v870 = vunpack.c.l.b16 %v855
  %v871 = vpack.c.b16 %v868, %v867
  %v872 = vpack.c.b16 %v870, %v869
  %v876 = vsel %vm49, %v851, 0
  %878 = vmatprep.subr.bf16.mxu0 0
  %879 = vmatpush1.bf16.msra.mxu0 %v871
  %880 = vmatprep.subr.bf16.mxu0 0
  %881 = vmatpush1.bf16.msra.mxu0 %v872
  %882 = vmatprep.subr.bf16.mxu0 0
  %883 = vmatpush1.bf16.msra.mxu0 0
  %884 = vmatprep.subr.bf16.mxu0 0
  %885 = vmatpush1.bf16.msra.mxu0 0
  %886 = vmatprep.subr.bf16.mxu0 0
  %887 = vmatpush1.bf16.msra.mxu0 0
  %888 = vmatprep.subr.bf16.mxu0 0
  %889 = vmatpush1.bf16.msra.mxu0 0
  %890 = vmatprep.subr.bf16.mxu0 0
  %891 = vmatpush1.bf16.msra.mxu0 0
  %892 = vmatprep.subr.bf16.mxu0 0
  %893 = vmatpush1.bf16.msra.mxu0 0
  %894 = vmatprep.subr.bf16.mxu0 0
  %895 = vmatpush1.bf16.msra.mxu0 0
  %896 = vmatprep.subr.bf16.mxu0 0
  %897 = vmatpush1.bf16.msra.mxu0 0
  %898 = vmatprep.subr.bf16.mxu0 0
  %899 = vmatpush1.bf16.msra.mxu0 0
  %900 = vmatprep.subr.bf16.mxu0 0
  %901 = vmatpush1.bf16.msra.mxu0 0
  %902 = vmatprep.subr.bf16.mxu0 0
  %903 = vmatpush1.bf16.msra.mxu0 0
  %904 = vmatprep.subr.bf16.mxu0 0
  %905 = vmatpush1.bf16.msra.mxu0 0
  %906 = vmatprep.subr.bf16.mxu0 0
  %907 = vmatpush1.bf16.msra.mxu0 0
  %908 = vmatprep.subr.bf16.mxu0 0
  %909 = vmatpush1.bf16.msra.mxu0 0
  %910 = vmatprep.mubr.bf16.mxu0 0
  %911 = vmatmul.mubr.bf16.gmra.mrb[0].mxu0 %v876
  %v912 = vpop.f32.mrb[0].mxu0
  %v913 = vadd.f32 %v861, %v912
  %v914 = vpop.f32.mrb[0].mxu0
  %v915 = vpop.f32.mrb[0].mxu0
  %v916 = vadd.f32 %v861, %v915
  %v917 = vpop.f32.mrb[0].mxu0
  %918 = vdwg.mxu0
  %v919 = vmul.f32 %v913, 0.5
  %v920 = vmul.f32 %v916, 0.5
  %v921 = vmul.f32 %v913, 0.70710677
  %v922 = vmul.f32 %v916, 0.70710677
  %v923 = verf.f32.pop %v921
  %v924 = verf.f32.pop %v922
  %v925 = vadd.f32 %v923, 1.0
  %v926 = vadd.f32 %v924, 1.0
  %v927 = vmul.f32 %v919, %v925
  %v928 = vmul.f32 %v920, %v926
  %v929 = vpack.c.bf16 %v928, %v927
  %v930 = vld [vmem:[%s11] sm:$0xf]
  %v931 = vld [vmem:[%s11 + $0x4] sm:$0xf]
  %v932 = vld [vmem:[%s11 + $0x8] sm:$0xf]
  %v933 = vld [vmem:[%s11 + $0xc] sm:$0xf]
  %v934 = vld [vmem:[%s11 + $0x10] sm:$0xf]
  %v935 = vld [vmem:[%s11 + $0x14] sm:$0xf]
  %v936 = vld [vmem:[%s11 + $0x18] sm:$0xf]
  %v937 = vld [vmem:[%s11 + $0x1c] sm:$0xf]
  %v946 = vunpack.c.l.b16 %v930
  %v947 = vunpack.c.l.b16 %v931
  %v948 = vunpack.c.l.b16 %v932
  %v949 = vunpack.c.l.b16 %v933
  %v950 = vunpack.c.l.b16 %v934
  %v951 = vunpack.c.l.b16 %v935
  %v952 = vunpack.c.l.b16 %v936
  %v953 = vunpack.c.l.b16 %v937
  %v954 = vpack.c.b16 %v947, %v946
  %v955 = vpack.c.b16 %v949, %v948
  %v956 = vpack.c.b16 %v951, %v950
  %v957 = vpack.c.b16 %v953, %v952
  %vm962 = vcmask 523264
  %v964 = vsel %vm962, %v929, 0
  %966 = vmatprep.subr.bf16.mxu0 0
  %967 = vmatpush1.bf16.msra.mxu0 %v954
  %968 = vmatprep.subr.bf16.mxu0 0
  %969 = vmatpush1.bf16.msra.mxu0 %v955
  %970 = vmatprep.subr.bf16.mxu0 0
  %971 = vmatpush1.bf16.msra.mxu0 %v956
  %972 = vmatprep.subr.bf16.mxu0 0
  %973 = vmatpush1.bf16.msra.mxu0 %v957
  %974 = vmatprep.subr.bf16.mxu0 0
  %975 = vmatpush1.bf16.msra.mxu0 0
  %976 = vmatprep.subr.bf16.mxu0 0
  %977 = vmatpush1.bf16.msra.mxu0 0
  %978 = vmatprep.subr.bf16.mxu0 0
  %979 = vmatpush1.bf16.msra.mxu0 0
  %980 = vmatprep.subr.bf16.mxu0 0
  %981 = vmatpush1.bf16.msra.mxu0 0
  %982 = vmatprep.subr.bf16.mxu0 0
  %983 = vmatpush1.bf16.msra.mxu0 0
  %984 = vmatprep.subr.bf16.mxu0 0
  %985 = vmatpush1.bf16.msra.mxu0 0
  %986 = vmatprep.subr.bf16.mxu0 0
  %987 = vmatpush1.bf16.msra.mxu0 0
  %988 = vmatprep.subr.bf16.mxu0 0
  %989 = vmatpush1.bf16.msra.mxu0 0
  %990 = vmatprep.subr.bf16.mxu0 0
  %991 = vmatpush1.bf16.msra.mxu0 0
  %992 = vmatprep.subr.bf16.mxu0 0
  %993 = vmatpush1.bf16.msra.mxu0 0
  %994 = vmatprep.subr.bf16.mxu0 0
  %995 = vmatpush1.bf16.msra.mxu0 0
  %996 = vmatprep.subr.bf16.mxu0 0
  %997 = vmatpush1.bf16.msra.mxu0 0
  %998 = vmatprep.mubr.bf16.mxu0 0
  %999 = vmatmul.mubr.bf16.gmra.mrb[0].mxu0 %v964
  %v1000 = vpop.f32.mrb[0].mxu0
  %v1001 = vadd.f32 0.0, %v1000
  %v1002 = vpop.f32.mrb[0].mxu0
  %v1003 = vpop.f32.mrb[0].mxu0
  %v1004 = vadd.f32 0.0, %v1003
  %v1005 = vpop.f32.mrb[0].mxu0
  %1006 = vdwg.mxu0
  %v1007 = vadd.f32 %v805, %v1001
  %v1008 = vadd.f32 %v806, %v1004
  %v1009 = vld [vmem:[%s12] sm:$0x1]
  %v1011 = vlaneseq
  %v1012 = vshrl.u32 %v1011, 7
  %v1013 = vsub.s32 0, %v1012
  %v1014 = vrot.slane %v1009, %v1013
  %v1016 = vadd.f32 %v1007, %v1014
  %v1017 = vadd.f32 %v1008, %v1014
  %1018 = vst.msk [vmem:[%s13] sm:$0xff] %vm49, %v1016
  %1019 = vst.msk [vmem:[%s13 + $0x8] sm:$0xff] %vm49, %v1017
  // Predicated region
  $region54: #{vit_forward.5} parent=0 // pred_check
    _
  $region55: #{vit_forward.5} parent=0 // pred_check_branch
    %1021 = sbr.rel (0) target = $region57
  $region56: #{vit_forward.5} parent=0 // pred_region
    _
  $region57: #{vit_forward.5} parent=0 // pred_fallthru
    _
  // Predicated region
  $region58: #{vit_forward.5} parent=0 // pred_check
    _
  $region59: #{vit_forward.5} parent=0 // pred_check_branch
    %1023 = sbr.rel (0) target = $region61
  $region60: #{vit_forward.5} parent=0 // pred_region
    _
  $region61: #{vit_forward.5} parent=0 // pred_fallthru
    _

</llo_original>
